<compile_context>
chip_gen: v5e
topology: v5e:2x2
jax: 0.10.0
libtpu: 0.0.40
codegen_flags: <defaults>
</compile_context>

<pallas_src>
import numpy as np
import jax
import jax.numpy as jnp
from jax.experimental import pallas as pl
from jax.experimental.pallas import tpu as pltpu


# ---------------------------------------------------------------------------
# Host-side parameter construction (float64 so the offline folding adds no error)
# ---------------------------------------------------------------------------
def dct_basis_matrix_np(H, W, FV=8, FU=8):
    """M[v, u, y, x] identical to construct_all_frequency_matrix (float64)."""
    y = np.arange(H, dtype=np.float64)[:, None]
    x = np.arange(W, dtype=np.float64)[None, :]
    M = np.zeros((FV, FU, H, W), np.float64)
    for v in range(FV):
        for u in range(FU):
            basis = (np.cos((2.0 * x + 1.0) * u * np.pi / (2.0 * W))
                     * np.cos((2.0 * y + 1.0) * v * np.pi / (2.0 * H)))
            nu = (1.0 / np.sqrt(W)) if u == 0 else (np.sqrt(2.0) / np.sqrt(W))
            nv = (1.0 / np.sqrt(H)) if v == 0 else (np.sqrt(2.0) / np.sqrt(H))
            M[v, u] = basis * nu * nv
    return M


def _frequency_band_weights_np(fc):
    """Per-(v,u) weights reproducing construct_2DDCT_frequency_feature_value."""
    w = np.full((8, 8), fc[3] / 48.0, dtype=np.float64)
    w[:4, :4] = fc[2] / 12.0
    w[:2, :2] = fc[1] / 3.0
    w[0, 0] = fc[0]
    return w


def _choose_batch_tile(B, C, HW, tile_target_bytes=4 << 20, min_tile_bytes=1 << 20):
    """Pick Bt (samples per grid step) from a tile-size budget only.

    No artificial B//2 cap: small problems get one resident block (grid=(1,)).
    When the batch is large enough that >= 4 grid steps still leave >= 1 MiB
    tiles, keep >= 4 steps so v7x's two TensorCores can both pipeline DMA.
    """
    per_sample = C * HW * 4                       # one f32 sample of x (out is the same)
    bt_cap = max(1, tile_target_bytes // per_sample)
    if B * per_sample >= 4 * min_tile_bytes:
        bt_cap = min(bt_cap, max(1, B // 4))
    if B <= bt_cap:
        return B                                  # tiny problem: single block
    # When Bt < B the sublane dim of the block must be a multiple of 8 and divide B.
    for bt in range(min(bt_cap, B - 1), 7, -1):
        if bt % 8 == 0 and B % bt == 0:
            return bt
    return B                                      # fallback: one big block


def _running_on_v7x():
    try:
        kind = jax.devices()[0].device_kind.lower()
    except Exception:
        return False
    return "7" in kind


# ---------------------------------------------------------------------------
# Pallas kernel: one program per batch tile of Bt samples, x flattened to
# (Bt, C*HW) so the output is lane-dense (unmasked 128-wide stores) and every
# per-channel slice sits at a 128-aligned lane offset (HW % 128 == 0).
# ---------------------------------------------------------------------------
def _make_sffb_kernel(C, HW, hid, approx_epilogue):
    def kernel(x_ref, dvec_ref, w1_ref, b1_ref, w2_ref, b2_ref,
               bna_ref, bnb_ref, o_ref):
        dvec = dvec_ref[...]                                  # (1, HW) folded DCT weights

        # (1) Folded 2D-DCT + frequency-band weighting:
        #       bc[b, c] = sum_hw dvec[hw] * x[b, c, hw]
        #     One exact-f32 VPU multiply + lane reduce per channel (no MXU).
        bc = []
        for c in range(C):
            xs = x_ref[:, c * HW:(c + 1) * HW]                # (Bt, HW), 128-lane aligned
            bc.append(jnp.sum(xs * dvec, axis=-1, keepdims=True))   # (Bt, 1)

        # (2) Channel-attention MLP (Linear-ReLU-Linear-Sigmoid) evaluated on
        #     the VPU as scalar-weighted sums of (Bt, 1) columns.  Weights are
        #     SMEM scalars, so there is no MXU matvec on the critical path.
        h = []
        for j in range(hid):
            a = b1_ref[j]
            for c in range(C):
                a = a + w1_ref[j, c] * bc[c]
            h.append(jnp.maximum(a, 0.0))                     # (Bt, 1)

        # (3) Per-channel residual gate + folded inference BatchNorm + sigmoid:
        #       out = sigmoid( x * (1 + s_c) * bn_a[c] + bn_b[c] )
        for c in range(C):
            p = b2_ref[c]
            for j in range(hid):
                p = p + w2_ref[c, j] * h[j]
            s = 1.0 / (1.0 + jnp.exp(-p))                     # attention weight (Bt, 1)
            g = (1.0 + s) * bna_ref[c]                        # residual + BN scale
            xs = x_ref[:, c * HW:(c + 1) * HW]
            z = xs * g + bnb_ref[c]
            e = jnp.exp(-z)
            if approx_epilogue:
                # v7x: EUP recip keeps the epilogue off the critical EUP path.
                y = pl.reciprocal(1.0 + e, approx=True)
            else:
                y = 1.0 / (1.0 + e)                           # exact f32 (v5e / v6e)
            o_ref[:, c * HW:(c + 1) * HW] = y.astype(o_ref.dtype)

    return kernel


def _build_call(B, C, HW, hid, Bt, out_dtype, approx_epilogue, single_buffer_consts):
    CHW = C * HW
    dvec_kw = {"pipeline_mode": pl.Buffered(1)} if single_buffer_consts else {}
    smem = pltpu.MemorySpace.SMEM
    kernel = _make_sffb_kernel(C, HW, hid, approx_epilogue)
    return pl.pallas_call(
        kernel,
        out_shape=jax.ShapeDtypeStruct((B, CHW), out_dtype),
        grid_spec=pltpu.PrefetchScalarGridSpec(
            num_scalar_prefetch=0,
            grid=(B // Bt,),
            in_specs=[
                pl.BlockSpec((Bt, CHW), lambda i: (i, 0)),              # x tile
                pl.BlockSpec((1, HW), lambda i: (0, 0), **dvec_kw),     # folded DCT vec (~1 KB)
                pl.BlockSpec(memory_space=smem),                        # W1 (hid, C)
                pl.BlockSpec(memory_space=smem),                        # b1 (hid,)
                pl.BlockSpec(memory_space=smem),                        # W2 (C, hid)
                pl.BlockSpec(memory_space=smem),                        # b2 (C,)
                pl.BlockSpec(memory_space=smem),                        # bn scale (C,)
                pl.BlockSpec(memory_space=smem),                        # bn bias  (C,)
            ],
            out_specs=pl.BlockSpec((Bt, CHW), lambda i: (i, 0)),
        ),
        compiler_params=pltpu.CompilerParams(
            dimension_semantics=("parallel",),
            # Working set is only the double-buffered x/out tiles (<= ~16 MiB at
            # the 4 MiB tile target) + ~1 KB constants: 32 MiB is safe on
            # v5e/v6e (128 MiB VMEM) and inside v7x's 64 MiB physical VMEM.
            vmem_limit_bytes=32 * 1024 * 1024,
        ),
    )


def spectral_feature_fusion(x_nchw, M64, fc, w1, b1, w2, b2,
                            bn_gamma, bn_beta, bn_mean, bn_var, eps=1e-5,
                            approx_epilogue=False, out_dtype=jnp.float32):
    B, C, H, W = x_nchw.shape
    HW = H * W
    hid = w1.shape[0]
    assert HW % 128 == 0, "H*W must be a multiple of 128 lanes for aligned channel slices"

    Bt = _choose_batch_tile(B, C, HW)

    # Fold the (8,8,H,W) DCT basis and the frequency-band weights into a single
    # (1, HW) vector (the whole stage is linear), in float64 on the host.
    w64 = _frequency_band_weights_np(np.asarray(fc, np.float64))
    dvec = (w64.reshape(1, 64) @ np.asarray(M64, np.float64).reshape(64, HW))
    dvec = jnp.asarray(dvec, jnp.float32)                               # (1, HW)

    # Inference-mode BatchNorm folded into per-channel scale / bias (float64 fold).
    inv_std = 1.0 / np.sqrt(np.asarray(bn_var, np.float64) + eps)
    bn_a = np.asarray(bn_gamma, np.float64) * inv_std
    bn_b = np.asarray(bn_beta, np.float64) - np.asarray(bn_mean, np.float64) * bn_a

    x_flat = x_nchw.reshape(B, C * HW).astype(jnp.float32)              # free reshape
    args = (x_flat, dvec,
            jnp.asarray(w1, jnp.float32), jnp.asarray(b1, jnp.float32),
            jnp.asarray(w2, jnp.float32), jnp.asarray(b2, jnp.float32),
            jnp.asarray(bn_a, jnp.float32), jnp.asarray(bn_b, jnp.float32))

    try:
        out = _build_call(B, C, HW, hid, Bt, out_dtype, approx_epilogue,
                          single_buffer_consts=True)(*args)
    except Exception:
        # Fallback if pl.Buffered(1) on the constant operand is rejected by this
        # JAX build; double-buffering a ~1 KB constant is harmless.
        out = _build_call(B, C, HW, hid, Bt, out_dtype, approx_epilogue,
                          single_buffer_consts=False)(*args)
    return out.reshape(B, C, H, W)


# ---------------------------------------------------------------------------
# Pure-JAX reference (mirrors the PyTorch forward, inference-mode BatchNorm)
# ---------------------------------------------------------------------------
def reference_forward(x, M, fc, w1, b1, w2, b2, gamma, beta, mean, var, eps=1e-5):
    x_dct = jnp.einsum("bchw,vuhw->bcvu", x, M)
    lowest = x_dct[:, :, 0, 0]
    low = x_dct[:, :, 0:2, 0:2].sum((-1, -2))
    med = x_dct[:, :, 0:4, 0:4].sum((-1, -2))
    high = x_dct[:, :, 0:8, 0:8].sum((-1, -2))
    bc = (lowest * fc[0] + (low - lowest) / 3 * fc[1]
          + (med - low) / 12 * fc[2] + (high - med) / 48 * fc[3])
    h = jax.nn.relu(bc @ w1.T + b1)
    s = jax.nn.sigmoid(h @ w2.T + b2)
    xr = x + x * s[:, :, None, None]
    xn = ((xr - mean[None, :, None, None]) / jnp.sqrt(var + eps)[None, :, None, None]
          * gamma[None, :, None, None] + beta[None, :, None, None])
    return jax.nn.sigmoid(xn)


if __name__ == "__main__":
    # Keep the f32 reference einsum / matmuls in full precision on TPU.
    jax.config.update("jax_default_matmul_precision", "highest")

    B, C, H = 2, 16, 16               # input_channels=16, time_domain_size=16
    reduction = 8
    hid = C // reduction

    key = jax.random.PRNGKey(0)
    ks = jax.random.split(key, 10)
    x = jax.random.normal(ks[0], (B, C, H, H), jnp.float32)
    fc = jax.random.uniform(ks[1], (4,), jnp.float32)                 # torch.rand(4)
    lim1 = 1.0 / np.sqrt(C)
    lim2 = 1.0 / np.sqrt(hid)
    w1 = jax.random.uniform(ks[2], (hid, C), jnp.float32, -lim1, lim1)
    b1 = jax.random.uniform(ks[3], (hid,), jnp.float32, -lim1, lim1)
    w2 = jax.random.uniform(ks[4], (C, hid), jnp.float32, -lim2, lim2)
    b2 = jax.random.uniform(ks[5], (C,), jnp.float32, -lim2, lim2)
    gamma = jax.random.uniform(ks[6], (C,), jnp.float32, 0.5, 1.5)
    beta = 0.2 * jax.random.normal(ks[7], (C,), jnp.float32)
    run_mean = 0.2 * jax.random.normal(ks[8], (C,), jnp.float32)
    run_var = jax.random.uniform(ks[9], (C,), jnp.float32, 0.5, 1.5)
    eps = 1e-5

    M64 = dct_basis_matrix_np(H, H)                 # float64 DCT basis (8,8,H,H)
    M32 = jnp.asarray(M64, jnp.float32)

    approx = _running_on_v7x()                      # cheap epilogue only on v7x
    out = spectral_feature_fusion(x, M64, fc, w1, b1, w2, b2,
                                  gamma, beta, run_mean, run_var, eps,
                                  approx_epilogue=approx,
                                  out_dtype=jnp.float32)
    out = jax.block_until_ready(out)

    ref = reference_forward(x, M32, fc, w1, b1, w2, b2,
                            gamma, beta, run_mean, run_var, eps)
    if approx:
        rtol, atol = 1e-2, 2e-3       # approx-reciprocal epilogue on v7x
    else:
        rtol, atol = 1e-4, 5e-5       # exact f32 path
    np.testing.assert_allclose(np.asarray(out), np.asarray(ref), rtol=rtol, atol=atol)
    print("KERNEL_OK")
</pallas_src>

<mosaic_0001>
module attributes {stable_mosaic.version = 11 : i64} {
  func.func @kernel(%arg0: i32, %arg1: memref<2x4096xf32, #tpu.memory_space<vmem>>, %arg2: memref<1x256xf32, #tpu.memory_space<vmem>>, %arg3: memref<2x16xf32, #tpu.memory_space<smem>>, %arg4: memref<2xf32, #tpu.memory_space<smem>>, %arg5: memref<16x2xf32, #tpu.memory_space<smem>>, %arg6: memref<16xf32, #tpu.memory_space<smem>>, %arg7: memref<16xf32, #tpu.memory_space<smem>>, %arg8: memref<16xf32, #tpu.memory_space<smem>>, %arg9: memref<2x4096xf32, #tpu.memory_space<vmem>>) attributes {dimension_semantics = [#tpu.dimension_semantics<parallel>], iteration_bounds = array<i64: 1>, scalar_prefetch = 0 : i64, scratch_operands = 0 : i64, tpu.core_type = #tpu.core_type<tc>, window_params = [{transform_indices = @transform_0, window_bounds = array<i64: 2, 4096>}, {pipeline_mode = #tpu.pipeline_mode<synchronous>, transform_indices = @transform_1, window_bounds = array<i64: 1, 256>}, {transform_indices = @transform_2, window_bounds = array<i64: 2, 16>}, {transform_indices = @transform_3, window_bounds = array<i64: 2>}, {transform_indices = @transform_4, window_bounds = array<i64: 16, 2>}, {transform_indices = @transform_5, window_bounds = array<i64: 16>}, {transform_indices = @transform_6, window_bounds = array<i64: 16>}, {transform_indices = @transform_7, window_bounds = array<i64: 16>}, {transform_indices = @transform_8, window_bounds = array<i64: 2, 4096>}]} {
    %c0 = arith.constant 0 : index
    %c0_0 = arith.constant 0 : index
    %0 = vector.load %arg2[%c0, %c0_0] : memref<1x256xf32, #tpu.memory_space<vmem>>, vector<1x256xf32>
    %c0_1 = arith.constant 0 : index
    %c0_2 = arith.constant 0 : index
    %1 = vector.load %arg1[%c0_1, %c0_2] : memref<2x4096xf32, #tpu.memory_space<vmem>>, vector<2x256xf32>
    %2 = vector.broadcast %0 : vector<1x256xf32> to vector<2x256xf32>
    %3 = arith.mulf %1, %2 : vector<2x256xf32>
    %cst = arith.constant dense<0.000000e+00> : vector<2xf32>
    %4 = vector.multi_reduction <add>, %3, %cst [1] : vector<2x256xf32> to vector<2xf32>
    %5 = vector.shape_cast %4 : vector<2xf32> to vector<2x1xf32>
    %c0_3 = arith.constant 0 : index
    %c256 = arith.constant 256 : index
    %6 = vector.load %arg1[%c0_3, %c256] : memref<2x4096xf32, #tpu.memory_space<vmem>>, vector<2x256xf32>
    %7 = vector.broadcast %0 : vector<1x256xf32> to vector<2x256xf32>
    %8 = arith.mulf %6, %7 : vector<2x256xf32>
    %cst_4 = arith.constant dense<0.000000e+00> : vector<2xf32>
    %9 = vector.multi_reduction <add>, %8, %cst_4 [1] : vector<2x256xf32> to vector<2xf32>
    %10 = vector.shape_cast %9 : vector<2xf32> to vector<2x1xf32>
    %c0_5 = arith.constant 0 : index
    %c512 = arith.constant 512 : index
    %11 = vector.load %arg1[%c0_5, %c512] : memref<2x4096xf32, #tpu.memory_space<vmem>>, vector<2x256xf32>
    %12 = vector.broadcast %0 : vector<1x256xf32> to vector<2x256xf32>
    %13 = arith.mulf %11, %12 : vector<2x256xf32>
    %cst_6 = arith.constant dense<0.000000e+00> : vector<2xf32>
    %14 = vector.multi_reduction <add>, %13, %cst_6 [1] : vector<2x256xf32> to vector<2xf32>
    %15 = vector.shape_cast %14 : vector<2xf32> to vector<2x1xf32>
    %c0_7 = arith.constant 0 : index
    %c768 = arith.constant 768 : index
    %16 = vector.load %arg1[%c0_7, %c768] : memref<2x4096xf32, #tpu.memory_space<vmem>>, vector<2x256xf32>
    %17 = vector.broadcast %0 : vector<1x256xf32> to vector<2x256xf32>
    %18 = arith.mulf %16, %17 : vector<2x256xf32>
    %cst_8 = arith.constant dense<0.000000e+00> : vector<2xf32>
    %19 = vector.multi_reduction <add>, %18, %cst_8 [1] : vector<2x256xf32> to vector<2xf32>
    %20 = vector.shape_cast %19 : vector<2xf32> to vector<2x1xf32>
    %c0_9 = arith.constant 0 : index
    %c1024 = arith.constant 1024 : index
    %21 = vector.load %arg1[%c0_9, %c1024] : memref<2x4096xf32, #tpu.memory_space<vmem>>, vector<2x256xf32>
    %22 = vector.broadcast %0 : vector<1x256xf32> to vector<2x256xf32>
    %23 = arith.mulf %21, %22 : vector<2x256xf32>
    %cst_10 = arith.constant dense<0.000000e+00> : vector<2xf32>
    %24 = vector.multi_reduction <add>, %23, %cst_10 [1] : vector<2x256xf32> to vector<2xf32>
    %25 = vector.shape_cast %24 : vector<2xf32> to vector<2x1xf32>
    %c0_11 = arith.constant 0 : index
    %c1280 = arith.constant 1280 : index
    %26 = vector.load %arg1[%c0_11, %c1280] : memref<2x4096xf32, #tpu.memory_space<vmem>>, vector<2x256xf32>
    %27 = vector.broadcast %0 : vector<1x256xf32> to vector<2x256xf32>
    %28 = arith.mulf %26, %27 : vector<2x256xf32>
    %cst_12 = arith.constant dense<0.000000e+00> : vector<2xf32>
    %29 = vector.multi_reduction <add>, %28, %cst_12 [1] : vector<2x256xf32> to vector<2xf32>
    %30 = vector.shape_cast %29 : vector<2xf32> to vector<2x1xf32>
    %c0_13 = arith.constant 0 : index
    %c1536 = arith.constant 1536 : index
    %31 = vector.load %arg1[%c0_13, %c1536] : memref<2x4096xf32, #tpu.memory_space<vmem>>, vector<2x256xf32>
    %32 = vector.broadcast %0 : vector<1x256xf32> to vector<2x256xf32>
    %33 = arith.mulf %31, %32 : vector<2x256xf32>
    %cst_14 = arith.constant dense<0.000000e+00> : vector<2xf32>
    %34 = vector.multi_reduction <add>, %33, %cst_14 [1] : vector<2x256xf32> to vector<2xf32>
    %35 = vector.shape_cast %34 : vector<2xf32> to vector<2x1xf32>
    %c0_15 = arith.constant 0 : index
    %c1792 = arith.constant 1792 : index
    %36 = vector.load %arg1[%c0_15, %c1792] : memref<2x4096xf32, #tpu.memory_space<vmem>>, vector<2x256xf32>
    %37 = vector.broadcast %0 : vector<1x256xf32> to vector<2x256xf32>
    %38 = arith.mulf %36, %37 : vector<2x256xf32>
    %cst_16 = arith.constant dense<0.000000e+00> : vector<2xf32>
    %39 = vector.multi_reduction <add>, %38, %cst_16 [1] : vector<2x256xf32> to vector<2xf32>
    %40 = vector.shape_cast %39 : vector<2xf32> to vector<2x1xf32>
    %c0_17 = arith.constant 0 : index
    %c2048 = arith.constant 2048 : index
    %41 = vector.load %arg1[%c0_17, %c2048] : memref<2x4096xf32, #tpu.memory_space<vmem>>, vector<2x256xf32>
    %42 = vector.broadcast %0 : vector<1x256xf32> to vector<2x256xf32>
    %43 = arith.mulf %41, %42 : vector<2x256xf32>
    %cst_18 = arith.constant dense<0.000000e+00> : vector<2xf32>
    %44 = vector.multi_reduction <add>, %43, %cst_18 [1] : vector<2x256xf32> to vector<2xf32>
    %45 = vector.shape_cast %44 : vector<2xf32> to vector<2x1xf32>
    %c0_19 = arith.constant 0 : index
    %c2304 = arith.constant 2304 : index
    %46 = vector.load %arg1[%c0_19, %c2304] : memref<2x4096xf32, #tpu.memory_space<vmem>>, vector<2x256xf32>
    %47 = vector.broadcast %0 : vector<1x256xf32> to vector<2x256xf32>
    %48 = arith.mulf %46, %47 : vector<2x256xf32>
    %cst_20 = arith.constant dense<0.000000e+00> : vector<2xf32>
    %49 = vector.multi_reduction <add>, %48, %cst_20 [1] : vector<2x256xf32> to vector<2xf32>
    %50 = vector.shape_cast %49 : vector<2xf32> to vector<2x1xf32>
    %c0_21 = arith.constant 0 : index
    %c2560 = arith.constant 2560 : index
    %51 = vector.load %arg1[%c0_21, %c2560] : memref<2x4096xf32, #tpu.memory_space<vmem>>, vector<2x256xf32>
    %52 = vector.broadcast %0 : vector<1x256xf32> to vector<2x256xf32>
    %53 = arith.mulf %51, %52 : vector<2x256xf32>
    %cst_22 = arith.constant dense<0.000000e+00> : vector<2xf32>
    %54 = vector.multi_reduction <add>, %53, %cst_22 [1] : vector<2x256xf32> to vector<2xf32>
    %55 = vector.shape_cast %54 : vector<2xf32> to vector<2x1xf32>
    %c0_23 = arith.constant 0 : index
    %c2816 = arith.constant 2816 : index
    %56 = vector.load %arg1[%c0_23, %c2816] : memref<2x4096xf32, #tpu.memory_space<vmem>>, vector<2x256xf32>
    %57 = vector.broadcast %0 : vector<1x256xf32> to vector<2x256xf32>
    %58 = arith.mulf %56, %57 : vector<2x256xf32>
    %cst_24 = arith.constant dense<0.000000e+00> : vector<2xf32>
    %59 = vector.multi_reduction <add>, %58, %cst_24 [1] : vector<2x256xf32> to vector<2xf32>
    %60 = vector.shape_cast %59 : vector<2xf32> to vector<2x1xf32>
    %c0_25 = arith.constant 0 : index
    %c3072 = arith.constant 3072 : index
    %61 = vector.load %arg1[%c0_25, %c3072] : memref<2x4096xf32, #tpu.memory_space<vmem>>, vector<2x256xf32>
    %62 = vector.broadcast %0 : vector<1x256xf32> to vector<2x256xf32>
    %63 = arith.mulf %61, %62 : vector<2x256xf32>
    %cst_26 = arith.constant dense<0.000000e+00> : vector<2xf32>
    %64 = vector.multi_reduction <add>, %63, %cst_26 [1] : vector<2x256xf32> to vector<2xf32>
    %65 = vector.shape_cast %64 : vector<2xf32> to vector<2x1xf32>
    %c0_27 = arith.constant 0 : index
    %c3328 = arith.constant 3328 : index
    %66 = vector.load %arg1[%c0_27, %c3328] : memref<2x4096xf32, #tpu.memory_space<vmem>>, vector<2x256xf32>
    %67 = vector.broadcast %0 : vector<1x256xf32> to vector<2x256xf32>
    %68 = arith.mulf %66, %67 : vector<2x256xf32>
    %cst_28 = arith.constant dense<0.000000e+00> : vector<2xf32>
    %69 = vector.multi_reduction <add>, %68, %cst_28 [1] : vector<2x256xf32> to vector<2xf32>
    %70 = vector.shape_cast %69 : vector<2xf32> to vector<2x1xf32>
    %c0_29 = arith.constant 0 : index
    %c3584 = arith.constant 3584 : index
    %71 = vector.load %arg1[%c0_29, %c3584] : memref<2x4096xf32, #tpu.memory_space<vmem>>, vector<2x256xf32>
    %72 = vector.broadcast %0 : vector<1x256xf32> to vector<2x256xf32>
    %73 = arith.mulf %71, %72 : vector<2x256xf32>
    %cst_30 = arith.constant dense<0.000000e+00> : vector<2xf32>
    %74 = vector.multi_reduction <add>, %73, %cst_30 [1] : vector<2x256xf32> to vector<2xf32>
    %75 = vector.shape_cast %74 : vector<2xf32> to vector<2x1xf32>
    %c0_31 = arith.constant 0 : index
    %c3840 = arith.constant 3840 : index
    %76 = vector.load %arg1[%c0_31, %c3840] : memref<2x4096xf32, #tpu.memory_space<vmem>>, vector<2x256xf32>
    %77 = vector.broadcast %0 : vector<1x256xf32> to vector<2x256xf32>
    %78 = arith.mulf %76, %77 : vector<2x256xf32>
    %cst_32 = arith.constant dense<0.000000e+00> : vector<2xf32>
    %79 = vector.multi_reduction <add>, %78, %cst_32 [1] : vector<2x256xf32> to vector<2xf32>
    %80 = vector.shape_cast %79 : vector<2xf32> to vector<2x1xf32>
    %c0_33 = arith.constant 0 : index
    %81 = memref.load %arg4[%c0_33] : memref<2xf32, #tpu.memory_space<smem>>
    %c0_34 = arith.constant 0 : index
    %c0_35 = arith.constant 0 : index
    %82 = memref.load %arg3[%c0_34, %c0_35] : memref<2x16xf32, #tpu.memory_space<smem>>
    %83 = vector.broadcast %82 : f32 to vector<2x1xf32>
    %84 = arith.mulf %83, %5 : vector<2x1xf32>
    %85 = vector.broadcast %81 : f32 to vector<2x1xf32>
    %86 = arith.addf %85, %84 : vector<2x1xf32>
    %c0_36 = arith.constant 0 : index
    %c1 = arith.constant 1 : index
    %87 = memref.load %arg3[%c0_36, %c1] : memref<2x16xf32, #tpu.memory_space<smem>>
    %88 = vector.broadcast %87 : f32 to vector<2x1xf32>
    %89 = arith.mulf %88, %10 : vector<2x1xf32>
    %90 = arith.addf %86, %89 : vector<2x1xf32>
    %c0_37 = arith.constant 0 : index
    %c2 = arith.constant 2 : index
    %91 = memref.load %arg3[%c0_37, %c2] : memref<2x16xf32, #tpu.memory_space<smem>>
    %92 = vector.broadcast %91 : f32 to vector<2x1xf32>
    %93 = arith.mulf %92, %15 : vector<2x1xf32>
    %94 = arith.addf %90, %93 : vector<2x1xf32>
    %c0_38 = arith.constant 0 : index
    %c3 = arith.constant 3 : index
    %95 = memref.load %arg3[%c0_38, %c3] : memref<2x16xf32, #tpu.memory_space<smem>>
    %96 = vector.broadcast %95 : f32 to vector<2x1xf32>
    %97 = arith.mulf %96, %20 : vector<2x1xf32>
    %98 = arith.addf %94, %97 : vector<2x1xf32>
    %c0_39 = arith.constant 0 : index
    %c4 = arith.constant 4 : index
    %99 = memref.load %arg3[%c0_39, %c4] : memref<2x16xf32, #tpu.memory_space<smem>>
    %100 = vector.broadcast %99 : f32 to vector<2x1xf32>
    %101 = arith.mulf %100, %25 : vector<2x1xf32>
    %102 = arith.addf %98, %101 : vector<2x1xf32>
    %c0_40 = arith.constant 0 : index
    %c5 = arith.constant 5 : index
    %103 = memref.load %arg3[%c0_40, %c5] : memref<2x16xf32, #tpu.memory_space<smem>>
    %104 = vector.broadcast %103 : f32 to vector<2x1xf32>
    %105 = arith.mulf %104, %30 : vector<2x1xf32>
    %106 = arith.addf %102, %105 : vector<2x1xf32>
    %c0_41 = arith.constant 0 : index
    %c6 = arith.constant 6 : index
    %107 = memref.load %arg3[%c0_41, %c6] : memref<2x16xf32, #tpu.memory_space<smem>>
    %108 = vector.broadcast %107 : f32 to vector<2x1xf32>
    %109 = arith.mulf %108, %35 : vector<2x1xf32>
    %110 = arith.addf %106, %109 : vector<2x1xf32>
    %c0_42 = arith.constant 0 : index
    %c7 = arith.constant 7 : index
    %111 = memref.load %arg3[%c0_42, %c7] : memref<2x16xf32, #tpu.memory_space<smem>>
    %112 = vector.broadcast %111 : f32 to vector<2x1xf32>
    %113 = arith.mulf %112, %40 : vector<2x1xf32>
    %114 = arith.addf %110, %113 : vector<2x1xf32>
    %c0_43 = arith.constant 0 : index
    %c8 = arith.constant 8 : index
    %115 = memref.load %arg3[%c0_43, %c8] : memref<2x16xf32, #tpu.memory_space<smem>>
    %116 = vector.broadcast %115 : f32 to vector<2x1xf32>
    %117 = arith.mulf %116, %45 : vector<2x1xf32>
    %118 = arith.addf %114, %117 : vector<2x1xf32>
    %c0_44 = arith.constant 0 : index
    %c9 = arith.constant 9 : index
    %119 = memref.load %arg3[%c0_44, %c9] : memref<2x16xf32, #tpu.memory_space<smem>>
    %120 = vector.broadcast %119 : f32 to vector<2x1xf32>
    %121 = arith.mulf %120, %50 : vector<2x1xf32>
    %122 = arith.addf %118, %121 : vector<2x1xf32>
    %c0_45 = arith.constant 0 : index
    %c10 = arith.constant 10 : index
    %123 = memref.load %arg3[%c0_45, %c10] : memref<2x16xf32, #tpu.memory_space<smem>>
    %124 = vector.broadcast %123 : f32 to vector<2x1xf32>
    %125 = arith.mulf %124, %55 : vector<2x1xf32>
    %126 = arith.addf %122, %125 : vector<2x1xf32>
    %c0_46 = arith.constant 0 : index
    %c11 = arith.constant 11 : index
    %127 = memref.load %arg3[%c0_46, %c11] : memref<2x16xf32, #tpu.memory_space<smem>>
    %128 = vector.broadcast %127 : f32 to vector<2x1xf32>
    %129 = arith.mulf %128, %60 : vector<2x1xf32>
    %130 = arith.addf %126, %129 : vector<2x1xf32>
    %c0_47 = arith.constant 0 : index
    %c12 = arith.constant 12 : index
    %131 = memref.load %arg3[%c0_47, %c12] : memref<2x16xf32, #tpu.memory_space<smem>>
    %132 = vector.broadcast %131 : f32 to vector<2x1xf32>
    %133 = arith.mulf %132, %65 : vector<2x1xf32>
    %134 = arith.addf %130, %133 : vector<2x1xf32>
    %c0_48 = arith.constant 0 : index
    %c13 = arith.constant 13 : index
    %135 = memref.load %arg3[%c0_48, %c13] : memref<2x16xf32, #tpu.memory_space<smem>>
    %136 = vector.broadcast %135 : f32 to vector<2x1xf32>
    %137 = arith.mulf %136, %70 : vector<2x1xf32>
    %138 = arith.addf %134, %137 : vector<2x1xf32>
    %c0_49 = arith.constant 0 : index
    %c14 = arith.constant 14 : index
    %139 = memref.load %arg3[%c0_49, %c14] : memref<2x16xf32, #tpu.memory_space<smem>>
    %140 = vector.broadcast %139 : f32 to vector<2x1xf32>
    %141 = arith.mulf %140, %75 : vector<2x1xf32>
    %142 = arith.addf %138, %141 : vector<2x1xf32>
    %c0_50 = arith.constant 0 : index
    %c15 = arith.constant 15 : index
    %143 = memref.load %arg3[%c0_50, %c15] : memref<2x16xf32, #tpu.memory_space<smem>>
    %144 = vector.broadcast %143 : f32 to vector<2x1xf32>
    %145 = arith.mulf %144, %80 : vector<2x1xf32>
    %146 = arith.addf %142, %145 : vector<2x1xf32>
    %cst_51 = arith.constant 0.000000e+00 : f32
    %147 = vector.broadcast %cst_51 : f32 to vector<2x1xf32>
    %148 = arith.maximumf %146, %147 : vector<2x1xf32>
    %c1_52 = arith.constant 1 : index
    %149 = memref.load %arg4[%c1_52] : memref<2xf32, #tpu.memory_space<smem>>
    %c1_53 = arith.constant 1 : index
    %c0_54 = arith.constant 0 : index
    %150 = memref.load %arg3[%c1_53, %c0_54] : memref<2x16xf32, #tpu.memory_space<smem>>
    %151 = vector.broadcast %150 : f32 to vector<2x1xf32>
    %152 = arith.mulf %151, %5 : vector<2x1xf32>
    %153 = vector.broadcast %149 : f32 to vector<2x1xf32>
    %154 = arith.addf %153, %152 : vector<2x1xf32>
    %c1_55 = arith.constant 1 : index
    %c1_56 = arith.constant 1 : index
    %155 = memref.load %arg3[%c1_55, %c1_56] : memref<2x16xf32, #tpu.memory_space<smem>>
    %156 = vector.broadcast %155 : f32 to vector<2x1xf32>
    %157 = arith.mulf %156, %10 : vector<2x1xf32>
    %158 = arith.addf %154, %157 : vector<2x1xf32>
    %c1_57 = arith.constant 1 : index
    %c2_58 = arith.constant 2 : index
    %159 = memref.load %arg3[%c1_57, %c2_58] : memref<2x16xf32, #tpu.memory_space<smem>>
    %160 = vector.broadcast %159 : f32 to vector<2x1xf32>
    %161 = arith.mulf %160, %15 : vector<2x1xf32>
    %162 = arith.addf %158, %161 : vector<2x1xf32>
    %c1_59 = arith.constant 1 : index
    %c3_60 = arith.constant 3 : index
    %163 = memref.load %arg3[%c1_59, %c3_60] : memref<2x16xf32, #tpu.memory_space<smem>>
    %164 = vector.broadcast %163 : f32 to vector<2x1xf32>
    %165 = arith.mulf %164, %20 : vector<2x1xf32>
    %166 = arith.addf %162, %165 : vector<2x1xf32>
    %c1_61 = arith.constant 1 : index
    %c4_62 = arith.constant 4 : index
    %167 = memref.load %arg3[%c1_61, %c4_62] : memref<2x16xf32, #tpu.memory_space<smem>>
    %168 = vector.broadcast %167 : f32 to vector<2x1xf32>
    %169 = arith.mulf %168, %25 : vector<2x1xf32>
    %170 = arith.addf %166, %169 : vector<2x1xf32>
    %c1_63 = arith.constant 1 : index
    %c5_64 = arith.constant 5 : index
    %171 = memref.load %arg3[%c1_63, %c5_64] : memref<2x16xf32, #tpu.memory_space<smem>>
    %172 = vector.broadcast %171 : f32 to vector<2x1xf32>
    %173 = arith.mulf %172, %30 : vector<2x1xf32>
    %174 = arith.addf %170, %173 : vector<2x1xf32>
    %c1_65 = arith.constant 1 : index
    %c6_66 = arith.constant 6 : index
    %175 = memref.load %arg3[%c1_65, %c6_66] : memref<2x16xf32, #tpu.memory_space<smem>>
    %176 = vector.broadcast %175 : f32 to vector<2x1xf32>
    %177 = arith.mulf %176, %35 : vector<2x1xf32>
    %178 = arith.addf %174, %177 : vector<2x1xf32>
    %c1_67 = arith.constant 1 : index
    %c7_68 = arith.constant 7 : index
    %179 = memref.load %arg3[%c1_67, %c7_68] : memref<2x16xf32, #tpu.memory_space<smem>>
    %180 = vector.broadcast %179 : f32 to vector<2x1xf32>
    %181 = arith.mulf %180, %40 : vector<2x1xf32>
    %182 = arith.addf %178, %181 : vector<2x1xf32>
    %c1_69 = arith.constant 1 : index
    %c8_70 = arith.constant 8 : index
    %183 = memref.load %arg3[%c1_69, %c8_70] : memref<2x16xf32, #tpu.memory_space<smem>>
    %184 = vector.broadcast %183 : f32 to vector<2x1xf32>
    %185 = arith.mulf %184, %45 : vector<2x1xf32>
    %186 = arith.addf %182, %185 : vector<2x1xf32>
    %c1_71 = arith.constant 1 : index
    %c9_72 = arith.constant 9 : index
    %187 = memref.load %arg3[%c1_71, %c9_72] : memref<2x16xf32, #tpu.memory_space<smem>>
    %188 = vector.broadcast %187 : f32 to vector<2x1xf32>
    %189 = arith.mulf %188, %50 : vector<2x1xf32>
    %190 = arith.addf %186, %189 : vector<2x1xf32>
    %c1_73 = arith.constant 1 : index
    %c10_74 = arith.constant 10 : index
    %191 = memref.load %arg3[%c1_73, %c10_74] : memref<2x16xf32, #tpu.memory_space<smem>>
    %192 = vector.broadcast %191 : f32 to vector<2x1xf32>
    %193 = arith.mulf %192, %55 : vector<2x1xf32>
    %194 = arith.addf %190, %193 : vector<2x1xf32>
    %c1_75 = arith.constant 1 : index
    %c11_76 = arith.constant 11 : index
    %195 = memref.load %arg3[%c1_75, %c11_76] : memref<2x16xf32, #tpu.memory_space<smem>>
    %196 = vector.broadcast %195 : f32 to vector<2x1xf32>
    %197 = arith.mulf %196, %60 : vector<2x1xf32>
    %198 = arith.addf %194, %197 : vector<2x1xf32>
    %c1_77 = arith.constant 1 : index
    %c12_78 = arith.constant 12 : index
    %199 = memref.load %arg3[%c1_77, %c12_78] : memref<2x16xf32, #tpu.memory_space<smem>>
    %200 = vector.broadcast %199 : f32 to vector<2x1xf32>
    %201 = arith.mulf %200, %65 : vector<2x1xf32>
    %202 = arith.addf %198, %201 : vector<2x1xf32>
    %c1_79 = arith.constant 1 : index
    %c13_80 = arith.constant 13 : index
    %203 = memref.load %arg3[%c1_79, %c13_80] : memref<2x16xf32, #tpu.memory_space<smem>>
    %204 = vector.broadcast %203 : f32 to vector<2x1xf32>
    %205 = arith.mulf %204, %70 : vector<2x1xf32>
    %206 = arith.addf %202, %205 : vector<2x1xf32>
    %c1_81 = arith.constant 1 : index
    %c14_82 = arith.constant 14 : index
    %207 = memref.load %arg3[%c1_81, %c14_82] : memref<2x16xf32, #tpu.memory_space<smem>>
    %208 = vector.broadcast %207 : f32 to vector<2x1xf32>
    %209 = arith.mulf %208, %75 : vector<2x1xf32>
    %210 = arith.addf %206, %209 : vector<2x1xf32>
    %c1_83 = arith.constant 1 : index
    %c15_84 = arith.constant 15 : index
    %211 = memref.load %arg3[%c1_83, %c15_84] : memref<2x16xf32, #tpu.memory_space<smem>>
    %212 = vector.broadcast %211 : f32 to vector<2x1xf32>
    %213 = arith.mulf %212, %80 : vector<2x1xf32>
    %214 = arith.addf %210, %213 : vector<2x1xf32>
    %cst_85 = arith.constant 0.000000e+00 : f32
    %215 = vector.broadcast %cst_85 : f32 to vector<2x1xf32>
    %216 = arith.maximumf %214, %215 : vector<2x1xf32>
    %c0_86 = arith.constant 0 : index
    %217 = memref.load %arg6[%c0_86] : memref<16xf32, #tpu.memory_space<smem>>
    %c0_87 = arith.constant 0 : index
    %c0_88 = arith.constant 0 : index
    %218 = memref.load %arg5[%c0_87, %c0_88] : memref<16x2xf32, #tpu.memory_space<smem>>
    %219 = vector.broadcast %218 : f32 to vector<2x1xf32>
    %220 = arith.mulf %219, %148 : vector<2x1xf32>
    %221 = vector.broadcast %217 : f32 to vector<2x1xf32>
    %222 = arith.addf %221, %220 : vector<2x1xf32>
    %c0_89 = arith.constant 0 : index
    %c1_90 = arith.constant 1 : index
    %223 = memref.load %arg5[%c0_89, %c1_90] : memref<16x2xf32, #tpu.memory_space<smem>>
    %224 = vector.broadcast %223 : f32 to vector<2x1xf32>
    %225 = arith.mulf %224, %216 : vector<2x1xf32>
    %226 = arith.addf %222, %225 : vector<2x1xf32>
    %cst_91 = arith.constant 0.000000e+00 : f32
    %227 = vector.broadcast %cst_91 : f32 to vector<2x1xf32>
    %228 = arith.subf %227, %226 : vector<2x1xf32>
    %229 = math.exp %228 : vector<2x1xf32>
    %cst_92 = arith.constant 1.000000e+00 : f32
    %230 = vector.broadcast %cst_92 : f32 to vector<2x1xf32>
    %231 = arith.addf %230, %229 : vector<2x1xf32>
    %cst_93 = arith.constant 1.000000e+00 : f32
    %232 = vector.broadcast %cst_93 : f32 to vector<2x1xf32>
    %233 = arith.divf %232, %231 : vector<2x1xf32>
    %cst_94 = arith.constant 1.000000e+00 : f32
    %234 = vector.broadcast %cst_94 : f32 to vector<2x1xf32>
    %235 = arith.addf %234, %233 : vector<2x1xf32>
    %c0_95 = arith.constant 0 : index
    %236 = memref.load %arg7[%c0_95] : memref<16xf32, #tpu.memory_space<smem>>
    %237 = vector.broadcast %236 : f32 to vector<2x1xf32>
    %238 = arith.mulf %235, %237 : vector<2x1xf32>
    %c0_96 = arith.constant 0 : index
    %c0_97 = arith.constant 0 : index
    %239 = vector.load %arg1[%c0_96, %c0_97] : memref<2x4096xf32, #tpu.memory_space<vmem>>, vector<2x256xf32>
    %240 = vector.broadcast %238 : vector<2x1xf32> to vector<2x256xf32>
    %241 = arith.mulf %239, %240 : vector<2x256xf32>
    %c0_98 = arith.constant 0 : index
    %242 = memref.load %arg8[%c0_98] : memref<16xf32, #tpu.memory_space<smem>>
    %243 = vector.broadcast %242 : f32 to vector<2x256xf32>
    %244 = arith.addf %241, %243 : vector<2x256xf32>
    %cst_99 = arith.constant 0.000000e+00 : f32
    %245 = vector.broadcast %cst_99 : f32 to vector<2x256xf32>
    %246 = arith.subf %245, %244 : vector<2x256xf32>
    %247 = math.exp %246 : vector<2x256xf32>
    %cst_100 = arith.constant 1.000000e+00 : f32
    %248 = vector.broadcast %cst_100 : f32 to vector<2x256xf32>
    %249 = arith.addf %248, %247 : vector<2x256xf32>
    %cst_101 = arith.constant 1.000000e+00 : f32
    %250 = vector.broadcast %cst_101 : f32 to vector<2x256xf32>
    %251 = arith.divf %250, %249 : vector<2x256xf32>
    %c0_102 = arith.constant 0 : index
    %c0_103 = arith.constant 0 : index
    %252 = vector.load %arg9[%c0_102, %c0_103] : memref<2x4096xf32, #tpu.memory_space<vmem>>, vector<2x256xf32>
    tpu.vector_store %arg9[%c0_102, %c0_103], %251 {strides = array<i32>} : memref<2x4096xf32, #tpu.memory_space<vmem>>, vector<2x256xf32>,
    %c1_104 = arith.constant 1 : index
    %253 = memref.load %arg6[%c1_104] : memref<16xf32, #tpu.memory_space<smem>>
    %c1_105 = arith.constant 1 : index
    %c0_106 = arith.constant 0 : index
    %254 = memref.load %arg5[%c1_105, %c0_106] : memref<16x2xf32, #tpu.memory_space<smem>>
    %255 = vector.broadcast %254 : f32 to vector<2x1xf32>
    %256 = arith.mulf %255, %148 : vector<2x1xf32>
    %257 = vector.broadcast %253 : f32 to vector<2x1xf32>
    %258 = arith.addf %257, %256 : vector<2x1xf32>
    %c1_107 = arith.constant 1 : index
    %c1_108 = arith.constant 1 : index
    %259 = memref.load %arg5[%c1_107, %c1_108] : memref<16x2xf32, #tpu.memory_space<smem>>
    %260 = vector.broadcast %259 : f32 to vector<2x1xf32>
    %261 = arith.mulf %260, %216 : vector<2x1xf32>
    %262 = arith.addf %258, %261 : vector<2x1xf32>
    %cst_109 = arith.constant 0.000000e+00 : f32
    %263 = vector.broadcast %cst_109 : f32 to vector<2x1xf32>
    %264 = arith.subf %263, %262 : vector<2x1xf32>
    %265 = math.exp %264 : vector<2x1xf32>
    %cst_110 = arith.constant 1.000000e+00 : f32
    %266 = vector.broadcast %cst_110 : f32 to vector<2x1xf32>
    %267 = arith.addf %266, %265 : vector<2x1xf32>
    %cst_111 = arith.constant 1.000000e+00 : f32
    %268 = vector.broadcast %cst_111 : f32 to vector<2x1xf32>
    %269 = arith.divf %268, %267 : vector<2x1xf32>
    %cst_112 = arith.constant 1.000000e+00 : f32
    %270 = vector.broadcast %cst_112 : f32 to vector<2x1xf32>
    %271 = arith.addf %270, %269 : vector<2x1xf32>
    %c1_113 = arith.constant 1 : index
    %272 = memref.load %arg7[%c1_113] : memref<16xf32, #tpu.memory_space<smem>>
    %273 = vector.broadcast %272 : f32 to vector<2x1xf32>
    %274 = arith.mulf %271, %273 : vector<2x1xf32>
    %c0_114 = arith.constant 0 : index
    %c256_115 = arith.constant 256 : index
    %275 = vector.load %arg1[%c0_114, %c256_115] : memref<2x4096xf32, #tpu.memory_space<vmem>>, vector<2x256xf32>
    %276 = vector.broadcast %274 : vector<2x1xf32> to vector<2x256xf32>
    %277 = arith.mulf %275, %276 : vector<2x256xf32>
    %c1_116 = arith.constant 1 : index
    %278 = memref.load %arg8[%c1_116] : memref<16xf32, #tpu.memory_space<smem>>
    %279 = vector.broadcast %278 : f32 to vector<2x256xf32>
    %280 = arith.addf %277, %279 : vector<2x256xf32>
    %cst_117 = arith.constant 0.000000e+00 : f32
    %281 = vector.broadcast %cst_117 : f32 to vector<2x256xf32>
    %282 = arith.subf %281, %280 : vector<2x256xf32>
    %283 = math.exp %282 : vector<2x256xf32>
    %cst_118 = arith.constant 1.000000e+00 : f32
    %284 = vector.broadcast %cst_118 : f32 to vector<2x256xf32>
    %285 = arith.addf %284, %283 : vector<2x256xf32>
    %cst_119 = arith.constant 1.000000e+00 : f32
    %286 = vector.broadcast %cst_119 : f32 to vector<2x256xf32>
    %287 = arith.divf %286, %285 : vector<2x256xf32>
    %c0_120 = arith.constant 0 : index
    %c256_121 = arith.constant 256 : index
    %288 = vector.load %arg9[%c0_120, %c256_121] : memref<2x4096xf32, #tpu.memory_space<vmem>>, vector<2x256xf32>
    tpu.vector_store %arg9[%c0_120, %c256_121], %287 {strides = array<i32>} : memref<2x4096xf32, #tpu.memory_space<vmem>>, vector<2x256xf32>,
    %c2_122 = arith.constant 2 : index
    %289 = memref.load %arg6[%c2_122] : memref<16xf32, #tpu.memory_space<smem>>
    %c2_123 = arith.constant 2 : index
    %c0_124 = arith.constant 0 : index
    %290 = memref.load %arg5[%c2_123, %c0_124] : memref<16x2xf32, #tpu.memory_space<smem>>
    %291 = vector.broadcast %290 : f32 to vector<2x1xf32>
    %292 = arith.mulf %291, %148 : vector<2x1xf32>
    %293 = vector.broadcast %289 : f32 to vector<2x1xf32>
    %294 = arith.addf %293, %292 : vector<2x1xf32>
    %c2_125 = arith.constant 2 : index
    %c1_126 = arith.constant 1 : index
    %295 = memref.load %arg5[%c2_125, %c1_126] : memref<16x2xf32, #tpu.memory_space<smem>>
    %296 = vector.broadcast %295 : f32 to vector<2x1xf32>
    %297 = arith.mulf %296, %216 : vector<2x1xf32>
    %298 = arith.addf %294, %297 : vector<2x1xf32>
    %cst_127 = arith.constant 0.000000e+00 : f32
    %299 = vector.broadcast %cst_127 : f32 to vector<2x1xf32>
    %300 = arith.subf %299, %298 : vector<2x1xf32>
    %301 = math.exp %300 : vector<2x1xf32>
    %cst_128 = arith.constant 1.000000e+00 : f32
    %302 = vector.broadcast %cst_128 : f32 to vector<2x1xf32>
    %303 = arith.addf %302, %301 : vector<2x1xf32>
    %cst_129 = arith.constant 1.000000e+00 : f32
    %304 = vector.broadcast %cst_129 : f32 to vector<2x1xf32>
    %305 = arith.divf %304, %303 : vector<2x1xf32>
    %cst_130 = arith.constant 1.000000e+00 : f32
    %306 = vector.broadcast %cst_130 : f32 to vector<2x1xf32>
    %307 = arith.addf %306, %305 : vector<2x1xf32>
    %c2_131 = arith.constant 2 : index
    %308 = memref.load %arg7[%c2_131] : memref<16xf32, #tpu.memory_space<smem>>
    %309 = vector.broadcast %308 : f32 to vector<2x1xf32>
    %310 = arith.mulf %307, %309 : vector<2x1xf32>
    %c0_132 = arith.constant 0 : index
    %c512_133 = arith.constant 512 : index
    %311 = vector.load %arg1[%c0_132, %c512_133] : memref<2x4096xf32, #tpu.memory_space<vmem>>, vector<2x256xf32>
    %312 = vector.broadcast %310 : vector<2x1xf32> to vector<2x256xf32>
    %313 = arith.mulf %311, %312 : vector<2x256xf32>
    %c2_134 = arith.constant 2 : index
    %314 = memref.load %arg8[%c2_134] : memref<16xf32, #tpu.memory_space<smem>>
    %315 = vector.broadcast %314 : f32 to vector<2x256xf32>
    %316 = arith.addf %313, %315 : vector<2x256xf32>
    %cst_135 = arith.constant 0.000000e+00 : f32
    %317 = vector.broadcast %cst_135 : f32 to vector<2x256xf32>
    %318 = arith.subf %317, %316 : vector<2x256xf32>
    %319 = math.exp %318 : vector<2x256xf32>
    %cst_136 = arith.constant 1.000000e+00 : f32
    %320 = vector.broadcast %cst_136 : f32 to vector<2x256xf32>
    %321 = arith.addf %320, %319 : vector<2x256xf32>
    %cst_137 = arith.constant 1.000000e+00 : f32
    %322 = vector.broadcast %cst_137 : f32 to vector<2x256xf32>
    %323 = arith.divf %322, %321 : vector<2x256xf32>
    %c0_138 = arith.constant 0 : index
    %c512_139 = arith.constant 512 : index
    %324 = vector.load %arg9[%c0_138, %c512_139] : memref<2x4096xf32, #tpu.memory_space<vmem>>, vector<2x256xf32>
    tpu.vector_store %arg9[%c0_138, %c512_139], %323 {strides = array<i32>} : memref<2x4096xf32, #tpu.memory_space<vmem>>, vector<2x256xf32>,
    %c3_140 = arith.constant 3 : index
    %325 = memref.load %arg6[%c3_140] : memref<16xf32, #tpu.memory_space<smem>>
    %c3_141 = arith.constant 3 : index
    %c0_142 = arith.constant 0 : index
    %326 = memref.load %arg5[%c3_141, %c0_142] : memref<16x2xf32, #tpu.memory_space<smem>>
    %327 = vector.broadcast %326 : f32 to vector<2x1xf32>
    %328 = arith.mulf %327, %148 : vector<2x1xf32>
    %329 = vector.broadcast %325 : f32 to vector<2x1xf32>
    %330 = arith.addf %329, %328 : vector<2x1xf32>
    %c3_143 = arith.constant 3 : index
    %c1_144 = arith.constant 1 : index
    %331 = memref.load %arg5[%c3_143, %c1_144] : memref<16x2xf32, #tpu.memory_space<smem>>
    %332 = vector.broadcast %331 : f32 to vector<2x1xf32>
    %333 = arith.mulf %332, %216 : vector<2x1xf32>
    %334 = arith.addf %330, %333 : vector<2x1xf32>
    %cst_145 = arith.constant 0.000000e+00 : f32
    %335 = vector.broadcast %cst_145 : f32 to vector<2x1xf32>
    %336 = arith.subf %335, %334 : vector<2x1xf32>
    %337 = math.exp %336 : vector<2x1xf32>
    %cst_146 = arith.constant 1.000000e+00 : f32
    %338 = vector.broadcast %cst_146 : f32 to vector<2x1xf32>
    %339 = arith.addf %338, %337 : vector<2x1xf32>
    %cst_147 = arith.constant 1.000000e+00 : f32
    %340 = vector.broadcast %cst_147 : f32 to vector<2x1xf32>
    %341 = arith.divf %340, %339 : vector<2x1xf32>
    %cst_148 = arith.constant 1.000000e+00 : f32
    %342 = vector.broadcast %cst_148 : f32 to vector<2x1xf32>
    %343 = arith.addf %342, %341 : vector<2x1xf32>
    %c3_149 = arith.constant 3 : index
    %344 = memref.load %arg7[%c3_149] : memref<16xf32, #tpu.memory_space<smem>>
    %345 = vector.broadcast %344 : f32 to vector<2x1xf32>
    %346 = arith.mulf %343, %345 : vector<2x1xf32>
    %c0_150 = arith.constant 0 : index
    %c768_151 = arith.constant 768 : index
    %347 = vector.load %arg1[%c0_150, %c768_151] : memref<2x4096xf32, #tpu.memory_space<vmem>>, vector<2x256xf32>
    %348 = vector.broadcast %346 : vector<2x1xf32> to vector<2x256xf32>
    %349 = arith.mulf %347, %348 : vector<2x256xf32>
    %c3_152 = arith.constant 3 : index
    %350 = memref.load %arg8[%c3_152] : memref<16xf32, #tpu.memory_space<smem>>
    %351 = vector.broadcast %350 : f32 to vector<2x256xf32>
    %352 = arith.addf %349, %351 : vector<2x256xf32>
    %cst_153 = arith.constant 0.000000e+00 : f32
    %353 = vector.broadcast %cst_153 : f32 to vector<2x256xf32>
    %354 = arith.subf %353, %352 : vector<2x256xf32>
    %355 = math.exp %354 : vector<2x256xf32>
    %cst_154 = arith.constant 1.000000e+00 : f32
    %356 = vector.broadcast %cst_154 : f32 to vector<2x256xf32>
    %357 = arith.addf %356, %355 : vector<2x256xf32>
    %cst_155 = arith.constant 1.000000e+00 : f32
    %358 = vector.broadcast %cst_155 : f32 to vector<2x256xf32>
    %359 = arith.divf %358, %357 : vector<2x256xf32>
    %c0_156 = arith.constant 0 : index
    %c768_157 = arith.constant 768 : index
    %360 = vector.load %arg9[%c0_156, %c768_157] : memref<2x4096xf32, #tpu.memory_space<vmem>>, vector<2x256xf32>
    tpu.vector_store %arg9[%c0_156, %c768_157], %359 {strides = array<i32>} : memref<2x4096xf32, #tpu.memory_space<vmem>>, vector<2x256xf32>,
    %c4_158 = arith.constant 4 : index
    %361 = memref.load %arg6[%c4_158] : memref<16xf32, #tpu.memory_space<smem>>
    %c4_159 = arith.constant 4 : index
    %c0_160 = arith.constant 0 : index
    %362 = memref.load %arg5[%c4_159, %c0_160] : memref<16x2xf32, #tpu.memory_space<smem>>
    %363 = vector.broadcast %362 : f32 to vector<2x1xf32>
    %364 = arith.mulf %363, %148 : vector<2x1xf32>
    %365 = vector.broadcast %361 : f32 to vector<2x1xf32>
    %366 = arith.addf %365, %364 : vector<2x1xf32>
    %c4_161 = arith.constant 4 : index
    %c1_162 = arith.constant 1 : index
    %367 = memref.load %arg5[%c4_161, %c1_162] : memref<16x2xf32, #tpu.memory_space<smem>>
    %368 = vector.broadcast %367 : f32 to vector<2x1xf32>
    %369 = arith.mulf %368, %216 : vector<2x1xf32>
    %370 = arith.addf %366, %369 : vector<2x1xf32>
    %cst_163 = arith.constant 0.000000e+00 : f32
    %371 = vector.broadcast %cst_163 : f32 to vector<2x1xf32>
    %372 = arith.subf %371, %370 : vector<2x1xf32>
    %373 = math.exp %372 : vector<2x1xf32>
    %cst_164 = arith.constant 1.000000e+00 : f32
    %374 = vector.broadcast %cst_164 : f32 to vector<2x1xf32>
    %375 = arith.addf %374, %373 : vector<2x1xf32>
    %cst_165 = arith.constant 1.000000e+00 : f32
    %376 = vector.broadcast %cst_165 : f32 to vector<2x1xf32>
    %377 = arith.divf %376, %375 : vector<2x1xf32>
    %cst_166 = arith.constant 1.000000e+00 : f32
    %378 = vector.broadcast %cst_166 : f32 to vector<2x1xf32>
    %379 = arith.addf %378, %377 : vector<2x1xf32>
    %c4_167 = arith.constant 4 : index
    %380 = memref.load %arg7[%c4_167] : memref<16xf32, #tpu.memory_space<smem>>
    %381 = vector.broadcast %380 : f32 to vector<2x1xf32>
    %382 = arith.mulf %379, %381 : vector<2x1xf32>
    %c0_168 = arith.constant 0 : index
    %c1024_169 = arith.constant 1024 : index
    %383 = vector.load %arg1[%c0_168, %c1024_169] : memref<2x4096xf32, #tpu.memory_space<vmem>>, vector<2x256xf32>
    %384 = vector.broadcast %382 : vector<2x1xf32> to vector<2x256xf32>
    %385 = arith.mulf %383, %384 : vector<2x256xf32>
    %c4_170 = arith.constant 4 : index
    %386 = memref.load %arg8[%c4_170] : memref<16xf32, #tpu.memory_space<smem>>
    %387 = vector.broadcast %386 : f32 to vector<2x256xf32>
    %388 = arith.addf %385, %387 : vector<2x256xf32>
    %cst_171 = arith.constant 0.000000e+00 : f32
    %389 = vector.broadcast %cst_171 : f32 to vector<2x256xf32>
    %390 = arith.subf %389, %388 : vector<2x256xf32>
    %391 = math.exp %390 : vector<2x256xf32>
    %cst_172 = arith.constant 1.000000e+00 : f32
    %392 = vector.broadcast %cst_172 : f32 to vector<2x256xf32>
    %393 = arith.addf %392, %391 : vector<2x256xf32>
    %cst_173 = arith.constant 1.000000e+00 : f32
    %394 = vector.broadcast %cst_173 : f32 to vector<2x256xf32>
    %395 = arith.divf %394, %393 : vector<2x256xf32>
    %c0_174 = arith.constant 0 : index
    %c1024_175 = arith.constant 1024 : index
    %396 = vector.load %arg9[%c0_174, %c1024_175] : memref<2x4096xf32, #tpu.memory_space<vmem>>, vector<2x256xf32>
    tpu.vector_store %arg9[%c0_174, %c1024_175], %395 {strides = array<i32>} : memref<2x4096xf32, #tpu.memory_space<vmem>>, vector<2x256xf32>,
    %c5_176 = arith.constant 5 : index
    %397 = memref.load %arg6[%c5_176] : memref<16xf32, #tpu.memory_space<smem>>
    %c5_177 = arith.constant 5 : index
    %c0_178 = arith.constant 0 : index
    %398 = memref.load %arg5[%c5_177, %c0_178] : memref<16x2xf32, #tpu.memory_space<smem>>
    %399 = vector.broadcast %398 : f32 to vector<2x1xf32>
    %400 = arith.mulf %399, %148 : vector<2x1xf32>
    %401 = vector.broadcast %397 : f32 to vector<2x1xf32>
    %402 = arith.addf %401, %400 : vector<2x1xf32>
    %c5_179 = arith.constant 5 : index
    %c1_180 = arith.constant 1 : index
    %403 = memref.load %arg5[%c5_179, %c1_180] : memref<16x2xf32, #tpu.memory_space<smem>>
    %404 = vector.broadcast %403 : f32 to vector<2x1xf32>
    %405 = arith.mulf %404, %216 : vector<2x1xf32>
    %406 = arith.addf %402, %405 : vector<2x1xf32>
    %cst_181 = arith.constant 0.000000e+00 : f32
    %407 = vector.broadcast %cst_181 : f32 to vector<2x1xf32>
    %408 = arith.subf %407, %406 : vector<2x1xf32>
    %409 = math.exp %408 : vector<2x1xf32>
    %cst_182 = arith.constant 1.000000e+00 : f32
    %410 = vector.broadcast %cst_182 : f32 to vector<2x1xf32>
    %411 = arith.addf %410, %409 : vector<2x1xf32>
    %cst_183 = arith.constant 1.000000e+00 : f32
    %412 = vector.broadcast %cst_183 : f32 to vector<2x1xf32>
    %413 = arith.divf %412, %411 : vector<2x1xf32>
    %cst_184 = arith.constant 1.000000e+00 : f32
    %414 = vector.broadcast %cst_184 : f32 to vector<2x1xf32>
    %415 = arith.addf %414, %413 : vector<2x1xf32>
    %c5_185 = arith.constant 5 : index
    %416 = memref.load %arg7[%c5_185] : memref<16xf32, #tpu.memory_space<smem>>
    %417 = vector.broadcast %416 : f32 to vector<2x1xf32>
    %418 = arith.mulf %415, %417 : vector<2x1xf32>
    %c0_186 = arith.constant 0 : index
    %c1280_187 = arith.constant 1280 : index
    %419 = vector.load %arg1[%c0_186, %c1280_187] : memref<2x4096xf32, #tpu.memory_space<vmem>>, vector<2x256xf32>
    %420 = vector.broadcast %418 : vector<2x1xf32> to vector<2x256xf32>
    %421 = arith.mulf %419, %420 : vector<2x256xf32>
    %c5_188 = arith.constant 5 : index
    %422 = memref.load %arg8[%c5_188] : memref<16xf32, #tpu.memory_space<smem>>
    %423 = vector.broadcast %422 : f32 to vector<2x256xf32>
    %424 = arith.addf %421, %423 : vector<2x256xf32>
    %cst_189 = arith.constant 0.000000e+00 : f32
    %425 = vector.broadcast %cst_189 : f32 to vector<2x256xf32>
    %426 = arith.subf %425, %424 : vector<2x256xf32>
    %427 = math.exp %426 : vector<2x256xf32>
    %cst_190 = arith.constant 1.000000e+00 : f32
    %428 = vector.broadcast %cst_190 : f32 to vector<2x256xf32>
    %429 = arith.addf %428, %427 : vector<2x256xf32>
    %cst_191 = arith.constant 1.000000e+00 : f32
    %430 = vector.broadcast %cst_191 : f32 to vector<2x256xf32>
    %431 = arith.divf %430, %429 : vector<2x256xf32>
    %c0_192 = arith.constant 0 : index
    %c1280_193 = arith.constant 1280 : index
    %432 = vector.load %arg9[%c0_192, %c1280_193] : memref<2x4096xf32, #tpu.memory_space<vmem>>, vector<2x256xf32>
    tpu.vector_store %arg9[%c0_192, %c1280_193], %431 {strides = array<i32>} : memref<2x4096xf32, #tpu.memory_space<vmem>>, vector<2x256xf32>,
    %c6_194 = arith.constant 6 : index
    %433 = memref.load %arg6[%c6_194] : memref<16xf32, #tpu.memory_space<smem>>
    %c6_195 = arith.constant 6 : index
    %c0_196 = arith.constant 0 : index
    %434 = memref.load %arg5[%c6_195, %c0_196] : memref<16x2xf32, #tpu.memory_space<smem>>
    %435 = vector.broadcast %434 : f32 to vector<2x1xf32>
    %436 = arith.mulf %435, %148 : vector<2x1xf32>
    %437 = vector.broadcast %433 : f32 to vector<2x1xf32>
    %438 = arith.addf %437, %436 : vector<2x1xf32>
    %c6_197 = arith.constant 6 : index
    %c1_198 = arith.constant 1 : index
    %439 = memref.load %arg5[%c6_197, %c1_198] : memref<16x2xf32, #tpu.memory_space<smem>>
    %440 = vector.broadcast %439 : f32 to vector<2x1xf32>
    %441 = arith.mulf %440, %216 : vector<2x1xf32>
    %442 = arith.addf %438, %441 : vector<2x1xf32>
    %cst_199 = arith.constant 0.000000e+00 : f32
    %443 = vector.broadcast %cst_199 : f32 to vector<2x1xf32>
    %444 = arith.subf %443, %442 : vector<2x1xf32>
    %445 = math.exp %444 : vector<2x1xf32>
    %cst_200 = arith.constant 1.000000e+00 : f32
    %446 = vector.broadcast %cst_200 : f32 to vector<2x1xf32>
    %447 = arith.addf %446, %445 : vector<2x1xf32>
    %cst_201 = arith.constant 1.000000e+00 : f32
    %448 = vector.broadcast %cst_201 : f32 to vector<2x1xf32>
    %449 = arith.divf %448, %447 : vector<2x1xf32>
    %cst_202 = arith.constant 1.000000e+00 : f32
    %450 = vector.broadcast %cst_202 : f32 to vector<2x1xf32>
    %451 = arith.addf %450, %449 : vector<2x1xf32>
    %c6_203 = arith.constant 6 : index
    %452 = memref.load %arg7[%c6_203] : memref<16xf32, #tpu.memory_space<smem>>
    %453 = vector.broadcast %452 : f32 to vector<2x1xf32>
    %454 = arith.mulf %451, %453 : vector<2x1xf32>
    %c0_204 = arith.constant 0 : index
    %c1536_205 = arith.constant 1536 : index
    %455 = vector.load %arg1[%c0_204, %c1536_205] : memref<2x4096xf32, #tpu.memory_space<vmem>>, vector<2x256xf32>
    %456 = vector.broadcast %454 : vector<2x1xf32> to vector<2x256xf32>
    %457 = arith.mulf %455, %456 : vector<2x256xf32>
    %c6_206 = arith.constant 6 : index
    %458 = memref.load %arg8[%c6_206] : memref<16xf32, #tpu.memory_space<smem>>
    %459 = vector.broadcast %458 : f32 to vector<2x256xf32>
    %460 = arith.addf %457, %459 : vector<2x256xf32>
    %cst_207 = arith.constant 0.000000e+00 : f32
    %461 = vector.broadcast %cst_207 : f32 to vector<2x256xf32>
    %462 = arith.subf %461, %460 : vector<2x256xf32>
    %463 = math.exp %462 : vector<2x256xf32>
    %cst_208 = arith.constant 1.000000e+00 : f32
    %464 = vector.broadcast %cst_208 : f32 to vector<2x256xf32>
    %465 = arith.addf %464, %463 : vector<2x256xf32>
    %cst_209 = arith.constant 1.000000e+00 : f32
    %466 = vector.broadcast %cst_209 : f32 to vector<2x256xf32>
    %467 = arith.divf %466, %465 : vector<2x256xf32>
    %c0_210 = arith.constant 0 : index
    %c1536_211 = arith.constant 1536 : index
    %468 = vector.load %arg9[%c0_210, %c1536_211] : memref<2x4096xf32, #tpu.memory_space<vmem>>, vector<2x256xf32>
    tpu.vector_store %arg9[%c0_210, %c1536_211], %467 {strides = array<i32>} : memref<2x4096xf32, #tpu.memory_space<vmem>>, vector<2x256xf32>,
    %c7_212 = arith.constant 7 : index
    %469 = memref.load %arg6[%c7_212] : memref<16xf32, #tpu.memory_space<smem>>
    %c7_213 = arith.constant 7 : index
    %c0_214 = arith.constant 0 : index
    %470 = memref.load %arg5[%c7_213, %c0_214] : memref<16x2xf32, #tpu.memory_space<smem>>
    %471 = vector.broadcast %470 : f32 to vector<2x1xf32>
    %472 = arith.mulf %471, %148 : vector<2x1xf32>
    %473 = vector.broadcast %469 : f32 to vector<2x1xf32>
    %474 = arith.addf %473, %472 : vector<2x1xf32>
    %c7_215 = arith.constant 7 : index
    %c1_216 = arith.constant 1 : index
    %475 = memref.load %arg5[%c7_215, %c1_216] : memref<16x2xf32, #tpu.memory_space<smem>>
    %476 = vector.broadcast %475 : f32 to vector<2x1xf32>
    %477 = arith.mulf %476, %216 : vector<2x1xf32>
    %478 = arith.addf %474, %477 : vector<2x1xf32>
    %cst_217 = arith.constant 0.000000e+00 : f32
    %479 = vector.broadcast %cst_217 : f32 to vector<2x1xf32>
    %480 = arith.subf %479, %478 : vector<2x1xf32>
    %481 = math.exp %480 : vector<2x1xf32>
    %cst_218 = arith.constant 1.000000e+00 : f32
    %482 = vector.broadcast %cst_218 : f32 to vector<2x1xf32>
    %483 = arith.addf %482, %481 : vector<2x1xf32>
    %cst_219 = arith.constant 1.000000e+00 : f32
    %484 = vector.broadcast %cst_219 : f32 to vector<2x1xf32>
    %485 = arith.divf %484, %483 : vector<2x1xf32>
    %cst_220 = arith.constant 1.000000e+00 : f32
    %486 = vector.broadcast %cst_220 : f32 to vector<2x1xf32>
    %487 = arith.addf %486, %485 : vector<2x1xf32>
    %c7_221 = arith.constant 7 : index
    %488 = memref.load %arg7[%c7_221] : memref<16xf32, #tpu.memory_space<smem>>
    %489 = vector.broadcast %488 : f32 to vector<2x1xf32>
    %490 = arith.mulf %487, %489 : vector<2x1xf32>
    %c0_222 = arith.constant 0 : index
    %c1792_223 = arith.constant 1792 : index
    %491 = vector.load %arg1[%c0_222, %c1792_223] : memref<2x4096xf32, #tpu.memory_space<vmem>>, vector<2x256xf32>
    %492 = vector.broadcast %490 : vector<2x1xf32> to vector<2x256xf32>
    %493 = arith.mulf %491, %492 : vector<2x256xf32>
    %c7_224 = arith.constant 7 : index
    %494 = memref.load %arg8[%c7_224] : memref<16xf32, #tpu.memory_space<smem>>
    %495 = vector.broadcast %494 : f32 to vector<2x256xf32>
    %496 = arith.addf %493, %495 : vector<2x256xf32>
    %cst_225 = arith.constant 0.000000e+00 : f32
    %497 = vector.broadcast %cst_225 : f32 to vector<2x256xf32>
    %498 = arith.subf %497, %496 : vector<2x256xf32>
    %499 = math.exp %498 : vector<2x256xf32>
    %cst_226 = arith.constant 1.000000e+00 : f32
    %500 = vector.broadcast %cst_226 : f32 to vector<2x256xf32>
    %501 = arith.addf %500, %499 : vector<2x256xf32>
    %cst_227 = arith.constant 1.000000e+00 : f32
    %502 = vector.broadcast %cst_227 : f32 to vector<2x256xf32>
    %503 = arith.divf %502, %501 : vector<2x256xf32>
    %c0_228 = arith.constant 0 : index
    %c1792_229 = arith.constant 1792 : index
    %504 = vector.load %arg9[%c0_228, %c1792_229] : memref<2x4096xf32, #tpu.memory_space<vmem>>, vector<2x256xf32>
    tpu.vector_store %arg9[%c0_228, %c1792_229], %503 {strides = array<i32>} : memref<2x4096xf32, #tpu.memory_space<vmem>>, vector<2x256xf32>,
    %c8_230 = arith.constant 8 : index
    %505 = memref.load %arg6[%c8_230] : memref<16xf32, #tpu.memory_space<smem>>
    %c8_231 = arith.constant 8 : index
    %c0_232 = arith.constant 0 : index
    %506 = memref.load %arg5[%c8_231, %c0_232] : memref<16x2xf32, #tpu.memory_space<smem>>
    %507 = vector.broadcast %506 : f32 to vector<2x1xf32>
    %508 = arith.mulf %507, %148 : vector<2x1xf32>
    %509 = vector.broadcast %505 : f32 to vector<2x1xf32>
    %510 = arith.addf %509, %508 : vector<2x1xf32>
    %c8_233 = arith.constant 8 : index
    %c1_234 = arith.constant 1 : index
    %511 = memref.load %arg5[%c8_233, %c1_234] : memref<16x2xf32, #tpu.memory_space<smem>>
    %512 = vector.broadcast %511 : f32 to vector<2x1xf32>
    %513 = arith.mulf %512, %216 : vector<2x1xf32>
    %514 = arith.addf %510, %513 : vector<2x1xf32>
    %cst_235 = arith.constant 0.000000e+00 : f32
    %515 = vector.broadcast %cst_235 : f32 to vector<2x1xf32>
    %516 = arith.subf %515, %514 : vector<2x1xf32>
    %517 = math.exp %516 : vector<2x1xf32>
    %cst_236 = arith.constant 1.000000e+00 : f32
    %518 = vector.broadcast %cst_236 : f32 to vector<2x1xf32>
    %519 = arith.addf %518, %517 : vector<2x1xf32>
    %cst_237 = arith.constant 1.000000e+00 : f32
    %520 = vector.broadcast %cst_237 : f32 to vector<2x1xf32>
    %521 = arith.divf %520, %519 : vector<2x1xf32>
    %cst_238 = arith.constant 1.000000e+00 : f32
    %522 = vector.broadcast %cst_238 : f32 to vector<2x1xf32>
    %523 = arith.addf %522, %521 : vector<2x1xf32>
    %c8_239 = arith.constant 8 : index
    %524 = memref.load %arg7[%c8_239] : memref<16xf32, #tpu.memory_space<smem>>
    %525 = vector.broadcast %524 : f32 to vector<2x1xf32>
    %526 = arith.mulf %523, %525 : vector<2x1xf32>
    %c0_240 = arith.constant 0 : index
    %c2048_241 = arith.constant 2048 : index
    %527 = vector.load %arg1[%c0_240, %c2048_241] : memref<2x4096xf32, #tpu.memory_space<vmem>>, vector<2x256xf32>
    %528 = vector.broadcast %526 : vector<2x1xf32> to vector<2x256xf32>
    %529 = arith.mulf %527, %528 : vector<2x256xf32>
    %c8_242 = arith.constant 8 : index
    %530 = memref.load %arg8[%c8_242] : memref<16xf32, #tpu.memory_space<smem>>
    %531 = vector.broadcast %530 : f32 to vector<2x256xf32>
    %532 = arith.addf %529, %531 : vector<2x256xf32>
    %cst_243 = arith.constant 0.000000e+00 : f32
    %533 = vector.broadcast %cst_243 : f32 to vector<2x256xf32>
    %534 = arith.subf %533, %532 : vector<2x256xf32>
    %535 = math.exp %534 : vector<2x256xf32>
    %cst_244 = arith.constant 1.000000e+00 : f32
    %536 = vector.broadcast %cst_244 : f32 to vector<2x256xf32>
    %537 = arith.addf %536, %535 : vector<2x256xf32>
    %cst_245 = arith.constant 1.000000e+00 : f32
    %538 = vector.broadcast %cst_245 : f32 to vector<2x256xf32>
    %539 = arith.divf %538, %537 : vector<2x256xf32>
    %c0_246 = arith.constant 0 : index
    %c2048_247 = arith.constant 2048 : index
    %540 = vector.load %arg9[%c0_246, %c2048_247] : memref<2x4096xf32, #tpu.memory_space<vmem>>, vector<2x256xf32>
    tpu.vector_store %arg9[%c0_246, %c2048_247], %539 {strides = array<i32>} : memref<2x4096xf32, #tpu.memory_space<vmem>>, vector<2x256xf32>,
    %c9_248 = arith.constant 9 : index
    %541 = memref.load %arg6[%c9_248] : memref<16xf32, #tpu.memory_space<smem>>
    %c9_249 = arith.constant 9 : index
    %c0_250 = arith.constant 0 : index
    %542 = memref.load %arg5[%c9_249, %c0_250] : memref<16x2xf32, #tpu.memory_space<smem>>
    %543 = vector.broadcast %542 : f32 to vector<2x1xf32>
    %544 = arith.mulf %543, %148 : vector<2x1xf32>
    %545 = vector.broadcast %541 : f32 to vector<2x1xf32>
    %546 = arith.addf %545, %544 : vector<2x1xf32>
    %c9_251 = arith.constant 9 : index
    %c1_252 = arith.constant 1 : index
    %547 = memref.load %arg5[%c9_251, %c1_252] : memref<16x2xf32, #tpu.memory_space<smem>>
    %548 = vector.broadcast %547 : f32 to vector<2x1xf32>
    %549 = arith.mulf %548, %216 : vector<2x1xf32>
    %550 = arith.addf %546, %549 : vector<2x1xf32>
    %cst_253 = arith.constant 0.000000e+00 : f32
    %551 = vector.broadcast %cst_253 : f32 to vector<2x1xf32>
    %552 = arith.subf %551, %550 : vector<2x1xf32>
    %553 = math.exp %552 : vector<2x1xf32>
    %cst_254 = arith.constant 1.000000e+00 : f32
    %554 = vector.broadcast %cst_254 : f32 to vector<2x1xf32>
    %555 = arith.addf %554, %553 : vector<2x1xf32>
    %cst_255 = arith.constant 1.000000e+00 : f32
    %556 = vector.broadcast %cst_255 : f32 to vector<2x1xf32>
    %557 = arith.divf %556, %555 : vector<2x1xf32>
    %cst_256 = arith.constant 1.000000e+00 : f32
    %558 = vector.broadcast %cst_256 : f32 to vector<2x1xf32>
    %559 = arith.addf %558, %557 : vector<2x1xf32>
    %c9_257 = arith.constant 9 : index
    %560 = memref.load %arg7[%c9_257] : memref<16xf32, #tpu.memory_space<smem>>
    %561 = vector.broadcast %560 : f32 to vector<2x1xf32>
    %562 = arith.mulf %559, %561 : vector<2x1xf32>
    %c0_258 = arith.constant 0 : index
    %c2304_259 = arith.constant 2304 : index
    %563 = vector.load %arg1[%c0_258, %c2304_259] : memref<2x4096xf32, #tpu.memory_space<vmem>>, vector<2x256xf32>
    %564 = vector.broadcast %562 : vector<2x1xf32> to vector<2x256xf32>
    %565 = arith.mulf %563, %564 : vector<2x256xf32>
    %c9_260 = arith.constant 9 : index
    %566 = memref.load %arg8[%c9_260] : memref<16xf32, #tpu.memory_space<smem>>
    %567 = vector.broadcast %566 : f32 to vector<2x256xf32>
    %568 = arith.addf %565, %567 : vector<2x256xf32>
    %cst_261 = arith.constant 0.000000e+00 : f32
    %569 = vector.broadcast %cst_261 : f32 to vector<2x256xf32>
    %570 = arith.subf %569, %568 : vector<2x256xf32>
    %571 = math.exp %570 : vector<2x256xf32>
    %cst_262 = arith.constant 1.000000e+00 : f32
    %572 = vector.broadcast %cst_262 : f32 to vector<2x256xf32>
    %573 = arith.addf %572, %571 : vector<2x256xf32>
    %cst_263 = arith.constant 1.000000e+00 : f32
    %574 = vector.broadcast %cst_263 : f32 to vector<2x256xf32>
    %575 = arith.divf %574, %573 : vector<2x256xf32>
    %c0_264 = arith.constant 0 : index
    %c2304_265 = arith.constant 2304 : index
    %576 = vector.load %arg9[%c0_264, %c2304_265] : memref<2x4096xf32, #tpu.memory_space<vmem>>, vector<2x256xf32>
    tpu.vector_store %arg9[%c0_264, %c2304_265], %575 {strides = array<i32>} : memref<2x4096xf32, #tpu.memory_space<vmem>>, vector<2x256xf32>,
    %c10_266 = arith.constant 10 : index
    %577 = memref.load %arg6[%c10_266] : memref<16xf32, #tpu.memory_space<smem>>
    %c10_267 = arith.constant 10 : index
    %c0_268 = arith.constant 0 : index
    %578 = memref.load %arg5[%c10_267, %c0_268] : memref<16x2xf32, #tpu.memory_space<smem>>
    %579 = vector.broadcast %578 : f32 to vector<2x1xf32>
    %580 = arith.mulf %579, %148 : vector<2x1xf32>
    %581 = vector.broadcast %577 : f32 to vector<2x1xf32>
    %582 = arith.addf %581, %580 : vector<2x1xf32>
    %c10_269 = arith.constant 10 : index
    %c1_270 = arith.constant 1 : index
    %583 = memref.load %arg5[%c10_269, %c1_270] : memref<16x2xf32, #tpu.memory_space<smem>>
    %584 = vector.broadcast %583 : f32 to vector<2x1xf32>
    %585 = arith.mulf %584, %216 : vector<2x1xf32>
    %586 = arith.addf %582, %585 : vector<2x1xf32>
    %cst_271 = arith.constant 0.000000e+00 : f32
    %587 = vector.broadcast %cst_271 : f32 to vector<2x1xf32>
    %588 = arith.subf %587, %586 : vector<2x1xf32>
    %589 = math.exp %588 : vector<2x1xf32>
    %cst_272 = arith.constant 1.000000e+00 : f32
    %590 = vector.broadcast %cst_272 : f32 to vector<2x1xf32>
    %591 = arith.addf %590, %589 : vector<2x1xf32>
    %cst_273 = arith.constant 1.000000e+00 : f32
    %592 = vector.broadcast %cst_273 : f32 to vector<2x1xf32>
    %593 = arith.divf %592, %591 : vector<2x1xf32>
    %cst_274 = arith.constant 1.000000e+00 : f32
    %594 = vector.broadcast %cst_274 : f32 to vector<2x1xf32>
    %595 = arith.addf %594, %593 : vector<2x1xf32>
    %c10_275 = arith.constant 10 : index
    %596 = memref.load %arg7[%c10_275] : memref<16xf32, #tpu.memory_space<smem>>
    %597 = vector.broadcast %596 : f32 to vector<2x1xf32>
    %598 = arith.mulf %595, %597 : vector<2x1xf32>
    %c0_276 = arith.constant 0 : index
    %c2560_277 = arith.constant 2560 : index
    %599 = vector.load %arg1[%c0_276, %c2560_277] : memref<2x4096xf32, #tpu.memory_space<vmem>>, vector<2x256xf32>
    %600 = vector.broadcast %598 : vector<2x1xf32> to vector<2x256xf32>
    %601 = arith.mulf %599, %600 : vector<2x256xf32>
    %c10_278 = arith.constant 10 : index
    %602 = memref.load %arg8[%c10_278] : memref<16xf32, #tpu.memory_space<smem>>
    %603 = vector.broadcast %602 : f32 to vector<2x256xf32>
    %604 = arith.addf %601, %603 : vector<2x256xf32>
    %cst_279 = arith.constant 0.000000e+00 : f32
    %605 = vector.broadcast %cst_279 : f32 to vector<2x256xf32>
    %606 = arith.subf %605, %604 : vector<2x256xf32>
    %607 = math.exp %606 : vector<2x256xf32>
    %cst_280 = arith.constant 1.000000e+00 : f32
    %608 = vector.broadcast %cst_280 : f32 to vector<2x256xf32>
    %609 = arith.addf %608, %607 : vector<2x256xf32>
    %cst_281 = arith.constant 1.000000e+00 : f32
    %610 = vector.broadcast %cst_281 : f32 to vector<2x256xf32>
    %611 = arith.divf %610, %609 : vector<2x256xf32>
    %c0_282 = arith.constant 0 : index
    %c2560_283 = arith.constant 2560 : index
    %612 = vector.load %arg9[%c0_282, %c2560_283] : memref<2x4096xf32, #tpu.memory_space<vmem>>, vector<2x256xf32>
    tpu.vector_store %arg9[%c0_282, %c2560_283], %611 {strides = array<i32>} : memref<2x4096xf32, #tpu.memory_space<vmem>>, vector<2x256xf32>,
    %c11_284 = arith.constant 11 : index
    %613 = memref.load %arg6[%c11_284] : memref<16xf32, #tpu.memory_space<smem>>
    %c11_285 = arith.constant 11 : index
    %c0_286 = arith.constant 0 : index
    %614 = memref.load %arg5[%c11_285, %c0_286] : memref<16x2xf32, #tpu.memory_space<smem>>
    %615 = vector.broadcast %614 : f32 to vector<2x1xf32>
    %616 = arith.mulf %615, %148 : vector<2x1xf32>
    %617 = vector.broadcast %613 : f32 to vector<2x1xf32>
    %618 = arith.addf %617, %616 : vector<2x1xf32>
    %c11_287 = arith.constant 11 : index
    %c1_288 = arith.constant 1 : index
    %619 = memref.load %arg5[%c11_287, %c1_288] : memref<16x2xf32, #tpu.memory_space<smem>>
    %620 = vector.broadcast %619 : f32 to vector<2x1xf32>
    %621 = arith.mulf %620, %216 : vector<2x1xf32>
    %622 = arith.addf %618, %621 : vector<2x1xf32>
    %cst_289 = arith.constant 0.000000e+00 : f32
    %623 = vector.broadcast %cst_289 : f32 to vector<2x1xf32>
    %624 = arith.subf %623, %622 : vector<2x1xf32>
    %625 = math.exp %624 : vector<2x1xf32>
    %cst_290 = arith.constant 1.000000e+00 : f32
    %626 = vector.broadcast %cst_290 : f32 to vector<2x1xf32>
    %627 = arith.addf %626, %625 : vector<2x1xf32>
    %cst_291 = arith.constant 1.000000e+00 : f32
    %628 = vector.broadcast %cst_291 : f32 to vector<2x1xf32>
    %629 = arith.divf %628, %627 : vector<2x1xf32>
    %cst_292 = arith.constant 1.000000e+00 : f32
    %630 = vector.broadcast %cst_292 : f32 to vector<2x1xf32>
    %631 = arith.addf %630, %629 : vector<2x1xf32>
    %c11_293 = arith.constant 11 : index
    %632 = memref.load %arg7[%c11_293] : memref<16xf32, #tpu.memory_space<smem>>
    %633 = vector.broadcast %632 : f32 to vector<2x1xf32>
    %634 = arith.mulf %631, %633 : vector<2x1xf32>
    %c0_294 = arith.constant 0 : index
    %c2816_295 = arith.constant 2816 : index
    %635 = vector.load %arg1[%c0_294, %c2816_295] : memref<2x4096xf32, #tpu.memory_space<vmem>>, vector<2x256xf32>
    %636 = vector.broadcast %634 : vector<2x1xf32> to vector<2x256xf32>
    %637 = arith.mulf %635, %636 : vector<2x256xf32>
    %c11_296 = arith.constant 11 : index
    %638 = memref.load %arg8[%c11_296] : memref<16xf32, #tpu.memory_space<smem>>
    %639 = vector.broadcast %638 : f32 to vector<2x256xf32>
    %640 = arith.addf %637, %639 : vector<2x256xf32>
    %cst_297 = arith.constant 0.000000e+00 : f32
    %641 = vector.broadcast %cst_297 : f32 to vector<2x256xf32>
    %642 = arith.subf %641, %640 : vector<2x256xf32>
    %643 = math.exp %642 : vector<2x256xf32>
    %cst_298 = arith.constant 1.000000e+00 : f32
    %644 = vector.broadcast %cst_298 : f32 to vector<2x256xf32>
    %645 = arith.addf %644, %643 : vector<2x256xf32>
    %cst_299 = arith.constant 1.000000e+00 : f32
    %646 = vector.broadcast %cst_299 : f32 to vector<2x256xf32>
    %647 = arith.divf %646, %645 : vector<2x256xf32>
    %c0_300 = arith.constant 0 : index
    %c2816_301 = arith.constant 2816 : index
    %648 = vector.load %arg9[%c0_300, %c2816_301] : memref<2x4096xf32, #tpu.memory_space<vmem>>, vector<2x256xf32>
    tpu.vector_store %arg9[%c0_300, %c2816_301], %647 {strides = array<i32>} : memref<2x4096xf32, #tpu.memory_space<vmem>>, vector<2x256xf32>,
    %c12_302 = arith.constant 12 : index
    %649 = memref.load %arg6[%c12_302] : memref<16xf32, #tpu.memory_space<smem>>
    %c12_303 = arith.constant 12 : index
    %c0_304 = arith.constant 0 : index
    %650 = memref.load %arg5[%c12_303, %c0_304] : memref<16x2xf32, #tpu.memory_space<smem>>
    %651 = vector.broadcast %650 : f32 to vector<2x1xf32>
    %652 = arith.mulf %651, %148 : vector<2x1xf32>
    %653 = vector.broadcast %649 : f32 to vector<2x1xf32>
    %654 = arith.addf %653, %652 : vector<2x1xf32>
    %c12_305 = arith.constant 12 : index
    %c1_306 = arith.constant 1 : index
    %655 = memref.load %arg5[%c12_305, %c1_306] : memref<16x2xf32, #tpu.memory_space<smem>>
    %656 = vector.broadcast %655 : f32 to vector<2x1xf32>
    %657 = arith.mulf %656, %216 : vector<2x1xf32>
    %658 = arith.addf %654, %657 : vector<2x1xf32>
    %cst_307 = arith.constant 0.000000e+00 : f32
    %659 = vector.broadcast %cst_307 : f32 to vector<2x1xf32>
    %660 = arith.subf %659, %658 : vector<2x1xf32>
    %661 = math.exp %660 : vector<2x1xf32>
    %cst_308 = arith.constant 1.000000e+00 : f32
    %662 = vector.broadcast %cst_308 : f32 to vector<2x1xf32>
    %663 = arith.addf %662, %661 : vector<2x1xf32>
    %cst_309 = arith.constant 1.000000e+00 : f32
    %664 = vector.broadcast %cst_309 : f32 to vector<2x1xf32>
    %665 = arith.divf %664, %663 : vector<2x1xf32>
    %cst_310 = arith.constant 1.000000e+00 : f32
    %666 = vector.broadcast %cst_310 : f32 to vector<2x1xf32>
    %667 = arith.addf %666, %665 : vector<2x1xf32>
    %c12_311 = arith.constant 12 : index
    %668 = memref.load %arg7[%c12_311] : memref<16xf32, #tpu.memory_space<smem>>
    %669 = vector.broadcast %668 : f32 to vector<2x1xf32>
    %670 = arith.mulf %667, %669 : vector<2x1xf32>
    %c0_312 = arith.constant 0 : index
    %c3072_313 = arith.constant 3072 : index
    %671 = vector.load %arg1[%c0_312, %c3072_313] : memref<2x4096xf32, #tpu.memory_space<vmem>>, vector<2x256xf32>
    %672 = vector.broadcast %670 : vector<2x1xf32> to vector<2x256xf32>
    %673 = arith.mulf %671, %672 : vector<2x256xf32>
    %c12_314 = arith.constant 12 : index
    %674 = memref.load %arg8[%c12_314] : memref<16xf32, #tpu.memory_space<smem>>
    %675 = vector.broadcast %674 : f32 to vector<2x256xf32>
    %676 = arith.addf %673, %675 : vector<2x256xf32>
    %cst_315 = arith.constant 0.000000e+00 : f32
    %677 = vector.broadcast %cst_315 : f32 to vector<2x256xf32>
    %678 = arith.subf %677, %676 : vector<2x256xf32>
    %679 = math.exp %678 : vector<2x256xf32>
    %cst_316 = arith.constant 1.000000e+00 : f32
    %680 = vector.broadcast %cst_316 : f32 to vector<2x256xf32>
    %681 = arith.addf %680, %679 : vector<2x256xf32>
    %cst_317 = arith.constant 1.000000e+00 : f32
    %682 = vector.broadcast %cst_317 : f32 to vector<2x256xf32>
    %683 = arith.divf %682, %681 : vector<2x256xf32>
    %c0_318 = arith.constant 0 : index
    %c3072_319 = arith.constant 3072 : index
    %684 = vector.load %arg9[%c0_318, %c3072_319] : memref<2x4096xf32, #tpu.memory_space<vmem>>, vector<2x256xf32>
    tpu.vector_store %arg9[%c0_318, %c3072_319], %683 {strides = array<i32>} : memref<2x4096xf32, #tpu.memory_space<vmem>>, vector<2x256xf32>,
    %c13_320 = arith.constant 13 : index
    %685 = memref.load %arg6[%c13_320] : memref<16xf32, #tpu.memory_space<smem>>
    %c13_321 = arith.constant 13 : index
    %c0_322 = arith.constant 0 : index
    %686 = memref.load %arg5[%c13_321, %c0_322] : memref<16x2xf32, #tpu.memory_space<smem>>
    %687 = vector.broadcast %686 : f32 to vector<2x1xf32>
    %688 = arith.mulf %687, %148 : vector<2x1xf32>
    %689 = vector.broadcast %685 : f32 to vector<2x1xf32>
    %690 = arith.addf %689, %688 : vector<2x1xf32>
    %c13_323 = arith.constant 13 : index
    %c1_324 = arith.constant 1 : index
    %691 = memref.load %arg5[%c13_323, %c1_324] : memref<16x2xf32, #tpu.memory_space<smem>>
    %692 = vector.broadcast %691 : f32 to vector<2x1xf32>
    %693 = arith.mulf %692, %216 : vector<2x1xf32>
    %694 = arith.addf %690, %693 : vector<2x1xf32>
    %cst_325 = arith.constant 0.000000e+00 : f32
    %695 = vector.broadcast %cst_325 : f32 to vector<2x1xf32>
    %696 = arith.subf %695, %694 : vector<2x1xf32>
    %697 = math.exp %696 : vector<2x1xf32>
    %cst_326 = arith.constant 1.000000e+00 : f32
    %698 = vector.broadcast %cst_326 : f32 to vector<2x1xf32>
    %699 = arith.addf %698, %697 : vector<2x1xf32>
    %cst_327 = arith.constant 1.000000e+00 : f32
    %700 = vector.broadcast %cst_327 : f32 to vector<2x1xf32>
    %701 = arith.divf %700, %699 : vector<2x1xf32>
    %cst_328 = arith.constant 1.000000e+00 : f32
    %702 = vector.broadcast %cst_328 : f32 to vector<2x1xf32>
    %703 = arith.addf %702, %701 : vector<2x1xf32>
    %c13_329 = arith.constant 13 : index
    %704 = memref.load %arg7[%c13_329] : memref<16xf32, #tpu.memory_space<smem>>
    %705 = vector.broadcast %704 : f32 to vector<2x1xf32>
    %706 = arith.mulf %703, %705 : vector<2x1xf32>
    %c0_330 = arith.constant 0 : index
    %c3328_331 = arith.constant 3328 : index
    %707 = vector.load %arg1[%c0_330, %c3328_331] : memref<2x4096xf32, #tpu.memory_space<vmem>>, vector<2x256xf32>
    %708 = vector.broadcast %706 : vector<2x1xf32> to vector<2x256xf32>
    %709 = arith.mulf %707, %708 : vector<2x256xf32>
    %c13_332 = arith.constant 13 : index
    %710 = memref.load %arg8[%c13_332] : memref<16xf32, #tpu.memory_space<smem>>
    %711 = vector.broadcast %710 : f32 to vector<2x256xf32>
    %712 = arith.addf %709, %711 : vector<2x256xf32>
    %cst_333 = arith.constant 0.000000e+00 : f32
    %713 = vector.broadcast %cst_333 : f32 to vector<2x256xf32>
    %714 = arith.subf %713, %712 : vector<2x256xf32>
    %715 = math.exp %714 : vector<2x256xf32>
    %cst_334 = arith.constant 1.000000e+00 : f32
    %716 = vector.broadcast %cst_334 : f32 to vector<2x256xf32>
    %717 = arith.addf %716, %715 : vector<2x256xf32>
    %cst_335 = arith.constant 1.000000e+00 : f32
    %718 = vector.broadcast %cst_335 : f32 to vector<2x256xf32>
    %719 = arith.divf %718, %717 : vector<2x256xf32>
    %c0_336 = arith.constant 0 : index
    %c3328_337 = arith.constant 3328 : index
    %720 = vector.load %arg9[%c0_336, %c3328_337] : memref<2x4096xf32, #tpu.memory_space<vmem>>, vector<2x256xf32>
    tpu.vector_store %arg9[%c0_336, %c3328_337], %719 {strides = array<i32>} : memref<2x4096xf32, #tpu.memory_space<vmem>>, vector<2x256xf32>,
    %c14_338 = arith.constant 14 : index
    %721 = memref.load %arg6[%c14_338] : memref<16xf32, #tpu.memory_space<smem>>
    %c14_339 = arith.constant 14 : index
    %c0_340 = arith.constant 0 : index
    %722 = memref.load %arg5[%c14_339, %c0_340] : memref<16x2xf32, #tpu.memory_space<smem>>
    %723 = vector.broadcast %722 : f32 to vector<2x1xf32>
    %724 = arith.mulf %723, %148 : vector<2x1xf32>
    %725 = vector.broadcast %721 : f32 to vector<2x1xf32>
    %726 = arith.addf %725, %724 : vector<2x1xf32>
    %c14_341 = arith.constant 14 : index
    %c1_342 = arith.constant 1 : index
    %727 = memref.load %arg5[%c14_341, %c1_342] : memref<16x2xf32, #tpu.memory_space<smem>>
    %728 = vector.broadcast %727 : f32 to vector<2x1xf32>
    %729 = arith.mulf %728, %216 : vector<2x1xf32>
    %730 = arith.addf %726, %729 : vector<2x1xf32>
    %cst_343 = arith.constant 0.000000e+00 : f32
    %731 = vector.broadcast %cst_343 : f32 to vector<2x1xf32>
    %732 = arith.subf %731, %730 : vector<2x1xf32>
    %733 = math.exp %732 : vector<2x1xf32>
    %cst_344 = arith.constant 1.000000e+00 : f32
    %734 = vector.broadcast %cst_344 : f32 to vector<2x1xf32>
    %735 = arith.addf %734, %733 : vector<2x1xf32>
    %cst_345 = arith.constant 1.000000e+00 : f32
    %736 = vector.broadcast %cst_345 : f32 to vector<2x1xf32>
    %737 = arith.divf %736, %735 : vector<2x1xf32>
    %cst_346 = arith.constant 1.000000e+00 : f32
    %738 = vector.broadcast %cst_346 : f32 to vector<2x1xf32>
    %739 = arith.addf %738, %737 : vector<2x1xf32>
    %c14_347 = arith.constant 14 : index
    %740 = memref.load %arg7[%c14_347] : memref<16xf32, #tpu.memory_space<smem>>
    %741 = vector.broadcast %740 : f32 to vector<2x1xf32>
    %742 = arith.mulf %739, %741 : vector<2x1xf32>
    %c0_348 = arith.constant 0 : index
    %c3584_349 = arith.constant 3584 : index
    %743 = vector.load %arg1[%c0_348, %c3584_349] : memref<2x4096xf32, #tpu.memory_space<vmem>>, vector<2x256xf32>
    %744 = vector.broadcast %742 : vector<2x1xf32> to vector<2x256xf32>
    %745 = arith.mulf %743, %744 : vector<2x256xf32>
    %c14_350 = arith.constant 14 : index
    %746 = memref.load %arg8[%c14_350] : memref<16xf32, #tpu.memory_space<smem>>
    %747 = vector.broadcast %746 : f32 to vector<2x256xf32>
    %748 = arith.addf %745, %747 : vector<2x256xf32>
    %cst_351 = arith.constant 0.000000e+00 : f32
    %749 = vector.broadcast %cst_351 : f32 to vector<2x256xf32>
    %750 = arith.subf %749, %748 : vector<2x256xf32>
    %751 = math.exp %750 : vector<2x256xf32>
    %cst_352 = arith.constant 1.000000e+00 : f32
    %752 = vector.broadcast %cst_352 : f32 to vector<2x256xf32>
    %753 = arith.addf %752, %751 : vector<2x256xf32>
    %cst_353 = arith.constant 1.000000e+00 : f32
    %754 = vector.broadcast %cst_353 : f32 to vector<2x256xf32>
    %755 = arith.divf %754, %753 : vector<2x256xf32>
    %c0_354 = arith.constant 0 : index
    %c3584_355 = arith.constant 3584 : index
    %756 = vector.load %arg9[%c0_354, %c3584_355] : memref<2x4096xf32, #tpu.memory_space<vmem>>, vector<2x256xf32>
    tpu.vector_store %arg9[%c0_354, %c3584_355], %755 {strides = array<i32>} : memref<2x4096xf32, #tpu.memory_space<vmem>>, vector<2x256xf32>,
    %c15_356 = arith.constant 15 : index
    %757 = memref.load %arg6[%c15_356] : memref<16xf32, #tpu.memory_space<smem>>
    %c15_357 = arith.constant 15 : index
    %c0_358 = arith.constant 0 : index
    %758 = memref.load %arg5[%c15_357, %c0_358] : memref<16x2xf32, #tpu.memory_space<smem>>
    %759 = vector.broadcast %758 : f32 to vector<2x1xf32>
    %760 = arith.mulf %759, %148 : vector<2x1xf32>
    %761 = vector.broadcast %757 : f32 to vector<2x1xf32>
    %762 = arith.addf %761, %760 : vector<2x1xf32>
    %c15_359 = arith.constant 15 : index
    %c1_360 = arith.constant 1 : index
    %763 = memref.load %arg5[%c15_359, %c1_360] : memref<16x2xf32, #tpu.memory_space<smem>>
    %764 = vector.broadcast %763 : f32 to vector<2x1xf32>
    %765 = arith.mulf %764, %216 : vector<2x1xf32>
    %766 = arith.addf %762, %765 : vector<2x1xf32>
    %cst_361 = arith.constant 0.000000e+00 : f32
    %767 = vector.broadcast %cst_361 : f32 to vector<2x1xf32>
    %768 = arith.subf %767, %766 : vector<2x1xf32>
    %769 = math.exp %768 : vector<2x1xf32>
    %cst_362 = arith.constant 1.000000e+00 : f32
    %770 = vector.broadcast %cst_362 : f32 to vector<2x1xf32>
    %771 = arith.addf %770, %769 : vector<2x1xf32>
    %cst_363 = arith.constant 1.000000e+00 : f32
    %772 = vector.broadcast %cst_363 : f32 to vector<2x1xf32>
    %773 = arith.divf %772, %771 : vector<2x1xf32>
    %cst_364 = arith.constant 1.000000e+00 : f32
    %774 = vector.broadcast %cst_364 : f32 to vector<2x1xf32>
    %775 = arith.addf %774, %773 : vector<2x1xf32>
    %c15_365 = arith.constant 15 : index
    %776 = memref.load %arg7[%c15_365] : memref<16xf32, #tpu.memory_space<smem>>
    %777 = vector.broadcast %776 : f32 to vector<2x1xf32>
    %778 = arith.mulf %775, %777 : vector<2x1xf32>
    %c0_366 = arith.constant 0 : index
    %c3840_367 = arith.constant 3840 : index
    %779 = vector.load %arg1[%c0_366, %c3840_367] : memref<2x4096xf32, #tpu.memory_space<vmem>>, vector<2x256xf32>
    %780 = vector.broadcast %778 : vector<2x1xf32> to vector<2x256xf32>
    %781 = arith.mulf %779, %780 : vector<2x256xf32>
    %c15_368 = arith.constant 15 : index
    %782 = memref.load %arg8[%c15_368] : memref<16xf32, #tpu.memory_space<smem>>
    %783 = vector.broadcast %782 : f32 to vector<2x256xf32>
    %784 = arith.addf %781, %783 : vector<2x256xf32>
    %cst_369 = arith.constant 0.000000e+00 : f32
    %785 = vector.broadcast %cst_369 : f32 to vector<2x256xf32>
    %786 = arith.subf %785, %784 : vector<2x256xf32>
    %787 = math.exp %786 : vector<2x256xf32>
    %cst_370 = arith.constant 1.000000e+00 : f32
    %788 = vector.broadcast %cst_370 : f32 to vector<2x256xf32>
    %789 = arith.addf %788, %787 : vector<2x256xf32>
    %cst_371 = arith.constant 1.000000e+00 : f32
    %790 = vector.broadcast %cst_371 : f32 to vector<2x256xf32>
    %791 = arith.divf %790, %789 : vector<2x256xf32>
    %c0_372 = arith.constant 0 : index
    %c3840_373 = arith.constant 3840 : index
    %792 = vector.load %arg9[%c0_372, %c3840_373] : memref<2x4096xf32, #tpu.memory_space<vmem>>, vector<2x256xf32>
    tpu.vector_store %arg9[%c0_372, %c3840_373], %791 {strides = array<i32>} : memref<2x4096xf32, #tpu.memory_space<vmem>>, vector<2x256xf32>,
    return
  }
  func.func @transform_0(%arg0: i32) -> (i32, i32) {
    %c0_i32 = arith.constant 0 : i32
    %c0_i32_0 = arith.constant 0 : i32
    return %arg0, %c0_i32 : i32, i32
  }
  func.func @transform_1(%arg0: i32) -> (i32, i32) {
    %c0_i32 = arith.constant 0 : i32
    %c0_i32_0 = arith.constant 0 : i32
    %c0_i32_1 = arith.constant 0 : i32
    return %c0_i32, %c0_i32_0 : i32, i32
  }
  func.func @transform_2(%arg0: i32) -> (i32, i32) {
    %c0_i32 = arith.constant 0 : i32
    %c0_i32_0 = arith.constant 0 : i32
    %c0_i32_1 = arith.constant 0 : i32
    return %c0_i32, %c0_i32_0 : i32, i32
  }
  func.func @transform_3(%arg0: i32) -> i32 {
    %c0_i32 = arith.constant 0 : i32
    %c0_i32_0 = arith.constant 0 : i32
    return %c0_i32 : i32
  }
  func.func @transform_4(%arg0: i32) -> (i32, i32) {
    %c0_i32 = arith.constant 0 : i32
    %c0_i32_0 = arith.constant 0 : i32
    %c0_i32_1 = arith.constant 0 : i32
    return %c0_i32, %c0_i32_0 : i32, i32
  }
  func.func @transform_5(%arg0: i32) -> i32 {
    %c0_i32 = arith.constant 0 : i32
    %c0_i32_0 = arith.constant 0 : i32
    return %c0_i32 : i32
  }
  func.func @transform_6(%arg0: i32) -> i32 {
    %c0_i32 = arith.constant 0 : i32
    %c0_i32_0 = arith.constant 0 : i32
    return %c0_i32 : i32
  }
  func.func @transform_7(%arg0: i32) -> i32 {
    %c0_i32 = arith.constant 0 : i32
    %c0_i32_0 = arith.constant 0 : i32
    return %c0_i32 : i32
  }
  func.func @transform_8(%arg0: i32) -> (i32, i32) {
    %c0_i32 = arith.constant 0 : i32
    %c0_i32_0 = arith.constant 0 : i32
    return %arg0, %c0_i32 : i32, i32
  }
}

module attributes {stable_mosaic.version = 11 : i64} {
  func.func @kernel(%arg0: i32, %arg1: memref<2x4096xf32, #tpu.memory_space<vmem>>, %arg2: memref<1x256xf32, #tpu.memory_space<vmem>>, %arg3: memref<2x16xf32, #tpu.memory_space<smem>>, %arg4: memref<2xf32, #tpu.memory_space<smem>>, %arg5: memref<16x2xf32, #tpu.memory_space<smem>>, %arg6: memref<16xf32, #tpu.memory_space<smem>>, %arg7: memref<16xf32, #tpu.memory_space<smem>>, %arg8: memref<16xf32, #tpu.memory_space<smem>>, %arg9: memref<2x4096xf32, #tpu.memory_space<vmem>>) attributes {dimension_semantics = [#tpu.dimension_semantics<parallel>], iteration_bounds = array<i64: 1>, scalar_prefetch = 0 : i64, scratch_operands = 0 : i64, tpu.core_type = #tpu.core_type<tc>, window_params = [{transform_indices = @transform_0, window_bounds = array<i64: 2, 4096>}, {pipeline_mode = #tpu.pipeline_mode<synchronous>, transform_indices = @transform_1, window_bounds = array<i64: 1, 256>}, {transform_indices = @transform_2, window_bounds = array<i64: 2, 16>}, {transform_indices = @transform_3, window_bounds = array<i64: 2>}, {transform_indices = @transform_4, window_bounds = array<i64: 16, 2>}, {transform_indices = @transform_5, window_bounds = array<i64: 16>}, {transform_indices = @transform_6, window_bounds = array<i64: 16>}, {transform_indices = @transform_7, window_bounds = array<i64: 16>}, {transform_indices = @transform_8, window_bounds = array<i64: 2, 4096>}]} {
    %c0 = arith.constant 0 : index
    %c0_0 = arith.constant 0 : index
    %0 = vector.load %arg2[%c0, %c0_0] : memref<1x256xf32, #tpu.memory_space<vmem>>, vector<1x256xf32>
    %c0_1 = arith.constant 0 : index
    %c0_2 = arith.constant 0 : index
    %1 = vector.load %arg1[%c0_1, %c0_2] : memref<2x4096xf32, #tpu.memory_space<vmem>>, vector<2x256xf32>
    %2 = vector.broadcast %0 : vector<1x256xf32> to vector<2x256xf32>
    %3 = arith.mulf %1, %2 : vector<2x256xf32>
    %cst = arith.constant dense<0.000000e+00> : vector<2xf32>
    %4 = vector.multi_reduction <add>, %3, %cst [1] : vector<2x256xf32> to vector<2xf32>
    %5 = vector.shape_cast %4 : vector<2xf32> to vector<2x1xf32>
    %c0_3 = arith.constant 0 : index
    %c256 = arith.constant 256 : index
    %6 = vector.load %arg1[%c0_3, %c256] : memref<2x4096xf32, #tpu.memory_space<vmem>>, vector<2x256xf32>
    %7 = vector.broadcast %0 : vector<1x256xf32> to vector<2x256xf32>
    %8 = arith.mulf %6, %7 : vector<2x256xf32>
    %cst_4 = arith.constant dense<0.000000e+00> : vector<2xf32>
    %9 = vector.multi_reduction <add>, %8, %cst_4 [1] : vector<2x256xf32> to vector<2xf32>
    %10 = vector.shape_cast %9 : vector<2xf32> to vector<2x1xf32>
    %c0_5 = arith.constant 0 : index
    %c512 = arith.constant 512 : index
    %11 = vector.load %arg1[%c0_5, %c512] : memref<2x4096xf32, #tpu.memory_space<vmem>>, vector<2x256xf32>
    %12 = vector.broadcast %0 : vector<1x256xf32> to vector<2x256xf32>
    %13 = arith.mulf %11, %12 : vector<2x256xf32>
    %cst_6 = arith.constant dense<0.000000e+00> : vector<2xf32>
    %14 = vector.multi_reduction <add>, %13, %cst_6 [1] : vector<2x256xf32> to vector<2xf32>
    %15 = vector.shape_cast %14 : vector<2xf32> to vector<2x1xf32>
    %c0_7 = arith.constant 0 : index
    %c768 = arith.constant 768 : index
    %16 = vector.load %arg1[%c0_7, %c768] : memref<2x4096xf32, #tpu.memory_space<vmem>>, vector<2x256xf32>
    %17 = vector.broadcast %0 : vector<1x256xf32> to vector<2x256xf32>
    %18 = arith.mulf %16, %17 : vector<2x256xf32>
    %cst_8 = arith.constant dense<0.000000e+00> : vector<2xf32>
    %19 = vector.multi_reduction <add>, %18, %cst_8 [1] : vector<2x256xf32> to vector<2xf32>
    %20 = vector.shape_cast %19 : vector<2xf32> to vector<2x1xf32>
    %c0_9 = arith.constant 0 : index
    %c1024 = arith.constant 1024 : index
    %21 = vector.load %arg1[%c0_9, %c1024] : memref<2x4096xf32, #tpu.memory_space<vmem>>, vector<2x256xf32>
    %22 = vector.broadcast %0 : vector<1x256xf32> to vector<2x256xf32>
    %23 = arith.mulf %21, %22 : vector<2x256xf32>
    %cst_10 = arith.constant dense<0.000000e+00> : vector<2xf32>
    %24 = vector.multi_reduction <add>, %23, %cst_10 [1] : vector<2x256xf32> to vector<2xf32>
    %25 = vector.shape_cast %24 : vector<2xf32> to vector<2x1xf32>
    %c0_11 = arith.constant 0 : index
    %c1280 = arith.constant 1280 : index
    %26 = vector.load %arg1[%c0_11, %c1280] : memref<2x4096xf32, #tpu.memory_space<vmem>>, vector<2x256xf32>
    %27 = vector.broadcast %0 : vector<1x256xf32> to vector<2x256xf32>
    %28 = arith.mulf %26, %27 : vector<2x256xf32>
    %cst_12 = arith.constant dense<0.000000e+00> : vector<2xf32>
    %29 = vector.multi_reduction <add>, %28, %cst_12 [1] : vector<2x256xf32> to vector<2xf32>
    %30 = vector.shape_cast %29 : vector<2xf32> to vector<2x1xf32>
    %c0_13 = arith.constant 0 : index
    %c1536 = arith.constant 1536 : index
    %31 = vector.load %arg1[%c0_13, %c1536] : memref<2x4096xf32, #tpu.memory_space<vmem>>, vector<2x256xf32>
    %32 = vector.broadcast %0 : vector<1x256xf32> to vector<2x256xf32>
    %33 = arith.mulf %31, %32 : vector<2x256xf32>
    %cst_14 = arith.constant dense<0.000000e+00> : vector<2xf32>
    %34 = vector.multi_reduction <add>, %33, %cst_14 [1] : vector<2x256xf32> to vector<2xf32>
    %35 = vector.shape_cast %34 : vector<2xf32> to vector<2x1xf32>
    %c0_15 = arith.constant 0 : index
    %c1792 = arith.constant 1792 : index
    %36 = vector.load %arg1[%c0_15, %c1792] : memref<2x4096xf32, #tpu.memory_space<vmem>>, vector<2x256xf32>
    %37 = vector.broadcast %0 : vector<1x256xf32> to vector<2x256xf32>
    %38 = arith.mulf %36, %37 : vector<2x256xf32>
    %cst_16 = arith.constant dense<0.000000e+00> : vector<2xf32>
    %39 = vector.multi_reduction <add>, %38, %cst_16 [1] : vector<2x256xf32> to vector<2xf32>
    %40 = vector.shape_cast %39 : vector<2xf32> to vector<2x1xf32>
    %c0_17 = arith.constant 0 : index
    %c2048 = arith.constant 2048 : index
    %41 = vector.load %arg1[%c0_17, %c2048] : memref<2x4096xf32, #tpu.memory_space<vmem>>, vector<2x256xf32>
    %42 = vector.broadcast %0 : vector<1x256xf32> to vector<2x256xf32>
    %43 = arith.mulf %41, %42 : vector<2x256xf32>
    %cst_18 = arith.constant dense<0.000000e+00> : vector<2xf32>
    %44 = vector.multi_reduction <add>, %43, %cst_18 [1] : vector<2x256xf32> to vector<2xf32>
    %45 = vector.shape_cast %44 : vector<2xf32> to vector<2x1xf32>
    %c0_19 = arith.constant 0 : index
    %c2304 = arith.constant 2304 : index
    %46 = vector.load %arg1[%c0_19, %c2304] : memref<2x4096xf32, #tpu.memory_space<vmem>>, vector<2x256xf32>
    %47 = vector.broadcast %0 : vector<1x256xf32> to vector<2x256xf32>
    %48 = arith.mulf %46, %47 : vector<2x256xf32>
    %cst_20 = arith.constant dense<0.000000e+00> : vector<2xf32>
    %49 = vector.multi_reduction <add>, %48, %cst_20 [1] : vector<2x256xf32> to vector<2xf32>
    %50 = vector.shape_cast %49 : vector<2xf32> to vector<2x1xf32>
    %c0_21 = arith.constant 0 : index
    %c2560 = arith.constant 2560 : index
    %51 = vector.load %arg1[%c0_21, %c2560] : memref<2x4096xf32, #tpu.memory_space<vmem>>, vector<2x256xf32>
    %52 = vector.broadcast %0 : vector<1x256xf32> to vector<2x256xf32>
    %53 = arith.mulf %51, %52 : vector<2x256xf32>
    %cst_22 = arith.constant dense<0.000000e+00> : vector<2xf32>
    %54 = vector.multi_reduction <add>, %53, %cst_22 [1] : vector<2x256xf32> to vector<2xf32>
    %55 = vector.shape_cast %54 : vector<2xf32> to vector<2x1xf32>
    %c0_23 = arith.constant 0 : index
    %c2816 = arith.constant 2816 : index
    %56 = vector.load %arg1[%c0_23, %c2816] : memref<2x4096xf32, #tpu.memory_space<vmem>>, vector<2x256xf32>
    %57 = vector.broadcast %0 : vector<1x256xf32> to vector<2x256xf32>
    %58 = arith.mulf %56, %57 : vector<2x256xf32>
    %cst_24 = arith.constant dense<0.000000e+00> : vector<2xf32>
    %59 = vector.multi_reduction <add>, %58, %cst_24 [1] : vector<2x256xf32> to vector<2xf32>
    %60 = vector.shape_cast %59 : vector<2xf32> to vector<2x1xf32>
    %c0_25 = arith.constant 0 : index
    %c3072 = arith.constant 3072 : index
    %61 = vector.load %arg1[%c0_25, %c3072] : memref<2x4096xf32, #tpu.memory_space<vmem>>, vector<2x256xf32>
    %62 = vector.broadcast %0 : vector<1x256xf32> to vector<2x256xf32>
    %63 = arith.mulf %61, %62 : vector<2x256xf32>
    %cst_26 = arith.constant dense<0.000000e+00> : vector<2xf32>
    %64 = vector.multi_reduction <add>, %63, %cst_26 [1] : vector<2x256xf32> to vector<2xf32>
    %65 = vector.shape_cast %64 : vector<2xf32> to vector<2x1xf32>
    %c0_27 = arith.constant 0 : index
    %c3328 = arith.constant 3328 : index
    %66 = vector.load %arg1[%c0_27, %c3328] : memref<2x4096xf32, #tpu.memory_space<vmem>>, vector<2x256xf32>
    %67 = vector.broadcast %0 : vector<1x256xf32> to vector<2x256xf32>
    %68 = arith.mulf %66, %67 : vector<2x256xf32>
    %cst_28 = arith.constant dense<0.000000e+00> : vector<2xf32>
    %69 = vector.multi_reduction <add>, %68, %cst_28 [1] : vector<2x256xf32> to vector<2xf32>
    %70 = vector.shape_cast %69 : vector<2xf32> to vector<2x1xf32>
    %c0_29 = arith.constant 0 : index
    %c3584 = arith.constant 3584 : index
    %71 = vector.load %arg1[%c0_29, %c3584] : memref<2x4096xf32, #tpu.memory_space<vmem>>, vector<2x256xf32>
    %72 = vector.broadcast %0 : vector<1x256xf32> to vector<2x256xf32>
    %73 = arith.mulf %71, %72 : vector<2x256xf32>
    %cst_30 = arith.constant dense<0.000000e+00> : vector<2xf32>
    %74 = vector.multi_reduction <add>, %73, %cst_30 [1] : vector<2x256xf32> to vector<2xf32>
    %75 = vector.shape_cast %74 : vector<2xf32> to vector<2x1xf32>
    %c0_31 = arith.constant 0 : index
    %c3840 = arith.constant 3840 : index
    %76 = vector.load %arg1[%c0_31, %c3840] : memref<2x4096xf32, #tpu.memory_space<vmem>>, vector<2x256xf32>
    %77 = vector.broadcast %0 : vector<1x256xf32> to vector<2x256xf32>
    %78 = arith.mulf %76, %77 : vector<2x256xf32>
    %cst_32 = arith.constant dense<0.000000e+00> : vector<2xf32>
    %79 = vector.multi_reduction <add>, %78, %cst_32 [1] : vector<2x256xf32> to vector<2xf32>
    %80 = vector.shape_cast %79 : vector<2xf32> to vector<2x1xf32>
    %c0_33 = arith.constant 0 : index
    %81 = memref.load %arg4[%c0_33] : memref<2xf32, #tpu.memory_space<smem>>
    %c0_34 = arith.constant 0 : index
    %c0_35 = arith.constant 0 : index
    %82 = memref.load %arg3[%c0_34, %c0_35] : memref<2x16xf32, #tpu.memory_space<smem>>
    %83 = vector.broadcast %82 : f32 to vector<2x1xf32>
    %84 = arith.mulf %83, %5 : vector<2x1xf32>
    %85 = vector.broadcast %81 : f32 to vector<2x1xf32>
    %86 = arith.addf %85, %84 : vector<2x1xf32>
    %c0_36 = arith.constant 0 : index
    %c1 = arith.constant 1 : index
    %87 = memref.load %arg3[%c0_36, %c1] : memref<2x16xf32, #tpu.memory_space<smem>>
    %88 = vector.broadcast %87 : f32 to vector<2x1xf32>
    %89 = arith.mulf %88, %10 : vector<2x1xf32>
    %90 = arith.addf %86, %89 : vector<2x1xf32>
    %c0_37 = arith.constant 0 : index
    %c2 = arith.constant 2 : index
    %91 = memref.load %arg3[%c0_37, %c2] : memref<2x16xf32, #tpu.memory_space<smem>>
    %92 = vector.broadcast %91 : f32 to vector<2x1xf32>
    %93 = arith.mulf %92, %15 : vector<2x1xf32>
    %94 = arith.addf %90, %93 : vector<2x1xf32>
    %c0_38 = arith.constant 0 : index
    %c3 = arith.constant 3 : index
    %95 = memref.load %arg3[%c0_38, %c3] : memref<2x16xf32, #tpu.memory_space<smem>>
    %96 = vector.broadcast %95 : f32 to vector<2x1xf32>
    %97 = arith.mulf %96, %20 : vector<2x1xf32>
    %98 = arith.addf %94, %97 : vector<2x1xf32>
    %c0_39 = arith.constant 0 : index
    %c4 = arith.constant 4 : index
    %99 = memref.load %arg3[%c0_39, %c4] : memref<2x16xf32, #tpu.memory_space<smem>>
    %100 = vector.broadcast %99 : f32 to vector<2x1xf32>
    %101 = arith.mulf %100, %25 : vector<2x1xf32>
    %102 = arith.addf %98, %101 : vector<2x1xf32>
    %c0_40 = arith.constant 0 : index
    %c5 = arith.constant 5 : index
    %103 = memref.load %arg3[%c0_40, %c5] : memref<2x16xf32, #tpu.memory_space<smem>>
    %104 = vector.broadcast %103 : f32 to vector<2x1xf32>
    %105 = arith.mulf %104, %30 : vector<2x1xf32>
    %106 = arith.addf %102, %105 : vector<2x1xf32>
    %c0_41 = arith.constant 0 : index
    %c6 = arith.constant 6 : index
    %107 = memref.load %arg3[%c0_41, %c6] : memref<2x16xf32, #tpu.memory_space<smem>>
    %108 = vector.broadcast %107 : f32 to vector<2x1xf32>
    %109 = arith.mulf %108, %35 : vector<2x1xf32>
    %110 = arith.addf %106, %109 : vector<2x1xf32>
    %c0_42 = arith.constant 0 : index
    %c7 = arith.constant 7 : index
    %111 = memref.load %arg3[%c0_42, %c7] : memref<2x16xf32, #tpu.memory_space<smem>>
    %112 = vector.broadcast %111 : f32 to vector<2x1xf32>
    %113 = arith.mulf %112, %40 : vector<2x1xf32>
    %114 = arith.addf %110, %113 : vector<2x1xf32>
    %c0_43 = arith.constant 0 : index
    %c8 = arith.constant 8 : index
    %115 = memref.load %arg3[%c0_43, %c8] : memref<2x16xf32, #tpu.memory_space<smem>>
    %116 = vector.broadcast %115 : f32 to vector<2x1xf32>
    %117 = arith.mulf %116, %45 : vector<2x1xf32>
    %118 = arith.addf %114, %117 : vector<2x1xf32>
    %c0_44 = arith.constant 0 : index
    %c9 = arith.constant 9 : index
    %119 = memref.load %arg3[%c0_44, %c9] : memref<2x16xf32, #tpu.memory_space<smem>>
    %120 = vector.broadcast %119 : f32 to vector<2x1xf32>
    %121 = arith.mulf %120, %50 : vector<2x1xf32>
    %122 = arith.addf %118, %121 : vector<2x1xf32>
    %c0_45 = arith.constant 0 : index
    %c10 = arith.constant 10 : index
    %123 = memref.load %arg3[%c0_45, %c10] : memref<2x16xf32, #tpu.memory_space<smem>>
    %124 = vector.broadcast %123 : f32 to vector<2x1xf32>
    %125 = arith.mulf %124, %55 : vector<2x1xf32>
    %126 = arith.addf %122, %125 : vector<2x1xf32>
    %c0_46 = arith.constant 0 : index
    %c11 = arith.constant 11 : index
    %127 = memref.load %arg3[%c0_46, %c11] : memref<2x16xf32, #tpu.memory_space<smem>>
    %128 = vector.broadcast %127 : f32 to vector<2x1xf32>
    %129 = arith.mulf %128, %60 : vector<2x1xf32>
    %130 = arith.addf %126, %129 : vector<2x1xf32>
    %c0_47 = arith.constant 0 : index
    %c12 = arith.constant 12 : index
    %131 = memref.load %arg3[%c0_47, %c12] : memref<2x16xf32, #tpu.memory_space<smem>>
    %132 = vector.broadcast %131 : f32 to vector<2x1xf32>
    %133 = arith.mulf %132, %65 : vector<2x1xf32>
    %134 = arith.addf %130, %133 : vector<2x1xf32>
    %c0_48 = arith.constant 0 : index
    %c13 = arith.constant 13 : index
    %135 = memref.load %arg3[%c0_48, %c13] : memref<2x16xf32, #tpu.memory_space<smem>>
    %136 = vector.broadcast %135 : f32 to vector<2x1xf32>
    %137 = arith.mulf %136, %70 : vector<2x1xf32>
    %138 = arith.addf %134, %137 : vector<2x1xf32>
    %c0_49 = arith.constant 0 : index
    %c14 = arith.constant 14 : index
    %139 = memref.load %arg3[%c0_49, %c14] : memref<2x16xf32, #tpu.memory_space<smem>>
    %140 = vector.broadcast %139 : f32 to vector<2x1xf32>
    %141 = arith.mulf %140, %75 : vector<2x1xf32>
    %142 = arith.addf %138, %141 : vector<2x1xf32>
    %c0_50 = arith.constant 0 : index
    %c15 = arith.constant 15 : index
    %143 = memref.load %arg3[%c0_50, %c15] : memref<2x16xf32, #tpu.memory_space<smem>>
    %144 = vector.broadcast %143 : f32 to vector<2x1xf32>
    %145 = arith.mulf %144, %80 : vector<2x1xf32>
    %146 = arith.addf %142, %145 : vector<2x1xf32>
    %cst_51 = arith.constant 0.000000e+00 : f32
    %147 = vector.broadcast %cst_51 : f32 to vector<2x1xf32>
    %148 = arith.maximumf %146, %147 : vector<2x1xf32>
    %c1_52 = arith.constant 1 : index
    %149 = memref.load %arg4[%c1_52] : memref<2xf32, #tpu.memory_space<smem>>
    %c1_53 = arith.constant 1 : index
    %c0_54 = arith.constant 0 : index
    %150 = memref.load %arg3[%c1_53, %c0_54] : memref<2x16xf32, #tpu.memory_space<smem>>
    %151 = vector.broadcast %150 : f32 to vector<2x1xf32>
    %152 = arith.mulf %151, %5 : vector<2x1xf32>
    %153 = vector.broadcast %149 : f32 to vector<2x1xf32>
    %154 = arith.addf %153, %152 : vector<2x1xf32>
    %c1_55 = arith.constant 1 : index
    %c1_56 = arith.constant 1 : index
    %155 = memref.load %arg3[%c1_55, %c1_56] : memref<2x16xf32, #tpu.memory_space<smem>>
    %156 = vector.broadcast %155 : f32 to vector<2x1xf32>
    %157 = arith.mulf %156, %10 : vector<2x1xf32>
    %158 = arith.addf %154, %157 : vector<2x1xf32>
    %c1_57 = arith.constant 1 : index
    %c2_58 = arith.constant 2 : index
    %159 = memref.load %arg3[%c1_57, %c2_58] : memref<2x16xf32, #tpu.memory_space<smem>>
    %160 = vector.broadcast %159 : f32 to vector<2x1xf32>
    %161 = arith.mulf %160, %15 : vector<2x1xf32>
    %162 = arith.addf %158, %161 : vector<2x1xf32>
    %c1_59 = arith.constant 1 : index
    %c3_60 = arith.constant 3 : index
    %163 = memref.load %arg3[%c1_59, %c3_60] : memref<2x16xf32, #tpu.memory_space<smem>>
    %164 = vector.broadcast %163 : f32 to vector<2x1xf32>
    %165 = arith.mulf %164, %20 : vector<2x1xf32>
    %166 = arith.addf %162, %165 : vector<2x1xf32>
    %c1_61 = arith.constant 1 : index
    %c4_62 = arith.constant 4 : index
    %167 = memref.load %arg3[%c1_61, %c4_62] : memref<2x16xf32, #tpu.memory_space<smem>>
    %168 = vector.broadcast %167 : f32 to vector<2x1xf32>
    %169 = arith.mulf %168, %25 : vector<2x1xf32>
    %170 = arith.addf %166, %169 : vector<2x1xf32>
    %c1_63 = arith.constant 1 : index
    %c5_64 = arith.constant 5 : index
    %171 = memref.load %arg3[%c1_63, %c5_64] : memref<2x16xf32, #tpu.memory_space<smem>>
    %172 = vector.broadcast %171 : f32 to vector<2x1xf32>
    %173 = arith.mulf %172, %30 : vector<2x1xf32>
    %174 = arith.addf %170, %173 : vector<2x1xf32>
    %c1_65 = arith.constant 1 : index
    %c6_66 = arith.constant 6 : index
    %175 = memref.load %arg3[%c1_65, %c6_66] : memref<2x16xf32, #tpu.memory_space<smem>>
    %176 = vector.broadcast %175 : f32 to vector<2x1xf32>
    %177 = arith.mulf %176, %35 : vector<2x1xf32>
    %178 = arith.addf %174, %177 : vector<2x1xf32>
    %c1_67 = arith.constant 1 : index
    %c7_68 = arith.constant 7 : index
    %179 = memref.load %arg3[%c1_67, %c7_68] : memref<2x16xf32, #tpu.memory_space<smem>>
    %180 = vector.broadcast %179 : f32 to vector<2x1xf32>
    %181 = arith.mulf %180, %40 : vector<2x1xf32>
    %182 = arith.addf %178, %181 : vector<2x1xf32>
    %c1_69 = arith.constant 1 : index
    %c8_70 = arith.constant 8 : index
    %183 = memref.load %arg3[%c1_69, %c8_70] : memref<2x16xf32, #tpu.memory_space<smem>>
    %184 = vector.broadcast %183 : f32 to vector<2x1xf32>
    %185 = arith.mulf %184, %45 : vector<2x1xf32>
    %186 = arith.addf %182, %185 : vector<2x1xf32>
    %c1_71 = arith.constant 1 : index
    %c9_72 = arith.constant 9 : index
    %187 = memref.load %arg3[%c1_71, %c9_72] : memref<2x16xf32, #tpu.memory_space<smem>>
    %188 = vector.broadcast %187 : f32 to vector<2x1xf32>
    %189 = arith.mulf %188, %50 : vector<2x1xf32>
    %190 = arith.addf %186, %189 : vector<2x1xf32>
    %c1_73 = arith.constant 1 : index
    %c10_74 = arith.constant 10 : index
    %191 = memref.load %arg3[%c1_73, %c10_74] : memref<2x16xf32, #tpu.memory_space<smem>>
    %192 = vector.broadcast %191 : f32 to vector<2x1xf32>
    %193 = arith.mulf %192, %55 : vector<2x1xf32>
    %194 = arith.addf %190, %193 : vector<2x1xf32>
    %c1_75 = arith.constant 1 : index
    %c11_76 = arith.constant 11 : index
    %195 = memref.load %arg3[%c1_75, %c11_76] : memref<2x16xf32, #tpu.memory_space<smem>>
    %196 = vector.broadcast %195 : f32 to vector<2x1xf32>
    %197 = arith.mulf %196, %60 : vector<2x1xf32>
    %198 = arith.addf %194, %197 : vector<2x1xf32>
    %c1_77 = arith.constant 1 : index
    %c12_78 = arith.constant 12 : index
    %199 = memref.load %arg3[%c1_77, %c12_78] : memref<2x16xf32, #tpu.memory_space<smem>>
    %200 = vector.broadcast %199 : f32 to vector<2x1xf32>
    %201 = arith.mulf %200, %65 : vector<2x1xf32>
    %202 = arith.addf %198, %201 : vector<2x1xf32>
    %c1_79 = arith.constant 1 : index
    %c13_80 = arith.constant 13 : index
    %203 = memref.load %arg3[%c1_79, %c13_80] : memref<2x16xf32, #tpu.memory_space<smem>>
    %204 = vector.broadcast %203 : f32 to vector<2x1xf32>
    %205 = arith.mulf %204, %70 : vector<2x1xf32>
    %206 = arith.addf %202, %205 : vector<2x1xf32>
    %c1_81 = arith.constant 1 : index
    %c14_82 = arith.constant 14 : index
    %207 = memref.load %arg3[%c1_81, %c14_82] : memref<2x16xf32, #tpu.memory_space<smem>>
    %208 = vector.broadcast %207 : f32 to vector<2x1xf32>
    %209 = arith.mulf %208, %75 : vector<2x1xf32>
    %210 = arith.addf %206, %209 : vector<2x1xf32>
    %c1_83 = arith.constant 1 : index
    %c15_84 = arith.constant 15 : index
    %211 = memref.load %arg3[%c1_83, %c15_84] : memref<2x16xf32, #tpu.memory_space<smem>>
    %212 = vector.broadcast %211 : f32 to vector<2x1xf32>
    %213 = arith.mulf %212, %80 : vector<2x1xf32>
    %214 = arith.addf %210, %213 : vector<2x1xf32>
    %cst_85 = arith.constant 0.000000e+00 : f32
    %215 = vector.broadcast %cst_85 : f32 to vector<2x1xf32>
    %216 = arith.maximumf %214, %215 : vector<2x1xf32>
    %c0_86 = arith.constant 0 : index
    %217 = memref.load %arg6[%c0_86] : memref<16xf32, #tpu.memory_space<smem>>
    %c0_87 = arith.constant 0 : index
    %c0_88 = arith.constant 0 : index
    %218 = memref.load %arg5[%c0_87, %c0_88] : memref<16x2xf32, #tpu.memory_space<smem>>
    %219 = vector.broadcast %218 : f32 to vector<2x1xf32>
    %220 = arith.mulf %219, %148 : vector<2x1xf32>
    %221 = vector.broadcast %217 : f32 to vector<2x1xf32>
    %222 = arith.addf %221, %220 : vector<2x1xf32>
    %c0_89 = arith.constant 0 : index
    %c1_90 = arith.constant 1 : index
    %223 = memref.load %arg5[%c0_89, %c1_90] : memref<16x2xf32, #tpu.memory_space<smem>>
    %224 = vector.broadcast %223 : f32 to vector<2x1xf32>
    %225 = arith.mulf %224, %216 : vector<2x1xf32>
    %226 = arith.addf %222, %225 : vector<2x1xf32>
    %cst_91 = arith.constant 0.000000e+00 : f32
    %227 = vector.broadcast %cst_91 : f32 to vector<2x1xf32>
    %228 = arith.subf %227, %226 : vector<2x1xf32>
    %229 = math.exp %228 : vector<2x1xf32>
    %cst_92 = arith.constant 1.000000e+00 : f32
    %230 = vector.broadcast %cst_92 : f32 to vector<2x1xf32>
    %231 = arith.addf %230, %229 : vector<2x1xf32>
    %cst_93 = arith.constant 1.000000e+00 : f32
    %232 = vector.broadcast %cst_93 : f32 to vector<2x1xf32>
    %233 = arith.divf %232, %231 : vector<2x1xf32>
    %cst_94 = arith.constant 1.000000e+00 : f32
    %234 = vector.broadcast %cst_94 : f32 to vector<2x1xf32>
    %235 = arith.addf %234, %233 : vector<2x1xf32>
    %c0_95 = arith.constant 0 : index
    %236 = memref.load %arg7[%c0_95] : memref<16xf32, #tpu.memory_space<smem>>
    %237 = vector.broadcast %236 : f32 to vector<2x1xf32>
    %238 = arith.mulf %235, %237 : vector<2x1xf32>
    %c0_96 = arith.constant 0 : index
    %c0_97 = arith.constant 0 : index
    %239 = vector.load %arg1[%c0_96, %c0_97] : memref<2x4096xf32, #tpu.memory_space<vmem>>, vector<2x256xf32>
    %240 = vector.broadcast %238 : vector<2x1xf32> to vector<2x256xf32>
    %241 = arith.mulf %239, %240 : vector<2x256xf32>
    %c0_98 = arith.constant 0 : index
    %242 = memref.load %arg8[%c0_98] : memref<16xf32, #tpu.memory_space<smem>>
    %243 = vector.broadcast %242 : f32 to vector<2x256xf32>
    %244 = arith.addf %241, %243 : vector<2x256xf32>
    %cst_99 = arith.constant 0.000000e+00 : f32
    %245 = vector.broadcast %cst_99 : f32 to vector<2x256xf32>
    %246 = arith.subf %245, %244 : vector<2x256xf32>
    %247 = math.exp %246 : vector<2x256xf32>
    %cst_100 = arith.constant 1.000000e+00 : f32
    %248 = vector.broadcast %cst_100 : f32 to vector<2x256xf32>
    %249 = arith.addf %248, %247 : vector<2x256xf32>
    %cst_101 = arith.constant 1.000000e+00 : f32
    %250 = vector.broadcast %cst_101 : f32 to vector<2x256xf32>
    %251 = arith.divf %250, %249 : vector<2x256xf32>
    %c0_102 = arith.constant 0 : index
    %c0_103 = arith.constant 0 : index
    %252 = vector.load %arg9[%c0_102, %c0_103] : memref<2x4096xf32, #tpu.memory_space<vmem>>, vector<2x256xf32>
    tpu.vector_store %arg9[%c0_102, %c0_103], %251 {strides = array<i32>} : memref<2x4096xf32, #tpu.memory_space<vmem>>, vector<2x256xf32>,
    %c1_104 = arith.constant 1 : index
    %253 = memref.load %arg6[%c1_104] : memref<16xf32, #tpu.memory_space<smem>>
    %c1_105 = arith.constant 1 : index
    %c0_106 = arith.constant 0 : index
    %254 = memref.load %arg5[%c1_105, %c0_106] : memref<16x2xf32, #tpu.memory_space<smem>>
    %255 = vector.broadcast %254 : f32 to vector<2x1xf32>
    %256 = arith.mulf %255, %148 : vector<2x1xf32>
    %257 = vector.broadcast %253 : f32 to vector<2x1xf32>
    %258 = arith.addf %257, %256 : vector<2x1xf32>
    %c1_107 = arith.constant 1 : index
    %c1_108 = arith.constant 1 : index
    %259 = memref.load %arg5[%c1_107, %c1_108] : memref<16x2xf32, #tpu.memory_space<smem>>
    %260 = vector.broadcast %259 : f32 to vector<2x1xf32>
    %261 = arith.mulf %260, %216 : vector<2x1xf32>
    %262 = arith.addf %258, %261 : vector<2x1xf32>
    %cst_109 = arith.constant 0.000000e+00 : f32
    %263 = vector.broadcast %cst_109 : f32 to vector<2x1xf32>
    %264 = arith.subf %263, %262 : vector<2x1xf32>
    %265 = math.exp %264 : vector<2x1xf32>
    %cst_110 = arith.constant 1.000000e+00 : f32
    %266 = vector.broadcast %cst_110 : f32 to vector<2x1xf32>
    %267 = arith.addf %266, %265 : vector<2x1xf32>
    %cst_111 = arith.constant 1.000000e+00 : f32
    %268 = vector.broadcast %cst_111 : f32 to vector<2x1xf32>
    %269 = arith.divf %268, %267 : vector<2x1xf32>
    %cst_112 = arith.constant 1.000000e+00 : f32
    %270 = vector.broadcast %cst_112 : f32 to vector<2x1xf32>
    %271 = arith.addf %270, %269 : vector<2x1xf32>
    %c1_113 = arith.constant 1 : index
    %272 = memref.load %arg7[%c1_113] : memref<16xf32, #tpu.memory_space<smem>>
    %273 = vector.broadcast %272 : f32 to vector<2x1xf32>
    %274 = arith.mulf %271, %273 : vector<2x1xf32>
    %c0_114 = arith.constant 0 : index
    %c256_115 = arith.constant 256 : index
    %275 = vector.load %arg1[%c0_114, %c256_115] : memref<2x4096xf32, #tpu.memory_space<vmem>>, vector<2x256xf32>
    %276 = vector.broadcast %274 : vector<2x1xf32> to vector<2x256xf32>
    %277 = arith.mulf %275, %276 : vector<2x256xf32>
    %c1_116 = arith.constant 1 : index
    %278 = memref.load %arg8[%c1_116] : memref<16xf32, #tpu.memory_space<smem>>
    %279 = vector.broadcast %278 : f32 to vector<2x256xf32>
    %280 = arith.addf %277, %279 : vector<2x256xf32>
    %cst_117 = arith.constant 0.000000e+00 : f32
    %281 = vector.broadcast %cst_117 : f32 to vector<2x256xf32>
    %282 = arith.subf %281, %280 : vector<2x256xf32>
    %283 = math.exp %282 : vector<2x256xf32>
    %cst_118 = arith.constant 1.000000e+00 : f32
    %284 = vector.broadcast %cst_118 : f32 to vector<2x256xf32>
    %285 = arith.addf %284, %283 : vector<2x256xf32>
    %cst_119 = arith.constant 1.000000e+00 : f32
    %286 = vector.broadcast %cst_119 : f32 to vector<2x256xf32>
    %287 = arith.divf %286, %285 : vector<2x256xf32>
    %c0_120 = arith.constant 0 : index
    %c256_121 = arith.constant 256 : index
    %288 = vector.load %arg9[%c0_120, %c256_121] : memref<2x4096xf32, #tpu.memory_space<vmem>>, vector<2x256xf32>
    tpu.vector_store %arg9[%c0_120, %c256_121], %287 {strides = array<i32>} : memref<2x4096xf32, #tpu.memory_space<vmem>>, vector<2x256xf32>,
    %c2_122 = arith.constant 2 : index
    %289 = memref.load %arg6[%c2_122] : memref<16xf32, #tpu.memory_space<smem>>
    %c2_123 = arith.constant 2 : index
    %c0_124 = arith.constant 0 : index
    %290 = memref.load %arg5[%c2_123, %c0_124] : memref<16x2xf32, #tpu.memory_space<smem>>
    %291 = vector.broadcast %290 : f32 to vector<2x1xf32>
    %292 = arith.mulf %291, %148 : vector<2x1xf32>
    %293 = vector.broadcast %289 : f32 to vector<2x1xf32>
    %294 = arith.addf %293, %292 : vector<2x1xf32>
    %c2_125 = arith.constant 2 : index
    %c1_126 = arith.constant 1 : index
    %295 = memref.load %arg5[%c2_125, %c1_126] : memref<16x2xf32, #tpu.memory_space<smem>>
    %296 = vector.broadcast %295 : f32 to vector<2x1xf32>
    %297 = arith.mulf %296, %216 : vector<2x1xf32>
    %298 = arith.addf %294, %297 : vector<2x1xf32>
    %cst_127 = arith.constant 0.000000e+00 : f32
    %299 = vector.broadcast %cst_127 : f32 to vector<2x1xf32>
    %300 = arith.subf %299, %298 : vector<2x1xf32>
    %301 = math.exp %300 : vector<2x1xf32>
    %cst_128 = arith.constant 1.000000e+00 : f32
    %302 = vector.broadcast %cst_128 : f32 to vector<2x1xf32>
    %303 = arith.addf %302, %301 : vector<2x1xf32>
    %cst_129 = arith.constant 1.000000e+00 : f32
    %304 = vector.broadcast %cst_129 : f32 to vector<2x1xf32>
    %305 = arith.divf %304, %303 : vector<2x1xf32>
    %cst_130 = arith.constant 1.000000e+00 : f32
    %306 = vector.broadcast %cst_130 : f32 to vector<2x1xf32>
    %307 = arith.addf %306, %305 : vector<2x1xf32>
    %c2_131 = arith.constant 2 : index
    %308 = memref.load %arg7[%c2_131] : memref<16xf32, #tpu.memory_space<smem>>
    %309 = vector.broadcast %308 : f32 to vector<2x1xf32>
    %310 = arith.mulf %307, %309 : vector<2x1xf32>
    %c0_132 = arith.constant 0 : index
    %c512_133 = arith.constant 512 : index
    %311 = vector.load %arg1[%c0_132, %c512_133] : memref<2x4096xf32, #tpu.memory_space<vmem>>, vector<2x256xf32>
    %312 = vector.broadcast %310 : vector<2x1xf32> to vector<2x256xf32>
    %313 = arith.mulf %311, %312 : vector<2x256xf32>
    %c2_134 = arith.constant 2 : index
    %314 = memref.load %arg8[%c2_134] : memref<16xf32, #tpu.memory_space<smem>>
    %315 = vector.broadcast %314 : f32 to vector<2x256xf32>
    %316 = arith.addf %313, %315 : vector<2x256xf32>
    %cst_135 = arith.constant 0.000000e+00 : f32
    %317 = vector.broadcast %cst_135 : f32 to vector<2x256xf32>
    %318 = arith.subf %317, %316 : vector<2x256xf32>
    %319 = math.exp %318 : vector<2x256xf32>
    %cst_136 = arith.constant 1.000000e+00 : f32
    %320 = vector.broadcast %cst_136 : f32 to vector<2x256xf32>
    %321 = arith.addf %320, %319 : vector<2x256xf32>
    %cst_137 = arith.constant 1.000000e+00 : f32
    %322 = vector.broadcast %cst_137 : f32 to vector<2x256xf32>
    %323 = arith.divf %322, %321 : vector<2x256xf32>
    %c0_138 = arith.constant 0 : index
    %c512_139 = arith.constant 512 : index
    %324 = vector.load %arg9[%c0_138, %c512_139] : memref<2x4096xf32, #tpu.memory_space<vmem>>, vector<2x256xf32>
    tpu.vector_store %arg9[%c0_138, %c512_139], %323 {strides = array<i32>} : memref<2x4096xf32, #tpu.memory_space<vmem>>, vector<2x256xf32>,
    %c3_140 = arith.constant 3 : index
    %325 = memref.load %arg6[%c3_140] : memref<16xf32, #tpu.memory_space<smem>>
    %c3_141 = arith.constant 3 : index
    %c0_142 = arith.constant 0 : index
    %326 = memref.load %arg5[%c3_141, %c0_142] : memref<16x2xf32, #tpu.memory_space<smem>>
    %327 = vector.broadcast %326 : f32 to vector<2x1xf32>
    %328 = arith.mulf %327, %148 : vector<2x1xf32>
    %329 = vector.broadcast %325 : f32 to vector<2x1xf32>
    %330 = arith.addf %329, %328 : vector<2x1xf32>
    %c3_143 = arith.constant 3 : index
    %c1_144 = arith.constant 1 : index
    %331 = memref.load %arg5[%c3_143, %c1_144] : memref<16x2xf32, #tpu.memory_space<smem>>
    %332 = vector.broadcast %331 : f32 to vector<2x1xf32>
    %333 = arith.mulf %332, %216 : vector<2x1xf32>
    %334 = arith.addf %330, %333 : vector<2x1xf32>
    %cst_145 = arith.constant 0.000000e+00 : f32
    %335 = vector.broadcast %cst_145 : f32 to vector<2x1xf32>
    %336 = arith.subf %335, %334 : vector<2x1xf32>
    %337 = math.exp %336 : vector<2x1xf32>
    %cst_146 = arith.constant 1.000000e+00 : f32
    %338 = vector.broadcast %cst_146 : f32 to vector<2x1xf32>
    %339 = arith.addf %338, %337 : vector<2x1xf32>
    %cst_147 = arith.constant 1.000000e+00 : f32
    %340 = vector.broadcast %cst_147 : f32 to vector<2x1xf32>
    %341 = arith.divf %340, %339 : vector<2x1xf32>
    %cst_148 = arith.constant 1.000000e+00 : f32
    %342 = vector.broadcast %cst_148 : f32 to vector<2x1xf32>
    %343 = arith.addf %342, %341 : vector<2x1xf32>
    %c3_149 = arith.constant 3 : index
    %344 = memref.load %arg7[%c3_149] : memref<16xf32, #tpu.memory_space<smem>>
    %345 = vector.broadcast %344 : f32 to vector<2x1xf32>
    %346 = arith.mulf %343, %345 : vector<2x1xf32>
    %c0_150 = arith.constant 0 : index
    %c768_151 = arith.constant 768 : index
    %347 = vector.load %arg1[%c0_150, %c768_151] : memref<2x4096xf32, #tpu.memory_space<vmem>>, vector<2x256xf32>
    %348 = vector.broadcast %346 : vector<2x1xf32> to vector<2x256xf32>
    %349 = arith.mulf %347, %348 : vector<2x256xf32>
    %c3_152 = arith.constant 3 : index
    %350 = memref.load %arg8[%c3_152] : memref<16xf32, #tpu.memory_space<smem>>
    %351 = vector.broadcast %350 : f32 to vector<2x256xf32>
    %352 = arith.addf %349, %351 : vector<2x256xf32>
    %cst_153 = arith.constant 0.000000e+00 : f32
    %353 = vector.broadcast %cst_153 : f32 to vector<2x256xf32>
    %354 = arith.subf %353, %352 : vector<2x256xf32>
    %355 = math.exp %354 : vector<2x256xf32>
    %cst_154 = arith.constant 1.000000e+00 : f32
    %356 = vector.broadcast %cst_154 : f32 to vector<2x256xf32>
    %357 = arith.addf %356, %355 : vector<2x256xf32>
    %cst_155 = arith.constant 1.000000e+00 : f32
    %358 = vector.broadcast %cst_155 : f32 to vector<2x256xf32>
    %359 = arith.divf %358, %357 : vector<2x256xf32>
    %c0_156 = arith.constant 0 : index
    %c768_157 = arith.constant 768 : index
    %360 = vector.load %arg9[%c0_156, %c768_157] : memref<2x4096xf32, #tpu.memory_space<vmem>>, vector<2x256xf32>
    tpu.vector_store %arg9[%c0_156, %c768_157], %359 {strides = array<i32>} : memref<2x4096xf32, #tpu.memory_space<vmem>>, vector<2x256xf32>,
    %c4_158 = arith.constant 4 : index
    %361 = memref.load %arg6[%c4_158] : memref<16xf32, #tpu.memory_space<smem>>
    %c4_159 = arith.constant 4 : index
    %c0_160 = arith.constant 0 : index
    %362 = memref.load %arg5[%c4_159, %c0_160] : memref<16x2xf32, #tpu.memory_space<smem>>
    %363 = vector.broadcast %362 : f32 to vector<2x1xf32>
    %364 = arith.mulf %363, %148 : vector<2x1xf32>
    %365 = vector.broadcast %361 : f32 to vector<2x1xf32>
    %366 = arith.addf %365, %364 : vector<2x1xf32>
    %c4_161 = arith.constant 4 : index
    %c1_162 = arith.constant 1 : index
    %367 = memref.load %arg5[%c4_161, %c1_162] : memref<16x2xf32, #tpu.memory_space<smem>>
    %368 = vector.broadcast %367 : f32 to vector<2x1xf32>
    %369 = arith.mulf %368, %216 : vector<2x1xf32>
    %370 = arith.addf %366, %369 : vector<2x1xf32>
    %cst_163 = arith.constant 0.000000e+00 : f32
    %371 = vector.broadcast %cst_163 : f32 to vector<2x1xf32>
    %372 = arith.subf %371, %370 : vector<2x1xf32>
    %373 = math.exp %372 : vector<2x1xf32>
    %cst_164 = arith.constant 1.000000e+00 : f32
    %374 = vector.broadcast %cst_164 : f32 to vector<2x1xf32>
    %375 = arith.addf %374, %373 : vector<2x1xf32>
    %cst_165 = arith.constant 1.000000e+00 : f32
    %376 = vector.broadcast %cst_165 : f32 to vector<2x1xf32>
    %377 = arith.divf %376, %375 : vector<2x1xf32>
    %cst_166 = arith.constant 1.000000e+00 : f32
    %378 = vector.broadcast %cst_166 : f32 to vector<2x1xf32>
    %379 = arith.addf %378, %377 : vector<2x1xf32>
    %c4_167 = arith.constant 4 : index
    %380 = memref.load %arg7[%c4_167] : memref<16xf32, #tpu.memory_space<smem>>
    %381 = vector.broadcast %380 : f32 to vector<2x1xf32>
    %382 = arith.mulf %379, %381 : vector<2x1xf32>
    %c0_168 = arith.constant 0 : index
    %c1024_169 = arith.constant 1024 : index
    %383 = vector.load %arg1[%c0_168, %c1024_169] : memref<2x4096xf32, #tpu.memory_space<vmem>>, vector<2x256xf32>
    %384 = vector.broadcast %382 : vector<2x1xf32> to vector<2x256xf32>
    %385 = arith.mulf %383, %384 : vector<2x256xf32>
    %c4_170 = arith.constant 4 : index
    %386 = memref.load %arg8[%c4_170] : memref<16xf32, #tpu.memory_space<smem>>
    %387 = vector.broadcast %386 : f32 to vector<2x256xf32>
    %388 = arith.addf %385, %387 : vector<2x256xf32>
    %cst_171 = arith.constant 0.000000e+00 : f32
    %389 = vector.broadcast %cst_171 : f32 to vector<2x256xf32>
    %390 = arith.subf %389, %388 : vector<2x256xf32>
    %391 = math.exp %390 : vector<2x256xf32>
    %cst_172 = arith.constant 1.000000e+00 : f32
    %392 = vector.broadcast %cst_172 : f32 to vector<2x256xf32>
    %393 = arith.addf %392, %391 : vector<2x256xf32>
    %cst_173 = arith.constant 1.000000e+00 : f32
    %394 = vector.broadcast %cst_173 : f32 to vector<2x256xf32>
    %395 = arith.divf %394, %393 : vector<2x256xf32>
    %c0_174 = arith.constant 0 : index
    %c1024_175 = arith.constant 1024 : index
    %396 = vector.load %arg9[%c0_174, %c1024_175] : memref<2x4096xf32, #tpu.memory_space<vmem>>, vector<2x256xf32>
    tpu.vector_store %arg9[%c0_174, %c1024_175], %395 {strides = array<i32>} : memref<2x4096xf32, #tpu.memory_space<vmem>>, vector<2x256xf32>,
    %c5_176 = arith.constant 5 : index
    %397 = memref.load %arg6[%c5_176] : memref<16xf32, #tpu.memory_space<smem>>
    %c5_177 = arith.constant 5 : index
    %c0_178 = arith.constant 0 : index
    %398 = memref.load %arg5[%c5_177, %c0_178] : memref<16x2xf32, #tpu.memory_space<smem>>
    %399 = vector.broadcast %398 : f32 to vector<2x1xf32>
    %400 = arith.mulf %399, %148 : vector<2x1xf32>
    %401 = vector.broadcast %397 : f32 to vector<2x1xf32>
    %402 = arith.addf %401, %400 : vector<2x1xf32>
    %c5_179 = arith.constant 5 : index
    %c1_180 = arith.constant 1 : index
    %403 = memref.load %arg5[%c5_179, %c1_180] : memref<16x2xf32, #tpu.memory_space<smem>>
    %404 = vector.broadcast %403 : f32 to vector<2x1xf32>
    %405 = arith.mulf %404, %216 : vector<2x1xf32>
    %406 = arith.addf %402, %405 : vector<2x1xf32>
    %cst_181 = arith.constant 0.000000e+00 : f32
    %407 = vector.broadcast %cst_181 : f32 to vector<2x1xf32>
    %408 = arith.subf %407, %406 : vector<2x1xf32>
    %409 = math.exp %408 : vector<2x1xf32>
    %cst_182 = arith.constant 1.000000e+00 : f32
    %410 = vector.broadcast %cst_182 : f32 to vector<2x1xf32>
    %411 = arith.addf %410, %409 : vector<2x1xf32>
    %cst_183 = arith.constant 1.000000e+00 : f32
    %412 = vector.broadcast %cst_183 : f32 to vector<2x1xf32>
    %413 = arith.divf %412, %411 : vector<2x1xf32>
    %cst_184 = arith.constant 1.000000e+00 : f32
    %414 = vector.broadcast %cst_184 : f32 to vector<2x1xf32>
    %415 = arith.addf %414, %413 : vector<2x1xf32>
    %c5_185 = arith.constant 5 : index
    %416 = memref.load %arg7[%c5_185] : memref<16xf32, #tpu.memory_space<smem>>
    %417 = vector.broadcast %416 : f32 to vector<2x1xf32>
    %418 = arith.mulf %415, %417 : vector<2x1xf32>
    %c0_186 = arith.constant 0 : index
    %c1280_187 = arith.constant 1280 : index
    %419 = vector.load %arg1[%c0_186, %c1280_187] : memref<2x4096xf32, #tpu.memory_space<vmem>>, vector<2x256xf32>
    %420 = vector.broadcast %418 : vector<2x1xf32> to vector<2x256xf32>
    %421 = arith.mulf %419, %420 : vector<2x256xf32>
    %c5_188 = arith.constant 5 : index
    %422 = memref.load %arg8[%c5_188] : memref<16xf32, #tpu.memory_space<smem>>
    %423 = vector.broadcast %422 : f32 to vector<2x256xf32>
    %424 = arith.addf %421, %423 : vector<2x256xf32>
    %cst_189 = arith.constant 0.000000e+00 : f32
    %425 = vector.broadcast %cst_189 : f32 to vector<2x256xf32>
    %426 = arith.subf %425, %424 : vector<2x256xf32>
    %427 = math.exp %426 : vector<2x256xf32>
    %cst_190 = arith.constant 1.000000e+00 : f32
    %428 = vector.broadcast %cst_190 : f32 to vector<2x256xf32>
    %429 = arith.addf %428, %427 : vector<2x256xf32>
    %cst_191 = arith.constant 1.000000e+00 : f32
    %430 = vector.broadcast %cst_191 : f32 to vector<2x256xf32>
    %431 = arith.divf %430, %429 : vector<2x256xf32>
    %c0_192 = arith.constant 0 : index
    %c1280_193 = arith.constant 1280 : index
    %432 = vector.load %arg9[%c0_192, %c1280_193] : memref<2x4096xf32, #tpu.memory_space<vmem>>, vector<2x256xf32>
    tpu.vector_store %arg9[%c0_192, %c1280_193], %431 {strides = array<i32>} : memref<2x4096xf32, #tpu.memory_space<vmem>>, vector<2x256xf32>,
    %c6_194 = arith.constant 6 : index
    %433 = memref.load %arg6[%c6_194] : memref<16xf32, #tpu.memory_space<smem>>
    %c6_195 = arith.constant 6 : index
    %c0_196 = arith.constant 0 : index
    %434 = memref.load %arg5[%c6_195, %c0_196] : memref<16x2xf32, #tpu.memory_space<smem>>
    %435 = vector.broadcast %434 : f32 to vector<2x1xf32>
    %436 = arith.mulf %435, %148 : vector<2x1xf32>
    %437 = vector.broadcast %433 : f32 to vector<2x1xf32>
    %438 = arith.addf %437, %436 : vector<2x1xf32>
    %c6_197 = arith.constant 6 : index
    %c1_198 = arith.constant 1 : index
    %439 = memref.load %arg5[%c6_197, %c1_198] : memref<16x2xf32, #tpu.memory_space<smem>>
    %440 = vector.broadcast %439 : f32 to vector<2x1xf32>
    %441 = arith.mulf %440, %216 : vector<2x1xf32>
    %442 = arith.addf %438, %441 : vector<2x1xf32>
    %cst_199 = arith.constant 0.000000e+00 : f32
    %443 = vector.broadcast %cst_199 : f32 to vector<2x1xf32>
    %444 = arith.subf %443, %442 : vector<2x1xf32>
    %445 = math.exp %444 : vector<2x1xf32>
    %cst_200 = arith.constant 1.000000e+00 : f32
    %446 = vector.broadcast %cst_200 : f32 to vector<2x1xf32>
    %447 = arith.addf %446, %445 : vector<2x1xf32>
    %cst_201 = arith.constant 1.000000e+00 : f32
    %448 = vector.broadcast %cst_201 : f32 to vector<2x1xf32>
    %449 = arith.divf %448, %447 : vector<2x1xf32>
    %cst_202 = arith.constant 1.000000e+00 : f32
    %450 = vector.broadcast %cst_202 : f32 to vector<2x1xf32>
    %451 = arith.addf %450, %449 : vector<2x1xf32>
    %c6_203 = arith.constant 6 : index
    %452 = memref.load %arg7[%c6_203] : memref<16xf32, #tpu.memory_space<smem>>
    %453 = vector.broadcast %452 : f32 to vector<2x1xf32>
    %454 = arith.mulf %451, %453 : vector<2x1xf32>
    %c0_204 = arith.constant 0 : index
    %c1536_205 = arith.constant 1536 : index
    %455 = vector.load %arg1[%c0_204, %c1536_205] : memref<2x4096xf32, #tpu.memory_space<vmem>>, vector<2x256xf32>
    %456 = vector.broadcast %454 : vector<2x1xf32> to vector<2x256xf32>
    %457 = arith.mulf %455, %456 : vector<2x256xf32>
    %c6_206 = arith.constant 6 : index
    %458 = memref.load %arg8[%c6_206] : memref<16xf32, #tpu.memory_space<smem>>
    %459 = vector.broadcast %458 : f32 to vector<2x256xf32>
    %460 = arith.addf %457, %459 : vector<2x256xf32>
    %cst_207 = arith.constant 0.000000e+00 : f32
    %461 = vector.broadcast %cst_207 : f32 to vector<2x256xf32>
    %462 = arith.subf %461, %460 : vector<2x256xf32>
    %463 = math.exp %462 : vector<2x256xf32>
    %cst_208 = arith.constant 1.000000e+00 : f32
    %464 = vector.broadcast %cst_208 : f32 to vector<2x256xf32>
    %465 = arith.addf %464, %463 : vector<2x256xf32>
    %cst_209 = arith.constant 1.000000e+00 : f32
    %466 = vector.broadcast %cst_209 : f32 to vector<2x256xf32>
    %467 = arith.divf %466, %465 : vector<2x256xf32>
    %c0_210 = arith.constant 0 : index
    %c1536_211 = arith.constant 1536 : index
    %468 = vector.load %arg9[%c0_210, %c1536_211] : memref<2x4096xf32, #tpu.memory_space<vmem>>, vector<2x256xf32>
    tpu.vector_store %arg9[%c0_210, %c1536_211], %467 {strides = array<i32>} : memref<2x4096xf32, #tpu.memory_space<vmem>>, vector<2x256xf32>,
    %c7_212 = arith.constant 7 : index
    %469 = memref.load %arg6[%c7_212] : memref<16xf32, #tpu.memory_space<smem>>
    %c7_213 = arith.constant 7 : index
    %c0_214 = arith.constant 0 : index
    %470 = memref.load %arg5[%c7_213, %c0_214] : memref<16x2xf32, #tpu.memory_space<smem>>
    %471 = vector.broadcast %470 : f32 to vector<2x1xf32>
    %472 = arith.mulf %471, %148 : vector<2x1xf32>
    %473 = vector.broadcast %469 : f32 to vector<2x1xf32>
    %474 = arith.addf %473, %472 : vector<2x1xf32>
    %c7_215 = arith.constant 7 : index
    %c1_216 = arith.constant 1 : index
    %475 = memref.load %arg5[%c7_215, %c1_216] : memref<16x2xf32, #tpu.memory_space<smem>>
    %476 = vector.broadcast %475 : f32 to vector<2x1xf32>
    %477 = arith.mulf %476, %216 : vector<2x1xf32>
    %478 = arith.addf %474, %477 : vector<2x1xf32>
    %cst_217 = arith.constant 0.000000e+00 : f32
    %479 = vector.broadcast %cst_217 : f32 to vector<2x1xf32>
    %480 = arith.subf %479, %478 : vector<2x1xf32>
    %481 = math.exp %480 : vector<2x1xf32>
    %cst_218 = arith.constant 1.000000e+00 : f32
    %482 = vector.broadcast %cst_218 : f32 to vector<2x1xf32>
    %483 = arith.addf %482, %481 : vector<2x1xf32>
    %cst_219 = arith.constant 1.000000e+00 : f32
    %484 = vector.broadcast %cst_219 : f32 to vector<2x1xf32>
    %485 = arith.divf %484, %483 : vector<2x1xf32>
    %cst_220 = arith.constant 1.000000e+00 : f32
    %486 = vector.broadcast %cst_220 : f32 to vector<2x1xf32>
    %487 = arith.addf %486, %485 : vector<2x1xf32>
    %c7_221 = arith.constant 7 : index
    %488 = memref.load %arg7[%c7_221] : memref<16xf32, #tpu.memory_space<smem>>
    %489 = vector.broadcast %488 : f32 to vector<2x1xf32>
    %490 = arith.mulf %487, %489 : vector<2x1xf32>
    %c0_222 = arith.constant 0 : index
    %c1792_223 = arith.constant 1792 : index
    %491 = vector.load %arg1[%c0_222, %c1792_223] : memref<2x4096xf32, #tpu.memory_space<vmem>>, vector<2x256xf32>
    %492 = vector.broadcast %490 : vector<2x1xf32> to vector<2x256xf32>
    %493 = arith.mulf %491, %492 : vector<2x256xf32>
    %c7_224 = arith.constant 7 : index
    %494 = memref.load %arg8[%c7_224] : memref<16xf32, #tpu.memory_space<smem>>
    %495 = vector.broadcast %494 : f32 to vector<2x256xf32>
    %496 = arith.addf %493, %495 : vector<2x256xf32>
    %cst_225 = arith.constant 0.000000e+00 : f32
    %497 = vector.broadcast %cst_225 : f32 to vector<2x256xf32>
    %498 = arith.subf %497, %496 : vector<2x256xf32>
    %499 = math.exp %498 : vector<2x256xf32>
    %cst_226 = arith.constant 1.000000e+00 : f32
    %500 = vector.broadcast %cst_226 : f32 to vector<2x256xf32>
    %501 = arith.addf %500, %499 : vector<2x256xf32>
    %cst_227 = arith.constant 1.000000e+00 : f32
    %502 = vector.broadcast %cst_227 : f32 to vector<2x256xf32>
    %503 = arith.divf %502, %501 : vector<2x256xf32>
    %c0_228 = arith.constant 0 : index
    %c1792_229 = arith.constant 1792 : index
    %504 = vector.load %arg9[%c0_228, %c1792_229] : memref<2x4096xf32, #tpu.memory_space<vmem>>, vector<2x256xf32>
    tpu.vector_store %arg9[%c0_228, %c1792_229], %503 {strides = array<i32>} : memref<2x4096xf32, #tpu.memory_space<vmem>>, vector<2x256xf32>,
    %c8_230 = arith.constant 8 : index
    %505 = memref.load %arg6[%c8_230] : memref<16xf32, #tpu.memory_space<smem>>
    %c8_231 = arith.constant 8 : index
    %c0_232 = arith.constant 0 : index
    %506 = memref.load %arg5[%c8_231, %c0_232] : memref<16x2xf32, #tpu.memory_space<smem>>
    %507 = vector.broadcast %506 : f32 to vector<2x1xf32>
    %508 = arith.mulf %507, %148 : vector<2x1xf32>
    %509 = vector.broadcast %505 : f32 to vector<2x1xf32>
    %510 = arith.addf %509, %508 : vector<2x1xf32>
    %c8_233 = arith.constant 8 : index
    %c1_234 = arith.constant 1 : index
    %511 = memref.load %arg5[%c8_233, %c1_234] : memref<16x2xf32, #tpu.memory_space<smem>>
    %512 = vector.broadcast %511 : f32 to vector<2x1xf32>
    %513 = arith.mulf %512, %216 : vector<2x1xf32>
    %514 = arith.addf %510, %513 : vector<2x1xf32>
    %cst_235 = arith.constant 0.000000e+00 : f32
    %515 = vector.broadcast %cst_235 : f32 to vector<2x1xf32>
    %516 = arith.subf %515, %514 : vector<2x1xf32>
    %517 = math.exp %516 : vector<2x1xf32>
    %cst_236 = arith.constant 1.000000e+00 : f32
    %518 = vector.broadcast %cst_236 : f32 to vector<2x1xf32>
    %519 = arith.addf %518, %517 : vector<2x1xf32>
    %cst_237 = arith.constant 1.000000e+00 : f32
    %520 = vector.broadcast %cst_237 : f32 to vector<2x1xf32>
    %521 = arith.divf %520, %519 : vector<2x1xf32>
    %cst_238 = arith.constant 1.000000e+00 : f32
    %522 = vector.broadcast %cst_238 : f32 to vector<2x1xf32>
    %523 = arith.addf %522, %521 : vector<2x1xf32>
    %c8_239 = arith.constant 8 : index
    %524 = memref.load %arg7[%c8_239] : memref<16xf32, #tpu.memory_space<smem>>
    %525 = vector.broadcast %524 : f32 to vector<2x1xf32>
    %526 = arith.mulf %523, %525 : vector<2x1xf32>
    %c0_240 = arith.constant 0 : index
    %c2048_241 = arith.constant 2048 : index
    %527 = vector.load %arg1[%c0_240, %c2048_241] : memref<2x4096xf32, #tpu.memory_space<vmem>>, vector<2x256xf32>
    %528 = vector.broadcast %526 : vector<2x1xf32> to vector<2x256xf32>
    %529 = arith.mulf %527, %528 : vector<2x256xf32>
    %c8_242 = arith.constant 8 : index
    %530 = memref.load %arg8[%c8_242] : memref<16xf32, #tpu.memory_space<smem>>
    %531 = vector.broadcast %530 : f32 to vector<2x256xf32>
    %532 = arith.addf %529, %531 : vector<2x256xf32>
    %cst_243 = arith.constant 0.000000e+00 : f32
    %533 = vector.broadcast %cst_243 : f32 to vector<2x256xf32>
    %534 = arith.subf %533, %532 : vector<2x256xf32>
    %535 = math.exp %534 : vector<2x256xf32>
    %cst_244 = arith.constant 1.000000e+00 : f32
    %536 = vector.broadcast %cst_244 : f32 to vector<2x256xf32>
    %537 = arith.addf %536, %535 : vector<2x256xf32>
    %cst_245 = arith.constant 1.000000e+00 : f32
    %538 = vector.broadcast %cst_245 : f32 to vector<2x256xf32>
    %539 = arith.divf %538, %537 : vector<2x256xf32>
    %c0_246 = arith.constant 0 : index
    %c2048_247 = arith.constant 2048 : index
    %540 = vector.load %arg9[%c0_246, %c2048_247] : memref<2x4096xf32, #tpu.memory_space<vmem>>, vector<2x256xf32>
    tpu.vector_store %arg9[%c0_246, %c2048_247], %539 {strides = array<i32>} : memref<2x4096xf32, #tpu.memory_space<vmem>>, vector<2x256xf32>,
    %c9_248 = arith.constant 9 : index
    %541 = memref.load %arg6[%c9_248] : memref<16xf32, #tpu.memory_space<smem>>
    %c9_249 = arith.constant 9 : index
    %c0_250 = arith.constant 0 : index
    %542 = memref.load %arg5[%c9_249, %c0_250] : memref<16x2xf32, #tpu.memory_space<smem>>
    %543 = vector.broadcast %542 : f32 to vector<2x1xf32>
    %544 = arith.mulf %543, %148 : vector<2x1xf32>
    %545 = vector.broadcast %541 : f32 to vector<2x1xf32>
    %546 = arith.addf %545, %544 : vector<2x1xf32>
    %c9_251 = arith.constant 9 : index
    %c1_252 = arith.constant 1 : index
    %547 = memref.load %arg5[%c9_251, %c1_252] : memref<16x2xf32, #tpu.memory_space<smem>>
    %548 = vector.broadcast %547 : f32 to vector<2x1xf32>
    %549 = arith.mulf %548, %216 : vector<2x1xf32>
    %550 = arith.addf %546, %549 : vector<2x1xf32>
    %cst_253 = arith.constant 0.000000e+00 : f32
    %551 = vector.broadcast %cst_253 : f32 to vector<2x1xf32>
    %552 = arith.subf %551, %550 : vector<2x1xf32>
    %553 = math.exp %552 : vector<2x1xf32>
    %cst_254 = arith.constant 1.000000e+00 : f32
    %554 = vector.broadcast %cst_254 : f32 to vector<2x1xf32>
    %555 = arith.addf %554, %553 : vector<2x1xf32>
    %cst_255 = arith.constant 1.000000e+00 : f32
    %556 = vector.broadcast %cst_255 : f32 to vector<2x1xf32>
    %557 = arith.divf %556, %555 : vector<2x1xf32>
    %cst_256 = arith.constant 1.000000e+00 : f32
    %558 = vector.broadcast %cst_256 : f32 to vector<2x1xf32>
    %559 = arith.addf %558, %557 : vector<2x1xf32>
    %c9_257 = arith.constant 9 : index
    %560 = memref.load %arg7[%c9_257] : memref<16xf32, #tpu.memory_space<smem>>
    %561 = vector.broadcast %560 : f32 to vector<2x1xf32>
    %562 = arith.mulf %559, %561 : vector<2x1xf32>
    %c0_258 = arith.constant 0 : index
    %c2304_259 = arith.constant 2304 : index
    %563 = vector.load %arg1[%c0_258, %c2304_259] : memref<2x4096xf32, #tpu.memory_space<vmem>>, vector<2x256xf32>
    %564 = vector.broadcast %562 : vector<2x1xf32> to vector<2x256xf32>
    %565 = arith.mulf %563, %564 : vector<2x256xf32>
    %c9_260 = arith.constant 9 : index
    %566 = memref.load %arg8[%c9_260] : memref<16xf32, #tpu.memory_space<smem>>
    %567 = vector.broadcast %566 : f32 to vector<2x256xf32>
    %568 = arith.addf %565, %567 : vector<2x256xf32>
    %cst_261 = arith.constant 0.000000e+00 : f32
    %569 = vector.broadcast %cst_261 : f32 to vector<2x256xf32>
    %570 = arith.subf %569, %568 : vector<2x256xf32>
    %571 = math.exp %570 : vector<2x256xf32>
    %cst_262 = arith.constant 1.000000e+00 : f32
    %572 = vector.broadcast %cst_262 : f32 to vector<2x256xf32>
    %573 = arith.addf %572, %571 : vector<2x256xf32>
    %cst_263 = arith.constant 1.000000e+00 : f32
    %574 = vector.broadcast %cst_263 : f32 to vector<2x256xf32>
    %575 = arith.divf %574, %573 : vector<2x256xf32>
    %c0_264 = arith.constant 0 : index
    %c2304_265 = arith.constant 2304 : index
    %576 = vector.load %arg9[%c0_264, %c2304_265] : memref<2x4096xf32, #tpu.memory_space<vmem>>, vector<2x256xf32>
    tpu.vector_store %arg9[%c0_264, %c2304_265], %575 {strides = array<i32>} : memref<2x4096xf32, #tpu.memory_space<vmem>>, vector<2x256xf32>,
    %c10_266 = arith.constant 10 : index
    %577 = memref.load %arg6[%c10_266] : memref<16xf32, #tpu.memory_space<smem>>
    %c10_267 = arith.constant 10 : index
    %c0_268 = arith.constant 0 : index
    %578 = memref.load %arg5[%c10_267, %c0_268] : memref<16x2xf32, #tpu.memory_space<smem>>
    %579 = vector.broadcast %578 : f32 to vector<2x1xf32>
    %580 = arith.mulf %579, %148 : vector<2x1xf32>
    %581 = vector.broadcast %577 : f32 to vector<2x1xf32>
    %582 = arith.addf %581, %580 : vector<2x1xf32>
    %c10_269 = arith.constant 10 : index
    %c1_270 = arith.constant 1 : index
    %583 = memref.load %arg5[%c10_269, %c1_270] : memref<16x2xf32, #tpu.memory_space<smem>>
    %584 = vector.broadcast %583 : f32 to vector<2x1xf32>
    %585 = arith.mulf %584, %216 : vector<2x1xf32>
    %586 = arith.addf %582, %585 : vector<2x1xf32>
    %cst_271 = arith.constant 0.000000e+00 : f32
    %587 = vector.broadcast %cst_271 : f32 to vector<2x1xf32>
    %588 = arith.subf %587, %586 : vector<2x1xf32>
    %589 = math.exp %588 : vector<2x1xf32>
    %cst_272 = arith.constant 1.000000e+00 : f32
    %590 = vector.broadcast %cst_272 : f32 to vector<2x1xf32>
    %591 = arith.addf %590, %589 : vector<2x1xf32>
    %cst_273 = arith.constant 1.000000e+00 : f32
    %592 = vector.broadcast %cst_273 : f32 to vector<2x1xf32>
    %593 = arith.divf %592, %591 : vector<2x1xf32>
    %cst_274 = arith.constant 1.000000e+00 : f32
    %594 = vector.broadcast %cst_274 : f32 to vector<2x1xf32>
    %595 = arith.addf %594, %593 : vector<2x1xf32>
    %c10_275 = arith.constant 10 : index
    %596 = memref.load %arg7[%c10_275] : memref<16xf32, #tpu.memory_space<smem>>
    %597 = vector.broadcast %596 : f32 to vector<2x1xf32>
    %598 = arith.mulf %595, %597 : vector<2x1xf32>
    %c0_276 = arith.constant 0 : index
    %c2560_277 = arith.constant 2560 : index
    %599 = vector.load %arg1[%c0_276, %c2560_277] : memref<2x4096xf32, #tpu.memory_space<vmem>>, vector<2x256xf32>
    %600 = vector.broadcast %598 : vector<2x1xf32> to vector<2x256xf32>
    %601 = arith.mulf %599, %600 : vector<2x256xf32>
    %c10_278 = arith.constant 10 : index
    %602 = memref.load %arg8[%c10_278] : memref<16xf32, #tpu.memory_space<smem>>
    %603 = vector.broadcast %602 : f32 to vector<2x256xf32>
    %604 = arith.addf %601, %603 : vector<2x256xf32>
    %cst_279 = arith.constant 0.000000e+00 : f32
    %605 = vector.broadcast %cst_279 : f32 to vector<2x256xf32>
    %606 = arith.subf %605, %604 : vector<2x256xf32>
    %607 = math.exp %606 : vector<2x256xf32>
    %cst_280 = arith.constant 1.000000e+00 : f32
    %608 = vector.broadcast %cst_280 : f32 to vector<2x256xf32>
    %609 = arith.addf %608, %607 : vector<2x256xf32>
    %cst_281 = arith.constant 1.000000e+00 : f32
    %610 = vector.broadcast %cst_281 : f32 to vector<2x256xf32>
    %611 = arith.divf %610, %609 : vector<2x256xf32>
    %c0_282 = arith.constant 0 : index
    %c2560_283 = arith.constant 2560 : index
    %612 = vector.load %arg9[%c0_282, %c2560_283] : memref<2x4096xf32, #tpu.memory_space<vmem>>, vector<2x256xf32>
    tpu.vector_store %arg9[%c0_282, %c2560_283], %611 {strides = array<i32>} : memref<2x4096xf32, #tpu.memory_space<vmem>>, vector<2x256xf32>,
    %c11_284 = arith.constant 11 : index
    %613 = memref.load %arg6[%c11_284] : memref<16xf32, #tpu.memory_space<smem>>
    %c11_285 = arith.constant 11 : index
    %c0_286 = arith.constant 0 : index
    %614 = memref.load %arg5[%c11_285, %c0_286] : memref<16x2xf32, #tpu.memory_space<smem>>
    %615 = vector.broadcast %614 : f32 to vector<2x1xf32>
    %616 = arith.mulf %615, %148 : vector<2x1xf32>
    %617 = vector.broadcast %613 : f32 to vector<2x1xf32>
    %618 = arith.addf %617, %616 : vector<2x1xf32>
    %c11_287 = arith.constant 11 : index
    %c1_288 = arith.constant 1 : index
    %619 = memref.load %arg5[%c11_287, %c1_288] : memref<16x2xf32, #tpu.memory_space<smem>>
    %620 = vector.broadcast %619 : f32 to vector<2x1xf32>
    %621 = arith.mulf %620, %216 : vector<2x1xf32>
    %622 = arith.addf %618, %621 : vector<2x1xf32>
    %cst_289 = arith.constant 0.000000e+00 : f32
    %623 = vector.broadcast %cst_289 : f32 to vector<2x1xf32>
    %624 = arith.subf %623, %622 : vector<2x1xf32>
    %625 = math.exp %624 : vector<2x1xf32>
    %cst_290 = arith.constant 1.000000e+00 : f32
    %626 = vector.broadcast %cst_290 : f32 to vector<2x1xf32>
    %627 = arith.addf %626, %625 : vector<2x1xf32>
    %cst_291 = arith.constant 1.000000e+00 : f32
    %628 = vector.broadcast %cst_291 : f32 to vector<2x1xf32>
    %629 = arith.divf %628, %627 : vector<2x1xf32>
    %cst_292 = arith.constant 1.000000e+00 : f32
    %630 = vector.broadcast %cst_292 : f32 to vector<2x1xf32>
    %631 = arith.addf %630, %629 : vector<2x1xf32>
    %c11_293 = arith.constant 11 : index
    %632 = memref.load %arg7[%c11_293] : memref<16xf32, #tpu.memory_space<smem>>
    %633 = vector.broadcast %632 : f32 to vector<2x1xf32>
    %634 = arith.mulf %631, %633 : vector<2x1xf32>
    %c0_294 = arith.constant 0 : index
    %c2816_295 = arith.constant 2816 : index
    %635 = vector.load %arg1[%c0_294, %c2816_295] : memref<2x4096xf32, #tpu.memory_space<vmem>>, vector<2x256xf32>
    %636 = vector.broadcast %634 : vector<2x1xf32> to vector<2x256xf32>
    %637 = arith.mulf %635, %636 : vector<2x256xf32>
    %c11_296 = arith.constant 11 : index
    %638 = memref.load %arg8[%c11_296] : memref<16xf32, #tpu.memory_space<smem>>
    %639 = vector.broadcast %638 : f32 to vector<2x256xf32>
    %640 = arith.addf %637, %639 : vector<2x256xf32>
    %cst_297 = arith.constant 0.000000e+00 : f32
    %641 = vector.broadcast %cst_297 : f32 to vector<2x256xf32>
    %642 = arith.subf %641, %640 : vector<2x256xf32>
    %643 = math.exp %642 : vector<2x256xf32>
    %cst_298 = arith.constant 1.000000e+00 : f32
    %644 = vector.broadcast %cst_298 : f32 to vector<2x256xf32>
    %645 = arith.addf %644, %643 : vector<2x256xf32>
    %cst_299 = arith.constant 1.000000e+00 : f32
    %646 = vector.broadcast %cst_299 : f32 to vector<2x256xf32>
    %647 = arith.divf %646, %645 : vector<2x256xf32>
    %c0_300 = arith.constant 0 : index
    %c2816_301 = arith.constant 2816 : index
    %648 = vector.load %arg9[%c0_300, %c2816_301] : memref<2x4096xf32, #tpu.memory_space<vmem>>, vector<2x256xf32>
    tpu.vector_store %arg9[%c0_300, %c2816_301], %647 {strides = array<i32>} : memref<2x4096xf32, #tpu.memory_space<vmem>>, vector<2x256xf32>,
    %c12_302 = arith.constant 12 : index
    %649 = memref.load %arg6[%c12_302] : memref<16xf32, #tpu.memory_space<smem>>
    %c12_303 = arith.constant 12 : index
    %c0_304 = arith.constant 0 : index
    %650 = memref.load %arg5[%c12_303, %c0_304] : memref<16x2xf32, #tpu.memory_space<smem>>
    %651 = vector.broadcast %650 : f32 to vector<2x1xf32>
    %652 = arith.mulf %651, %148 : vector<2x1xf32>
    %653 = vector.broadcast %649 : f32 to vector<2x1xf32>
    %654 = arith.addf %653, %652 : vector<2x1xf32>
    %c12_305 = arith.constant 12 : index
    %c1_306 = arith.constant 1 : index
    %655 = memref.load %arg5[%c12_305, %c1_306] : memref<16x2xf32, #tpu.memory_space<smem>>
    %656 = vector.broadcast %655 : f32 to vector<2x1xf32>
    %657 = arith.mulf %656, %216 : vector<2x1xf32>
    %658 = arith.addf %654, %657 : vector<2x1xf32>
    %cst_307 = arith.constant 0.000000e+00 : f32
    %659 = vector.broadcast %cst_307 : f32 to vector<2x1xf32>
    %660 = arith.subf %659, %658 : vector<2x1xf32>
    %661 = math.exp %660 : vector<2x1xf32>
    %cst_308 = arith.constant 1.000000e+00 : f32
    %662 = vector.broadcast %cst_308 : f32 to vector<2x1xf32>
    %663 = arith.addf %662, %661 : vector<2x1xf32>
    %cst_309 = arith.constant 1.000000e+00 : f32
    %664 = vector.broadcast %cst_309 : f32 to vector<2x1xf32>
    %665 = arith.divf %664, %663 : vector<2x1xf32>
    %cst_310 = arith.constant 1.000000e+00 : f32
    %666 = vector.broadcast %cst_310 : f32 to vector<2x1xf32>
    %667 = arith.addf %666, %665 : vector<2x1xf32>
    %c12_311 = arith.constant 12 : index
    %668 = memref.load %arg7[%c12_311] : memref<16xf32, #tpu.memory_space<smem>>
    %669 = vector.broadcast %668 : f32 to vector<2x1xf32>
    %670 = arith.mulf %667, %669 : vector<2x1xf32>
    %c0_312 = arith.constant 0 : index
    %c3072_313 = arith.constant 3072 : index
    %671 = vector.load %arg1[%c0_312, %c3072_313] : memref<2x4096xf32, #tpu.memory_space<vmem>>, vector<2x256xf32>
    %672 = vector.broadcast %670 : vector<2x1xf32> to vector<2x256xf32>
    %673 = arith.mulf %671, %672 : vector<2x256xf32>
    %c12_314 = arith.constant 12 : index
    %674 = memref.load %arg8[%c12_314] : memref<16xf32, #tpu.memory_space<smem>>
    %675 = vector.broadcast %674 : f32 to vector<2x256xf32>
    %676 = arith.addf %673, %675 : vector<2x256xf32>
    %cst_315 = arith.constant 0.000000e+00 : f32
    %677 = vector.broadcast %cst_315 : f32 to vector<2x256xf32>
    %678 = arith.subf %677, %676 : vector<2x256xf32>
    %679 = math.exp %678 : vector<2x256xf32>
    %cst_316 = arith.constant 1.000000e+00 : f32
    %680 = vector.broadcast %cst_316 : f32 to vector<2x256xf32>
    %681 = arith.addf %680, %679 : vector<2x256xf32>
    %cst_317 = arith.constant 1.000000e+00 : f32
    %682 = vector.broadcast %cst_317 : f32 to vector<2x256xf32>
    %683 = arith.divf %682, %681 : vector<2x256xf32>
    %c0_318 = arith.constant 0 : index
    %c3072_319 = arith.constant 3072 : index
    %684 = vector.load %arg9[%c0_318, %c3072_319] : memref<2x4096xf32, #tpu.memory_space<vmem>>, vector<2x256xf32>
    tpu.vector_store %arg9[%c0_318, %c3072_319], %683 {strides = array<i32>} : memref<2x4096xf32, #tpu.memory_space<vmem>>, vector<2x256xf32>,
    %c13_320 = arith.constant 13 : index
    %685 = memref.load %arg6[%c13_320] : memref<16xf32, #tpu.memory_space<smem>>
    %c13_321 = arith.constant 13 : index
    %c0_322 = arith.constant 0 : index
    %686 = memref.load %arg5[%c13_321, %c0_322] : memref<16x2xf32, #tpu.memory_space<smem>>
    %687 = vector.broadcast %686 : f32 to vector<2x1xf32>
    %688 = arith.mulf %687, %148 : vector<2x1xf32>
    %689 = vector.broadcast %685 : f32 to vector<2x1xf32>
    %690 = arith.addf %689, %688 : vector<2x1xf32>
    %c13_323 = arith.constant 13 : index
    %c1_324 = arith.constant 1 : index
    %691 = memref.load %arg5[%c13_323, %c1_324] : memref<16x2xf32, #tpu.memory_space<smem>>
    %692 = vector.broadcast %691 : f32 to vector<2x1xf32>
    %693 = arith.mulf %692, %216 : vector<2x1xf32>
    %694 = arith.addf %690, %693 : vector<2x1xf32>
    %cst_325 = arith.constant 0.000000e+00 : f32
    %695 = vector.broadcast %cst_325 : f32 to vector<2x1xf32>
    %696 = arith.subf %695, %694 : vector<2x1xf32>
    %697 = math.exp %696 : vector<2x1xf32>
    %cst_326 = arith.constant 1.000000e+00 : f32
    %698 = vector.broadcast %cst_326 : f32 to vector<2x1xf32>
    %699 = arith.addf %698, %697 : vector<2x1xf32>
    %cst_327 = arith.constant 1.000000e+00 : f32
    %700 = vector.broadcast %cst_327 : f32 to vector<2x1xf32>
    %701 = arith.divf %700, %699 : vector<2x1xf32>
    %cst_328 = arith.constant 1.000000e+00 : f32
    %702 = vector.broadcast %cst_328 : f32 to vector<2x1xf32>
    %703 = arith.addf %702, %701 : vector<2x1xf32>
    %c13_329 = arith.constant 13 : index
    %704 = memref.load %arg7[%c13_329] : memref<16xf32, #tpu.memory_space<smem>>
    %705 = vector.broadcast %704 : f32 to vector<2x1xf32>
    %706 = arith.mulf %703, %705 : vector<2x1xf32>
    %c0_330 = arith.constant 0 : index
    %c3328_331 = arith.constant 3328 : index
    %707 = vector.load %arg1[%c0_330, %c3328_331] : memref<2x4096xf32, #tpu.memory_space<vmem>>, vector<2x256xf32>
    %708 = vector.broadcast %706 : vector<2x1xf32> to vector<2x256xf32>
    %709 = arith.mulf %707, %708 : vector<2x256xf32>
    %c13_332 = arith.constant 13 : index
    %710 = memref.load %arg8[%c13_332] : memref<16xf32, #tpu.memory_space<smem>>
    %711 = vector.broadcast %710 : f32 to vector<2x256xf32>
    %712 = arith.addf %709, %711 : vector<2x256xf32>
    %cst_333 = arith.constant 0.000000e+00 : f32
    %713 = vector.broadcast %cst_333 : f32 to vector<2x256xf32>
    %714 = arith.subf %713, %712 : vector<2x256xf32>
    %715 = math.exp %714 : vector<2x256xf32>
    %cst_334 = arith.constant 1.000000e+00 : f32
    %716 = vector.broadcast %cst_334 : f32 to vector<2x256xf32>
    %717 = arith.addf %716, %715 : vector<2x256xf32>
    %cst_335 = arith.constant 1.000000e+00 : f32
    %718 = vector.broadcast %cst_335 : f32 to vector<2x256xf32>
    %719 = arith.divf %718, %717 : vector<2x256xf32>
    %c0_336 = arith.constant 0 : index
    %c3328_337 = arith.constant 3328 : index
    %720 = vector.load %arg9[%c0_336, %c3328_337] : memref<2x4096xf32, #tpu.memory_space<vmem>>, vector<2x256xf32>
    tpu.vector_store %arg9[%c0_336, %c3328_337], %719 {strides = array<i32>} : memref<2x4096xf32, #tpu.memory_space<vmem>>, vector<2x256xf32>,
    %c14_338 = arith.constant 14 : index
    %721 = memref.load %arg6[%c14_338] : memref<16xf32, #tpu.memory_space<smem>>
    %c14_339 = arith.constant 14 : index
    %c0_340 = arith.constant 0 : index
    %722 = memref.load %arg5[%c14_339, %c0_340] : memref<16x2xf32, #tpu.memory_space<smem>>
    %723 = vector.broadcast %722 : f32 to vector<2x1xf32>
    %724 = arith.mulf %723, %148 : vector<2x1xf32>
    %725 = vector.broadcast %721 : f32 to vector<2x1xf32>
    %726 = arith.addf %725, %724 : vector<2x1xf32>
    %c14_341 = arith.constant 14 : index
    %c1_342 = arith.constant 1 : index
    %727 = memref.load %arg5[%c14_341, %c1_342] : memref<16x2xf32, #tpu.memory_space<smem>>
    %728 = vector.broadcast %727 : f32 to vector<2x1xf32>
    %729 = arith.mulf %728, %216 : vector<2x1xf32>
    %730 = arith.addf %726, %729 : vector<2x1xf32>
    %cst_343 = arith.constant 0.000000e+00 : f32
    %731 = vector.broadcast %cst_343 : f32 to vector<2x1xf32>
    %732 = arith.subf %731, %730 : vector<2x1xf32>
    %733 = math.exp %732 : vector<2x1xf32>
    %cst_344 = arith.constant 1.000000e+00 : f32
    %734 = vector.broadcast %cst_344 : f32 to vector<2x1xf32>
    %735 = arith.addf %734, %733 : vector<2x1xf32>
    %cst_345 = arith.constant 1.000000e+00 : f32
    %736 = vector.broadcast %cst_345 : f32 to vector<2x1xf32>
    %737 = arith.divf %736, %735 : vector<2x1xf32>
    %cst_346 = arith.constant 1.000000e+00 : f32
    %738 = vector.broadcast %cst_346 : f32 to vector<2x1xf32>
    %739 = arith.addf %738, %737 : vector<2x1xf32>
    %c14_347 = arith.constant 14 : index
    %740 = memref.load %arg7[%c14_347] : memref<16xf32, #tpu.memory_space<smem>>
    %741 = vector.broadcast %740 : f32 to vector<2x1xf32>
    %742 = arith.mulf %739, %741 : vector<2x1xf32>
    %c0_348 = arith.constant 0 : index
    %c3584_349 = arith.constant 3584 : index
    %743 = vector.load %arg1[%c0_348, %c3584_349] : memref<2x4096xf32, #tpu.memory_space<vmem>>, vector<2x256xf32>
    %744 = vector.broadcast %742 : vector<2x1xf32> to vector<2x256xf32>
    %745 = arith.mulf %743, %744 : vector<2x256xf32>
    %c14_350 = arith.constant 14 : index
    %746 = memref.load %arg8[%c14_350] : memref<16xf32, #tpu.memory_space<smem>>
    %747 = vector.broadcast %746 : f32 to vector<2x256xf32>
    %748 = arith.addf %745, %747 : vector<2x256xf32>
    %cst_351 = arith.constant 0.000000e+00 : f32
    %749 = vector.broadcast %cst_351 : f32 to vector<2x256xf32>
    %750 = arith.subf %749, %748 : vector<2x256xf32>
    %751 = math.exp %750 : vector<2x256xf32>
    %cst_352 = arith.constant 1.000000e+00 : f32
    %752 = vector.broadcast %cst_352 : f32 to vector<2x256xf32>
    %753 = arith.addf %752, %751 : vector<2x256xf32>
    %cst_353 = arith.constant 1.000000e+00 : f32
    %754 = vector.broadcast %cst_353 : f32 to vector<2x256xf32>
    %755 = arith.divf %754, %753 : vector<2x256xf32>
    %c0_354 = arith.constant 0 : index
    %c3584_355 = arith.constant 3584 : index
    %756 = vector.load %arg9[%c0_354, %c3584_355] : memref<2x4096xf32, #tpu.memory_space<vmem>>, vector<2x256xf32>
    tpu.vector_store %arg9[%c0_354, %c3584_355], %755 {strides = array<i32>} : memref<2x4096xf32, #tpu.memory_space<vmem>>, vector<2x256xf32>,
    %c15_356 = arith.constant 15 : index
    %757 = memref.load %arg6[%c15_356] : memref<16xf32, #tpu.memory_space<smem>>
    %c15_357 = arith.constant 15 : index
    %c0_358 = arith.constant 0 : index
    %758 = memref.load %arg5[%c15_357, %c0_358] : memref<16x2xf32, #tpu.memory_space<smem>>
    %759 = vector.broadcast %758 : f32 to vector<2x1xf32>
    %760 = arith.mulf %759, %148 : vector<2x1xf32>
    %761 = vector.broadcast %757 : f32 to vector<2x1xf32>
    %762 = arith.addf %761, %760 : vector<2x1xf32>
    %c15_359 = arith.constant 15 : index
    %c1_360 = arith.constant 1 : index
    %763 = memref.load %arg5[%c15_359, %c1_360] : memref<16x2xf32, #tpu.memory_space<smem>>
    %764 = vector.broadcast %763 : f32 to vector<2x1xf32>
    %765 = arith.mulf %764, %216 : vector<2x1xf32>
    %766 = arith.addf %762, %765 : vector<2x1xf32>
    %cst_361 = arith.constant 0.000000e+00 : f32
    %767 = vector.broadcast %cst_361 : f32 to vector<2x1xf32>
    %768 = arith.subf %767, %766 : vector<2x1xf32>
    %769 = math.exp %768 : vector<2x1xf32>
    %cst_362 = arith.constant 1.000000e+00 : f32
    %770 = vector.broadcast %cst_362 : f32 to vector<2x1xf32>
    %771 = arith.addf %770, %769 : vector<2x1xf32>
    %cst_363 = arith.constant 1.000000e+00 : f32
    %772 = vector.broadcast %cst_363 : f32 to vector<2x1xf32>
    %773 = arith.divf %772, %771 : vector<2x1xf32>
    %cst_364 = arith.constant 1.000000e+00 : f32
    %774 = vector.broadcast %cst_364 : f32 to vector<2x1xf32>
    %775 = arith.addf %774, %773 : vector<2x1xf32>
    %c15_365 = arith.constant 15 : index
    %776 = memref.load %arg7[%c15_365] : memref<16xf32, #tpu.memory_space<smem>>
    %777 = vector.broadcast %776 : f32 to vector<2x1xf32>
    %778 = arith.mulf %775, %777 : vector<2x1xf32>
    %c0_366 = arith.constant 0 : index
    %c3840_367 = arith.constant 3840 : index
    %779 = vector.load %arg1[%c0_366, %c3840_367] : memref<2x4096xf32, #tpu.memory_space<vmem>>, vector<2x256xf32>
    %780 = vector.broadcast %778 : vector<2x1xf32> to vector<2x256xf32>
    %781 = arith.mulf %779, %780 : vector<2x256xf32>
    %c15_368 = arith.constant 15 : index
    %782 = memref.load %arg8[%c15_368] : memref<16xf32, #tpu.memory_space<smem>>
    %783 = vector.broadcast %782 : f32 to vector<2x256xf32>
    %784 = arith.addf %781, %783 : vector<2x256xf32>
    %cst_369 = arith.constant 0.000000e+00 : f32
    %785 = vector.broadcast %cst_369 : f32 to vector<2x256xf32>
    %786 = arith.subf %785, %784 : vector<2x256xf32>
    %787 = math.exp %786 : vector<2x256xf32>
    %cst_370 = arith.constant 1.000000e+00 : f32
    %788 = vector.broadcast %cst_370 : f32 to vector<2x256xf32>
    %789 = arith.addf %788, %787 : vector<2x256xf32>
    %cst_371 = arith.constant 1.000000e+00 : f32
    %790 = vector.broadcast %cst_371 : f32 to vector<2x256xf32>
    %791 = arith.divf %790, %789 : vector<2x256xf32>
    %c0_372 = arith.constant 0 : index
    %c3840_373 = arith.constant 3840 : index
    %792 = vector.load %arg9[%c0_372, %c3840_373] : memref<2x4096xf32, #tpu.memory_space<vmem>>, vector<2x256xf32>
    tpu.vector_store %arg9[%c0_372, %c3840_373], %791 {strides = array<i32>} : memref<2x4096xf32, #tpu.memory_space<vmem>>, vector<2x256xf32>,
    return
  }
  func.func @transform_0(%arg0: i32) -> (i32, i32) {
    %c0_i32 = arith.constant 0 : i32
    %c0_i32_0 = arith.constant 0 : i32
    return %arg0, %c0_i32 : i32, i32
  }
  func.func @transform_1(%arg0: i32) -> (i32, i32) {
    %c0_i32 = arith.constant 0 : i32
    %c0_i32_0 = arith.constant 0 : i32
    %c0_i32_1 = arith.constant 0 : i32
    return %c0_i32, %c0_i32_0 : i32, i32
  }
  func.func @transform_2(%arg0: i32) -> (i32, i32) {
    %c0_i32 = arith.constant 0 : i32
    %c0_i32_0 = arith.constant 0 : i32
    %c0_i32_1 = arith.constant 0 : i32
    return %c0_i32, %c0_i32_0 : i32, i32
  }
  func.func @transform_3(%arg0: i32) -> i32 {
    %c0_i32 = arith.constant 0 : i32
    %c0_i32_0 = arith.constant 0 : i32
    return %c0_i32 : i32
  }
  func.func @transform_4(%arg0: i32) -> (i32, i32) {
    %c0_i32 = arith.constant 0 : i32
    %c0_i32_0 = arith.constant 0 : i32
    %c0_i32_1 = arith.constant 0 : i32
    return %c0_i32, %c0_i32_0 : i32, i32
  }
  func.func @transform_5(%arg0: i32) -> i32 {
    %c0_i32 = arith.constant 0 : i32
    %c0_i32_0 = arith.constant 0 : i32
    return %c0_i32 : i32
  }
  func.func @transform_6(%arg0: i32) -> i32 {
    %c0_i32 = arith.constant 0 : i32
    %c0_i32_0 = arith.constant 0 : i32
    return %c0_i32 : i32
  }
  func.func @transform_7(%arg0: i32) -> i32 {
    %c0_i32 = arith.constant 0 : i32
    %c0_i32_0 = arith.constant 0 : i32
    return %c0_i32 : i32
  }
  func.func @transform_8(%arg0: i32) -> (i32, i32) {
    %c0_i32 = arith.constant 0 : i32
    %c0_i32_0 = arith.constant 0 : i32
    return %arg0, %c0_i32 : i32, i32
  }
}

</mosaic_0001>

<llo_original>
// kernel: tpu_custom_call.1
$region0: #{tpu_custom_call.1}
  #allocation0 [shape = 'u32[]', space=smem, size = 0x4, offset = 0x4, fixed_abs, tag = 'smem constant byte address 0x4 - core index']
  #allocation1 [shape = 'u32[72,128]{1,0:T(1,128)}', space=vmem, size = 0x9000, scoped, tag = 'internal scratch']
  %s0 = inlined_call_operand.hbm [shape: f32[2,4096], index: 0, kind: input, shape index: {}]
  %s1 = inlined_call_operand.vmem [shape: f32[1,256], index: 1, kind: input, shape index: {}]
  %s2 = inlined_call_operand.vmem [shape: f32[2,16], index: 2, kind: input, shape index: {}]
  %s3 = inlined_call_operand.vmem [shape: f32[2], index: 3, kind: input, shape index: {}]
  %s4 = inlined_call_operand.vmem [shape: f32[16,2], index: 4, kind: input, shape index: {}]
  %s5 = inlined_call_operand.vmem [shape: f32[16], index: 5, kind: input, shape index: {}]
  %s6 = inlined_call_operand.vmem [shape: f32[16], index: 6, kind: input, shape index: {}]
  %s7 = inlined_call_operand.vmem [shape: f32[16], index: 7, kind: input, shape index: {}]
  %s8 = inlined_call_operand.hbm [shape: f32[2,4096], index: 8, kind: output, shape index: {}]
  %s9 = sld [smem:[#allocation0]]
  $region70: #{tpu_custom_call.1} parent=0
    _
  %s11 = ssub.s32 1, %s9
  %s12 = scalar_select 0, %s11, %s9
  $region1: #{tpu_custom_call.1} parent=0
    #allocation2 [shape = 'u8[32768]{0}', space=vmem, size = 0x8000, scoped, tag = 'input window, operand 0, single buffered']
    #allocation3 [shape = 's32[1]{0}', space=sflag, size = 0x4, scoped, tag = 'scoped memory for tpu_custom_call.1']
    #allocation4 [shape = 's32[1]{0}', space=sflag, size = 0x4, scoped, tag = 'scoped memory for tpu_custom_call.1']
    #allocation5 [shape = 's32[1]{0}', space=sflag, size = 0x4, scoped, tag = 'scoped memory for tpu_custom_call.1']
    #allocation6 [shape = 'u8[1024]{0}', space=smem, size = 0x400, scoped, tag = 'input window, operand 2, single buffered']
    #allocation7 [shape = 'u8[512]{0}', space=smem, size = 0x200, scoped, tag = 'input window, operand 3, single buffered']
    #allocation8 [shape = 's32[1]{0}', space=sflag, size = 0x4, scoped, tag = 'scoped memory for tpu_custom_call.1']
    #allocation9 [shape = 'u8[8192]{0}', space=smem, size = 0x2000, scoped, tag = 'input window, operand 4, single buffered']
    #allocation10 [shape = 'u8[512]{0}', space=smem, size = 0x200, scoped, tag = 'input window, operand 5, single buffered']
    #allocation11 [shape = 's32[1]{0}', space=sflag, size = 0x4, scoped, tag = 'scoped memory for tpu_custom_call.1']
    #allocation12 [shape = 'u8[512]{0}', space=smem, size = 0x200, scoped, tag = 'input window, operand 6, single buffered']
    #allocation13 [shape = 'u8[512]{0}', space=smem, size = 0x200, scoped, tag = 'input window, operand 7, single buffered']
    #allocation14 [shape = 's32[1]{0}', space=sflag, size = 0x4, scoped, tag = 'scoped memory for tpu_custom_call.1']
    #allocation15 [shape = 'u8[32768]{0}', space=vmem, size = 0x8000, scoped, tag = 'output window, operand 0, single buffered']
    %13 = vsyncpa [#allocation3], 0
    %14 = vsyncpa [#allocation5], 0
    %15 = vsyncpa [#allocation8], 0
    %16 = vsyncpa [#allocation11], 0
    %17 = vsyncpa [#allocation14], 0
    %18 = vsyncpa [#allocation4], 0
    // Predicated region
    $region2: #{tpu_custom_call.1} parent=1 // pred_check
      _
    $region3: #{tpu_custom_call.1} parent=1 // pred_check_branch
      %20 = sbr.rel (0) target = $region5
    $region4: #{tpu_custom_call.1} parent=1 // pred_region
      %22 = vsyncadd [#allocation3], 0
      %s24 = sshll.u32 %s0, 4
      %s25 = int_to_ptr.hbm [resolvable:$true] %s24
      %s26 = sshll.u32 [#allocation2], 4
      %s27 = int_to_ptr.vmem [resolvable:$true] %s26
      %29 = dma.hbm_to_vmem [thread:$0]  %s25, 1024, %s27, [#allocation3]
    $region5: #{tpu_custom_call.1} parent=1 // pred_fallthru
      _
    // Predicated region
    $region6: #{tpu_custom_call.1} parent=1 // pred_check
      _
    $region7: #{tpu_custom_call.1} parent=1 // pred_check_branch
      %31 = sbr.rel (0) target = $region9
    $region8: #{tpu_custom_call.1} parent=1 // pred_region
      _
    $region9: #{tpu_custom_call.1} parent=1 // pred_fallthru
      _
    // Predicated region
    $region10: #{tpu_custom_call.1} parent=1 // pred_check
      _
    $region11: #{tpu_custom_call.1} parent=1 // pred_check_branch
      %33 = sbr.rel (0) target = $region13
    $region12: #{tpu_custom_call.1} parent=1 // pred_region
      %35 = vsyncadd [#allocation5], 0
      %s37 = sshll.u32 %s2, 4
      %s38 = int_to_ptr.vmem [resolvable:$true] %s37
      %40 = dma.vmem_to_smem %s38, 32, [#allocation6], [#allocation5]
    $region13: #{tpu_custom_call.1} parent=1 // pred_fallthru
      _
    // Predicated region
    $region14: #{tpu_custom_call.1} parent=1 // pred_check
      _
    $region15: #{tpu_custom_call.1} parent=1 // pred_check_branch
      %42 = sbr.rel (0) target = $region17
    $region16: #{tpu_custom_call.1} parent=1 // pred_region
      %44 = vsyncadd [#allocation8], 0
      %s46 = sshll.u32 %s3, 4
      %s47 = int_to_ptr.vmem [resolvable:$true] %s46
      %49 = dma.vmem_to_smem %s47, 16, [#allocation7], [#allocation8]
    $region17: #{tpu_custom_call.1} parent=1 // pred_fallthru
      _
    // Predicated region
    $region18: #{tpu_custom_call.1} parent=1 // pred_check
      _
    $region19: #{tpu_custom_call.1} parent=1 // pred_check_branch
      %51 = sbr.rel (0) target = $region21
    $region20: #{tpu_custom_call.1} parent=1 // pred_region
      %53 = vsyncadd [#allocation8], 0
      %s54 = sshll.u32 %s4, 4
      %s55 = int_to_ptr.vmem [resolvable:$true] %s54
      %60 = dma.vmem_to_smem %s55, 256, [#allocation9], [#allocation8], 128, 128, 8
    $region21: #{tpu_custom_call.1} parent=1 // pred_fallthru
      _
    // Predicated region
    $region22: #{tpu_custom_call.1} parent=1 // pred_check
      _
    $region23: #{tpu_custom_call.1} parent=1 // pred_check_branch
      %62 = sbr.rel (0) target = $region25
    $region24: #{tpu_custom_call.1} parent=1 // pred_region
      %64 = vsyncadd [#allocation11], 0
      %s66 = sshll.u32 %s5, 4
      %s67 = int_to_ptr.vmem [resolvable:$true] %s66
      %69 = dma.vmem_to_smem %s67, 16, [#allocation10], [#allocation11]
    $region25: #{tpu_custom_call.1} parent=1 // pred_fallthru
      _
    // Predicated region
    $region26: #{tpu_custom_call.1} parent=1 // pred_check
      _
    $region27: #{tpu_custom_call.1} parent=1 // pred_check_branch
      %71 = sbr.rel (0) target = $region29
    $region28: #{tpu_custom_call.1} parent=1 // pred_region
      %73 = vsyncadd [#allocation11], 0
      %s75 = sshll.u32 %s6, 4
      %s76 = int_to_ptr.vmem [resolvable:$true] %s75
      %78 = dma.vmem_to_smem %s76, 16, [#allocation12], [#allocation11]
    $region29: #{tpu_custom_call.1} parent=1 // pred_fallthru
      _
    // Predicated region
    $region30: #{tpu_custom_call.1} parent=1 // pred_check
      _
    $region31: #{tpu_custom_call.1} parent=1 // pred_check_branch
      %80 = sbr.rel (0) target = $region33
    $region32: #{tpu_custom_call.1} parent=1 // pred_region
      %82 = vsyncadd [#allocation14], 0
      %s84 = sshll.u32 %s7, 4
      %s85 = int_to_ptr.vmem [resolvable:$true] %s84
      %87 = dma.vmem_to_smem %s85, 16, [#allocation13], [#allocation14]
    $region33: #{tpu_custom_call.1} parent=1 // pred_fallthru
      _
    // Predicated region
    $region34: #{tpu_custom_call.1} parent=1 // pred_check
      _
    $region35: #{tpu_custom_call.1} parent=1 // pred_check_branch
      %89 = sbr.rel (0) target = $region37
    $region36: #{tpu_custom_call.1} parent=1 // pred_region
      %91 = dma.done [#allocation3], 1024
    $region37: #{tpu_custom_call.1} parent=1 // pred_fallthru
      _
    // Predicated region
    $region38: #{tpu_custom_call.1} parent=1 // pred_check
      _
    $region39: #{tpu_custom_call.1} parent=1 // pred_check_branch
      %93 = sbr.rel (0) target = $region41
    $region40: #{tpu_custom_call.1} parent=1 // pred_region
      %95 = dma.done [#allocation5], 32
    $region41: #{tpu_custom_call.1} parent=1 // pred_fallthru
      _
    // Predicated region
    $region42: #{tpu_custom_call.1} parent=1 // pred_check
      _
    $region43: #{tpu_custom_call.1} parent=1 // pred_check_branch
      %97 = sbr.rel (0) target = $region45
    $region44: #{tpu_custom_call.1} parent=1 // pred_region
      %99 = dma.done [#allocation8], 16
    $region45: #{tpu_custom_call.1} parent=1 // pred_fallthru
      _
    // Predicated region
    $region46: #{tpu_custom_call.1} parent=1 // pred_check
      _
    $region47: #{tpu_custom_call.1} parent=1 // pred_check_branch
      %101 = sbr.rel (0) target = $region49
    $region48: #{tpu_custom_call.1} parent=1 // pred_region
      %103 = dma.done [#allocation8], 256
    $region49: #{tpu_custom_call.1} parent=1 // pred_fallthru
      _
    // Predicated region
    $region50: #{tpu_custom_call.1} parent=1 // pred_check
      _
    $region51: #{tpu_custom_call.1} parent=1 // pred_check_branch
      %105 = sbr.rel (0) target = $region53
    $region52: #{tpu_custom_call.1} parent=1 // pred_region
      %107 = dma.done [#allocation11], 16
    $region53: #{tpu_custom_call.1} parent=1 // pred_fallthru
      _
    // Predicated region
    $region54: #{tpu_custom_call.1} parent=1 // pred_check
      _
    $region55: #{tpu_custom_call.1} parent=1 // pred_check_branch
      %109 = sbr.rel (0) target = $region57
    $region56: #{tpu_custom_call.1} parent=1 // pred_region
      %111 = dma.done [#allocation11], 16
    $region57: #{tpu_custom_call.1} parent=1 // pred_fallthru
      _
    // Predicated region
    $region58: #{tpu_custom_call.1} parent=1 // pred_check
      _
    $region59: #{tpu_custom_call.1} parent=1 // pred_check_branch
      %113 = sbr.rel (0) target = $region61
    $region60: #{tpu_custom_call.1} parent=1 // pred_region
      %115 = dma.done [#allocation14], 16
    $region61: #{tpu_custom_call.1} parent=1 // pred_fallthru
      _
    %116 = sfence
    %v117 = vld [vmem:[%s1] sm:$0x3]
    %v118 = vld [vmem:[#allocation2] sm:$0xf]
    %v120 = vperm.slane %v117, 0
    %v121 = vperm.slane %v117, 1
    %v122 = vrot.slane %v121, 6
    %vm123 = vcmask 1041408
    %v124 = vsel %vm123, %v120, %v122
    %v126 = vmul.f32 %v118, %v124
    %128 = vst [vmem:[#allocation1] ss:$4 sm:$0xff] %v126
    %v129 = vld.sshfl [vmem:[#allocation1] sm:$0xff pattern:$0x73625140]
    %v130 = vld.sshfl [vmem:[#allocation1 + $0x8] sm:$0xff pattern:$0x73625140]
    %v133 = vsel %vm123, %v129, 0.0
    %v134 = vsel %vm123, %v130, 0.0
    %v135 = vadd.f32 %v133, %v134
    %136 = vadd.xlane.f32.xlu0 %v135
    %v137 = vpop.xlane.xlu0 %136
    %v138 = vld [vmem:[#allocation2 + $0x4] sm:$0xf]
    %v139 = vmul.f32 %v138, %v124
    %141 = vst [vmem:[#allocation1] ss:$4 sm:$0xff] %v139
    %v142 = vld.sshfl [vmem:[#allocation1] sm:$0xff pattern:$0x73625140]
    %v143 = vld.sshfl [vmem:[#allocation1 + $0x8] sm:$0xff pattern:$0x73625140]
    %v146 = vsel %vm123, %v142, 0.0
    %v147 = vsel %vm123, %v143, 0.0
    %v148 = vadd.f32 %v146, %v147
    %149 = vadd.xlane.f32.xlu0 %v148
    %v150 = vpop.xlane.xlu0 %149
    %v151 = vld [vmem:[#allocation2 + $0x8] sm:$0xf]
    %v152 = vmul.f32 %v151, %v124
    %154 = vst [vmem:[#allocation1] ss:$4 sm:$0xff] %v152
    %v155 = vld.sshfl [vmem:[#allocation1] sm:$0xff pattern:$0x73625140]
    %v156 = vld.sshfl [vmem:[#allocation1 + $0x8] sm:$0xff pattern:$0x73625140]
    %v159 = vsel %vm123, %v155, 0.0
    %v160 = vsel %vm123, %v156, 0.0
    %v161 = vadd.f32 %v159, %v160
    %162 = vadd.xlane.f32.xlu0 %v161
    %v163 = vpop.xlane.xlu0 %162
    %v164 = vld [vmem:[#allocation2 + $0xc] sm:$0xf]
    %v165 = vmul.f32 %v164, %v124
    %167 = vst [vmem:[#allocation1] ss:$4 sm:$0xff] %v165
    %v168 = vld.sshfl [vmem:[#allocation1] sm:$0xff pattern:$0x73625140]
    %v169 = vld.sshfl [vmem:[#allocation1 + $0x8] sm:$0xff pattern:$0x73625140]
    %v172 = vsel %vm123, %v168, 0.0
    %v173 = vsel %vm123, %v169, 0.0
    %v174 = vadd.f32 %v172, %v173
    %175 = vadd.xlane.f32.xlu0 %v174
    %v176 = vpop.xlane.xlu0 %175
    %v177 = vld [vmem:[#allocation2 + $0x10] sm:$0xf]
    %v178 = vmul.f32 %v177, %v124
    %180 = vst [vmem:[#allocation1] ss:$4 sm:$0xff] %v178
    %v181 = vld.sshfl [vmem:[#allocation1] sm:$0xff pattern:$0x73625140]
    %v182 = vld.sshfl [vmem:[#allocation1 + $0x8] sm:$0xff pattern:$0x73625140]
    %v185 = vsel %vm123, %v181, 0.0
    %v186 = vsel %vm123, %v182, 0.0
    %v187 = vadd.f32 %v185, %v186
    %188 = vadd.xlane.f32.xlu0 %v187
    %v189 = vpop.xlane.xlu0 %188
    %v190 = vld [vmem:[#allocation2 + $0x14] sm:$0xf]
    %v191 = vmul.f32 %v190, %v124
    %193 = vst [vmem:[#allocation1] ss:$4 sm:$0xff] %v191
    %v194 = vld.sshfl [vmem:[#allocation1] sm:$0xff pattern:$0x73625140]
    %v195 = vld.sshfl [vmem:[#allocation1 + $0x8] sm:$0xff pattern:$0x73625140]
    %v198 = vsel %vm123, %v194, 0.0
    %v199 = vsel %vm123, %v195, 0.0
    %v200 = vadd.f32 %v198, %v199
    %201 = vadd.xlane.f32.xlu0 %v200
    %v202 = vpop.xlane.xlu0 %201
    %v203 = vld [vmem:[#allocation2 + $0x18] sm:$0xf]
    %v204 = vmul.f32 %v203, %v124
    %206 = vst [vmem:[#allocation1] ss:$4 sm:$0xff] %v204
    %v207 = vld.sshfl [vmem:[#allocation1] sm:$0xff pattern:$0x73625140]
    %v208 = vld.sshfl [vmem:[#allocation1 + $0x8] sm:$0xff pattern:$0x73625140]
    %v211 = vsel %vm123, %v207, 0.0
    %v212 = vsel %vm123, %v208, 0.0
    %v213 = vadd.f32 %v211, %v212
    %214 = vadd.xlane.f32.xlu0 %v213
    %v215 = vpop.xlane.xlu0 %214
    %v216 = vld [vmem:[#allocation2 + $0x1c] sm:$0xf]
    %v217 = vmul.f32 %v216, %v124
    %219 = vst [vmem:[#allocation1] ss:$4 sm:$0xff] %v217
    %v220 = vld.sshfl [vmem:[#allocation1] sm:$0xff pattern:$0x73625140]
    %v221 = vld.sshfl [vmem:[#allocation1 + $0x8] sm:$0xff pattern:$0x73625140]
    %v224 = vsel %vm123, %v220, 0.0
    %v225 = vsel %vm123, %v221, 0.0
    %v226 = vadd.f32 %v224, %v225
    %227 = vadd.xlane.f32.xlu0 %v226
    %v228 = vpop.xlane.xlu0 %227
    %v229 = vld [vmem:[#allocation2 + $0x20] sm:$0xf]
    %v230 = vmul.f32 %v229, %v124
    %232 = vst [vmem:[#allocation1] ss:$4 sm:$0xff] %v230
    %v233 = vld.sshfl [vmem:[#allocation1] sm:$0xff pattern:$0x73625140]
    %v234 = vld.sshfl [vmem:[#allocation1 + $0x8] sm:$0xff pattern:$0x73625140]
    %v237 = vsel %vm123, %v233, 0.0
    %v238 = vsel %vm123, %v234, 0.0
    %v239 = vadd.f32 %v237, %v238
    %240 = vadd.xlane.f32.xlu0 %v239
    %v241 = vpop.xlane.xlu0 %240
    %v242 = vld [vmem:[#allocation2 + $0x24] sm:$0xf]
    %v243 = vmul.f32 %v242, %v124
    %245 = vst [vmem:[#allocation1] ss:$4 sm:$0xff] %v243
    %v246 = vld.sshfl [vmem:[#allocation1] sm:$0xff pattern:$0x73625140]
    %v247 = vld.sshfl [vmem:[#allocation1 + $0x8] sm:$0xff pattern:$0x73625140]
    %v250 = vsel %vm123, %v246, 0.0
    %v251 = vsel %vm123, %v247, 0.0
    %v252 = vadd.f32 %v250, %v251
    %253 = vadd.xlane.f32.xlu0 %v252
    %v254 = vpop.xlane.xlu0 %253
    %v255 = vld [vmem:[#allocation2 + $0x28] sm:$0xf]
    %v256 = vmul.f32 %v255, %v124
    %258 = vst [vmem:[#allocation1] ss:$4 sm:$0xff] %v256
    %v259 = vld.sshfl [vmem:[#allocation1] sm:$0xff pattern:$0x73625140]
    %v260 = vld.sshfl [vmem:[#allocation1 + $0x8] sm:$0xff pattern:$0x73625140]
    %v263 = vsel %vm123, %v259, 0.0
    %v264 = vsel %vm123, %v260, 0.0
    %v265 = vadd.f32 %v263, %v264
    %266 = vadd.xlane.f32.xlu0 %v265
    %v267 = vpop.xlane.xlu0 %266
    %v268 = vld [vmem:[#allocation2 + $0x2c] sm:$0xf]
    %v269 = vmul.f32 %v268, %v124
    %271 = vst [vmem:[#allocation1] ss:$4 sm:$0xff] %v269
    %v272 = vld.sshfl [vmem:[#allocation1] sm:$0xff pattern:$0x73625140]
    %v273 = vld.sshfl [vmem:[#allocation1 + $0x8] sm:$0xff pattern:$0x73625140]
    %v276 = vsel %vm123, %v272, 0.0
    %v277 = vsel %vm123, %v273, 0.0
    %v278 = vadd.f32 %v276, %v277
    %279 = vadd.xlane.f32.xlu0 %v278
    %v280 = vpop.xlane.xlu0 %279
    %v281 = vld [vmem:[#allocation2 + $0x30] sm:$0xf]
    %v282 = vmul.f32 %v281, %v124
    %284 = vst [vmem:[#allocation1] ss:$4 sm:$0xff] %v282
    %v285 = vld.sshfl [vmem:[#allocation1] sm:$0xff pattern:$0x73625140]
    %v286 = vld.sshfl [vmem:[#allocation1 + $0x8] sm:$0xff pattern:$0x73625140]
    %v289 = vsel %vm123, %v285, 0.0
    %v290 = vsel %vm123, %v286, 0.0
    %v291 = vadd.f32 %v289, %v290
    %292 = vadd.xlane.f32.xlu0 %v291
    %v293 = vpop.xlane.xlu0 %292
    %v294 = vld [vmem:[#allocation2 + $0x34] sm:$0xf]
    %v295 = vmul.f32 %v294, %v124
    %297 = vst [vmem:[#allocation1] ss:$4 sm:$0xff] %v295
    %v298 = vld.sshfl [vmem:[#allocation1] sm:$0xff pattern:$0x73625140]
    %v299 = vld.sshfl [vmem:[#allocation1 + $0x8] sm:$0xff pattern:$0x73625140]
    %v302 = vsel %vm123, %v298, 0.0
    %v303 = vsel %vm123, %v299, 0.0
    %v304 = vadd.f32 %v302, %v303
    %305 = vadd.xlane.f32.xlu0 %v304
    %v306 = vpop.xlane.xlu0 %305
    %v307 = vld [vmem:[#allocation2 + $0x38] sm:$0xf]
    %v308 = vmul.f32 %v307, %v124
    %310 = vst [vmem:[#allocation1] ss:$4 sm:$0xff] %v308
    %v311 = vld.sshfl [vmem:[#allocation1] sm:$0xff pattern:$0x73625140]
    %v312 = vld.sshfl [vmem:[#allocation1 + $0x8] sm:$0xff pattern:$0x73625140]
    %v315 = vsel %vm123, %v311, 0.0
    %v316 = vsel %vm123, %v312, 0.0
    %v317 = vadd.f32 %v315, %v316
    %318 = vadd.xlane.f32.xlu0 %v317
    %v319 = vpop.xlane.xlu0 %318
    %v320 = vld [vmem:[#allocation2 + $0x3c] sm:$0xf]
    %v321 = vmul.f32 %v320, %v124
    %323 = vst [vmem:[#allocation1] ss:$4 sm:$0xff] %v321
    %v324 = vld.sshfl [vmem:[#allocation1] sm:$0xff pattern:$0x73625140]
    %v325 = vld.sshfl [vmem:[#allocation1 + $0x8] sm:$0xff pattern:$0x73625140]
    %v328 = vsel %vm123, %v324, 0.0
    %v329 = vsel %vm123, %v325, 0.0
    %v330 = vadd.f32 %v328, %v329
    %331 = vadd.xlane.f32.xlu0 %v330
    %v332 = vpop.xlane.xlu0 %331
    %s333 = sld [smem:[#allocation7]]
    %s334 = sld [smem:[#allocation6]]
    %v335 = vstv %s334
    %v336 = vmul.f32 %v335, %v137
    %v337 = vstv %s333
    %v338 = vadd.f32 %v337, %v336
    %s339 = sld [smem:[#allocation6 + $0x1]]
    %v340 = vstv %s339
    %v341 = vmul.f32 %v340, %v150
    %v342 = vadd.f32 %v338, %v341
    %s343 = sld [smem:[#allocation6 + $0x2]]
    %v344 = vstv %s343
    %v345 = vmul.f32 %v344, %v163
    %v346 = vadd.f32 %v342, %v345
    %s347 = sld [smem:[#allocation6 + $0x3]]
    %v348 = vstv %s347
    %v349 = vmul.f32 %v348, %v176
    %v350 = vadd.f32 %v346, %v349
    %s351 = sld [smem:[#allocation6 + $0x4]]
    %v352 = vstv %s351
    %v353 = vmul.f32 %v352, %v189
    %v354 = vadd.f32 %v350, %v353
    %s355 = sld [smem:[#allocation6 + $0x5]]
    %v356 = vstv %s355
    %v357 = vmul.f32 %v356, %v202
    %v358 = vadd.f32 %v354, %v357
    %s359 = sld [smem:[#allocation6 + $0x6]]
    %v360 = vstv %s359
    %v361 = vmul.f32 %v360, %v215
    %v362 = vadd.f32 %v358, %v361
    %s363 = sld [smem:[#allocation6 + $0x7]]
    %v364 = vstv %s363
    %v365 = vmul.f32 %v364, %v228
    %v366 = vadd.f32 %v362, %v365
    %s367 = sld [smem:[#allocation6 + $0x8]]
    %v368 = vstv %s367
    %v369 = vmul.f32 %v368, %v241
    %v370 = vadd.f32 %v366, %v369
    %s371 = sld [smem:[#allocation6 + $0x9]]
    %v372 = vstv %s371
    %v373 = vmul.f32 %v372, %v254
    %v374 = vadd.f32 %v370, %v373
    %s375 = sld [smem:[#allocation6 + $0xa]]
    %v376 = vstv %s375
    %v377 = vmul.f32 %v376, %v267
    %v378 = vadd.f32 %v374, %v377
    %s379 = sld [smem:[#allocation6 + $0xb]]
    %v380 = vstv %s379
    %v381 = vmul.f32 %v380, %v280
    %v382 = vadd.f32 %v378, %v381
    %s383 = sld [smem:[#allocation6 + $0xc]]
    %v384 = vstv %s383
    %v385 = vmul.f32 %v384, %v293
    %v386 = vadd.f32 %v382, %v385
    %s387 = sld [smem:[#allocation6 + $0xd]]
    %v388 = vstv %s387
    %v389 = vmul.f32 %v388, %v306
    %v390 = vadd.f32 %v386, %v389
    %s391 = sld [smem:[#allocation6 + $0xe]]
    %v392 = vstv %s391
    %v393 = vmul.f32 %v392, %v319
    %v394 = vadd.f32 %v390, %v393
    %s395 = sld [smem:[#allocation6 + $0xf]]
    %v396 = vstv %s395
    %v397 = vmul.f32 %v396, %v332
    %v398 = vadd.f32 %v394, %v397
    %v399 = vmax.f32 %v398, 0.0
    %s400 = sld [smem:[#allocation7 + $0x1]]
    %s401 = sld [smem:[#allocation6 + $0x80]]
    %v402 = vstv %s401
    %v403 = vmul.f32 %v402, %v137
    %v404 = vstv %s400
    %v405 = vadd.f32 %v404, %v403
    %s406 = sld [smem:[#allocation6 + $0x81]]
    %v407 = vstv %s406
    %v408 = vmul.f32 %v407, %v150
    %v409 = vadd.f32 %v405, %v408
    %s410 = sld [smem:[#allocation6 + $0x82]]
    %v411 = vstv %s410
    %v412 = vmul.f32 %v411, %v163
    %v413 = vadd.f32 %v409, %v412
    %s414 = sld [smem:[#allocation6 + $0x83]]
    %v415 = vstv %s414
    %v416 = vmul.f32 %v415, %v176
    %v417 = vadd.f32 %v413, %v416
    %s418 = sld [smem:[#allocation6 + $0x84]]
    %v419 = vstv %s418
    %v420 = vmul.f32 %v419, %v189
    %v421 = vadd.f32 %v417, %v420
    %s422 = sld [smem:[#allocation6 + $0x85]]
    %v423 = vstv %s422
    %v424 = vmul.f32 %v423, %v202
    %v425 = vadd.f32 %v421, %v424
    %s426 = sld [smem:[#allocation6 + $0x86]]
    %v427 = vstv %s426
    %v428 = vmul.f32 %v427, %v215
    %v429 = vadd.f32 %v425, %v428
    %s430 = sld [smem:[#allocation6 + $0x87]]
    %v431 = vstv %s430
    %v432 = vmul.f32 %v431, %v228
    %v433 = vadd.f32 %v429, %v432
    %s434 = sld [smem:[#allocation6 + $0x88]]
    %v435 = vstv %s434
    %v436 = vmul.f32 %v435, %v241
    %v437 = vadd.f32 %v433, %v436
    %s438 = sld [smem:[#allocation6 + $0x89]]
    %v439 = vstv %s438
    %v440 = vmul.f32 %v439, %v254
    %v441 = vadd.f32 %v437, %v440
    %s442 = sld [smem:[#allocation6 + $0x8a]]
    %v443 = vstv %s442
    %v444 = vmul.f32 %v443, %v267
    %v445 = vadd.f32 %v441, %v444
    %s446 = sld [smem:[#allocation6 + $0x8b]]
    %v447 = vstv %s446
    %v448 = vmul.f32 %v447, %v280
    %v449 = vadd.f32 %v445, %v448
    %s450 = sld [smem:[#allocation6 + $0x8c]]
    %v451 = vstv %s450
    %v452 = vmul.f32 %v451, %v293
    %v453 = vadd.f32 %v449, %v452
    %s454 = sld [smem:[#allocation6 + $0x8d]]
    %v455 = vstv %s454
    %v456 = vmul.f32 %v455, %v306
    %v457 = vadd.f32 %v453, %v456
    %s458 = sld [smem:[#allocation6 + $0x8e]]
    %v459 = vstv %s458
    %v460 = vmul.f32 %v459, %v319
    %v461 = vadd.f32 %v457, %v460
    %s462 = sld [smem:[#allocation6 + $0x8f]]
    %v463 = vstv %s462
    %v464 = vmul.f32 %v463, %v332
    %v465 = vadd.f32 %v461, %v464
    %v466 = vmax.f32 %v465, 0.0
    %s467 = sld [smem:[#allocation10]]
    %s468 = sld [smem:[#allocation9]]
    %v469 = vstv %s468
    %v470 = vmul.f32 %v469, %v399
    %v471 = vstv %s467
    %v472 = vadd.f32 %v471, %v470
    %s473 = sld [smem:[#allocation9 + $0x1]]
    %v474 = vstv %s473
    %v475 = vmul.f32 %v474, %v466
    %v476 = vadd.f32 %v472, %v475
    %v477 = vsub.f32 0.0, %v476
    %v478 = vmul.f32 %v477, 1.442695
    %v479 = vpow.pop %v478
    %v480 = vadd.f32 %v479, 1.0
    %v481 = vrcp.pop %v480
    %v482 = vmul.f32 %v480, %v481
    %v483 = vsub.f32 1.0, %v482
    %v484 = vmul.f32 %v481, %v483
    %v485 = vadd.f32 %v481, %v484
    %vm486 = vweird.f32 %v480
    %vm487 = vweird.f32 %v481
    %vm488 = vmor %vm486, %vm487
    %v489 = vsel %vm488, %v481, %v485
    %v490 = vand.u32 2147483647, %v480
    %vm491 = vcmp.eq.f32.partialorder %v490, 8.507059e+37
    %v492 = vand.u32 %v480, 2147483648
    %v493 = vor.u32 1.1754944e-38, %v492
    %v494 = vsel %vm491, %v493, %v489
    %v495 = vmul.f32 1.0, %v494
    %v496 = vadd.f32 %v495, 1.0
    %s497 = sld [smem:[#allocation12]]
    %v498 = vstv %s497
    %v499 = vmul.f32 %v496, %v498
    %v502 = vunpack.c.l.s4 269488144
    %v503 = vunpack.c.0.s8 %v502
    %v504 = vperm.slane %v499, %v503
    %v506 = vmul.f32 %v118, %v504
    %s507 = sld [smem:[#allocation13]]
    %v508 = vstv %s507
    %v509 = vadd.f32 %v506, %v508
    %v510 = vsub.f32 0.0, %v509
    %v511 = vmul.f32 %v510, 1.442695
    %v512 = vpow.pop %v511
    %v513 = vadd.f32 %v512, 1.0
    %v514 = vrcp.pop %v513
    %v515 = vmul.f32 %v513, %v514
    %v516 = vsub.f32 1.0, %v515
    %v517 = vmul.f32 %v514, %v516
    %v518 = vadd.f32 %v514, %v517
    %vm519 = vweird.f32 %v513
    %vm520 = vweird.f32 %v514
    %vm521 = vmor %vm519, %vm520
    %v522 = vsel %vm521, %v514, %v518
    %v523 = vand.u32 2147483647, %v513
    %vm524 = vcmp.eq.f32.partialorder %v523, 8.507059e+37
    %v525 = vand.u32 %v513, 2147483648
    %v526 = vor.u32 1.1754944e-38, %v525
    %v527 = vsel %vm524, %v526, %v522
    %v528 = vmul.f32 1.0, %v527
    %529 = vst [vmem:[#allocation15] sm:$0xf] %v528
    %s530 = sld [smem:[#allocation10 + $0x1]]
    %s531 = sld [smem:[#allocation9 + $0x80]]
    %v532 = vstv %s531
    %v533 = vmul.f32 %v532, %v399
    %v534 = vstv %s530
    %v535 = vadd.f32 %v534, %v533
    %s536 = sld [smem:[#allocation9 + $0x81]]
    %v537 = vstv %s536
    %v538 = vmul.f32 %v537, %v466
    %v539 = vadd.f32 %v535, %v538
    %v540 = vsub.f32 0.0, %v539
    %v541 = vmul.f32 %v540, 1.442695
    %v542 = vpow.pop %v541
    %v543 = vadd.f32 %v542, 1.0
    %v544 = vrcp.pop %v543
    %v545 = vmul.f32 %v543, %v544
    %v546 = vsub.f32 1.0, %v545
    %v547 = vmul.f32 %v544, %v546
    %v548 = vadd.f32 %v544, %v547
    %vm549 = vweird.f32 %v543
    %vm550 = vweird.f32 %v544
    %vm551 = vmor %vm549, %vm550
    %v552 = vsel %vm551, %v544, %v548
    %v553 = vand.u32 2147483647, %v543
    %vm554 = vcmp.eq.f32.partialorder %v553, 8.507059e+37
    %v555 = vand.u32 %v543, 2147483648
    %v556 = vor.u32 1.1754944e-38, %v555
    %v557 = vsel %vm554, %v556, %v552
    %v558 = vmul.f32 1.0, %v557
    %v559 = vadd.f32 %v558, 1.0
    %s560 = sld [smem:[#allocation12 + $0x1]]
    %v561 = vstv %s560
    %v562 = vmul.f32 %v559, %v561
    %v563 = vld [vmem:[#allocation2 + $0x4] sm:$0xf]
    %v566 = vunpack.c.l.s4 269488144
    %v567 = vunpack.c.0.s8 %v566
    %v568 = vperm.slane %v562, %v567
    %v570 = vmul.f32 %v563, %v568
    %s571 = sld [smem:[#allocation13 + $0x1]]
    %v572 = vstv %s571
    %v573 = vadd.f32 %v570, %v572
    %v574 = vsub.f32 0.0, %v573
    %v575 = vmul.f32 %v574, 1.442695
    %v576 = vpow.pop %v575
    %v577 = vadd.f32 %v576, 1.0
    %v578 = vrcp.pop %v577
    %v579 = vmul.f32 %v577, %v578
    %v580 = vsub.f32 1.0, %v579
    %v581 = vmul.f32 %v578, %v580
    %v582 = vadd.f32 %v578, %v581
    %vm583 = vweird.f32 %v577
    %vm584 = vweird.f32 %v578
    %vm585 = vmor %vm583, %vm584
    %v586 = vsel %vm585, %v578, %v582
    %v587 = vand.u32 2147483647, %v577
    %vm588 = vcmp.eq.f32.partialorder %v587, 8.507059e+37
    %v589 = vand.u32 %v577, 2147483648
    %v590 = vor.u32 1.1754944e-38, %v589
    %v591 = vsel %vm588, %v590, %v586
    %v592 = vmul.f32 1.0, %v591
    %593 = vst [vmem:[#allocation15 + $0x4] sm:$0xf] %v592
    %s594 = sld [smem:[#allocation10 + $0x2]]
    %s595 = sld [smem:[#allocation9 + $0x100]]
    %v596 = vstv %s595
    %v597 = vmul.f32 %v596, %v399
    %v598 = vstv %s594
    %v599 = vadd.f32 %v598, %v597
    %s600 = sld [smem:[#allocation9 + $0x101]]
    %v601 = vstv %s600
    %v602 = vmul.f32 %v601, %v466
    %v603 = vadd.f32 %v599, %v602
    %v604 = vsub.f32 0.0, %v603
    %v605 = vmul.f32 %v604, 1.442695
    %v606 = vpow.pop %v605
    %v607 = vadd.f32 %v606, 1.0
    %v608 = vrcp.pop %v607
    %v609 = vmul.f32 %v607, %v608
    %v610 = vsub.f32 1.0, %v609
    %v611 = vmul.f32 %v608, %v610
    %v612 = vadd.f32 %v608, %v611
    %vm613 = vweird.f32 %v607
    %vm614 = vweird.f32 %v608
    %vm615 = vmor %vm613, %vm614
    %v616 = vsel %vm615, %v608, %v612
    %v617 = vand.u32 2147483647, %v607
    %vm618 = vcmp.eq.f32.partialorder %v617, 8.507059e+37
    %v619 = vand.u32 %v607, 2147483648
    %v620 = vor.u32 1.1754944e-38, %v619
    %v621 = vsel %vm618, %v620, %v616
    %v622 = vmul.f32 1.0, %v621
    %v623 = vadd.f32 %v622, 1.0
    %s624 = sld [smem:[#allocation12 + $0x2]]
    %v625 = vstv %s624
    %v626 = vmul.f32 %v623, %v625
    %v627 = vld [vmem:[#allocation2 + $0x8] sm:$0xf]
    %v630 = vunpack.c.l.s4 269488144
    %v631 = vunpack.c.0.s8 %v630
    %v632 = vperm.slane %v626, %v631
    %v634 = vmul.f32 %v627, %v632
    %s635 = sld [smem:[#allocation13 + $0x2]]
    %v636 = vstv %s635
    %v637 = vadd.f32 %v634, %v636
    %v638 = vsub.f32 0.0, %v637
    %v639 = vmul.f32 %v638, 1.442695
    %v640 = vpow.pop %v639
    %v641 = vadd.f32 %v640, 1.0
    %v642 = vrcp.pop %v641
    %v643 = vmul.f32 %v641, %v642
    %v644 = vsub.f32 1.0, %v643
    %v645 = vmul.f32 %v642, %v644
    %v646 = vadd.f32 %v642, %v645
    %vm647 = vweird.f32 %v641
    %vm648 = vweird.f32 %v642
    %vm649 = vmor %vm647, %vm648
    %v650 = vsel %vm649, %v642, %v646
    %v651 = vand.u32 2147483647, %v641
    %vm652 = vcmp.eq.f32.partialorder %v651, 8.507059e+37
    %v653 = vand.u32 %v641, 2147483648
    %v654 = vor.u32 1.1754944e-38, %v653
    %v655 = vsel %vm652, %v654, %v650
    %v656 = vmul.f32 1.0, %v655
    %657 = vst [vmem:[#allocation15 + $0x8] sm:$0xf] %v656
    %s658 = sld [smem:[#allocation10 + $0x3]]
    %s659 = sld [smem:[#allocation9 + $0x180]]
    %v660 = vstv %s659
    %v661 = vmul.f32 %v660, %v399
    %v662 = vstv %s658
    %v663 = vadd.f32 %v662, %v661
    %s664 = sld [smem:[#allocation9 + $0x181]]
    %v665 = vstv %s664
    %v666 = vmul.f32 %v665, %v466
    %v667 = vadd.f32 %v663, %v666
    %v668 = vsub.f32 0.0, %v667
    %v669 = vmul.f32 %v668, 1.442695
    %v670 = vpow.pop %v669
    %v671 = vadd.f32 %v670, 1.0
    %v672 = vrcp.pop %v671
    %v673 = vmul.f32 %v671, %v672
    %v674 = vsub.f32 1.0, %v673
    %v675 = vmul.f32 %v672, %v674
    %v676 = vadd.f32 %v672, %v675
    %vm677 = vweird.f32 %v671
    %vm678 = vweird.f32 %v672
    %vm679 = vmor %vm677, %vm678
    %v680 = vsel %vm679, %v672, %v676
    %v681 = vand.u32 2147483647, %v671
    %vm682 = vcmp.eq.f32.partialorder %v681, 8.507059e+37
    %v683 = vand.u32 %v671, 2147483648
    %v684 = vor.u32 1.1754944e-38, %v683
    %v685 = vsel %vm682, %v684, %v680
    %v686 = vmul.f32 1.0, %v685
    %v687 = vadd.f32 %v686, 1.0
    %s688 = sld [smem:[#allocation12 + $0x3]]
    %v689 = vstv %s688
    %v690 = vmul.f32 %v687, %v689
    %v691 = vld [vmem:[#allocation2 + $0xc] sm:$0xf]
    %v694 = vunpack.c.l.s4 269488144
    %v695 = vunpack.c.0.s8 %v694
    %v696 = vperm.slane %v690, %v695
    %v698 = vmul.f32 %v691, %v696
    %s699 = sld [smem:[#allocation13 + $0x3]]
    %v700 = vstv %s699
    %v701 = vadd.f32 %v698, %v700
    %v702 = vsub.f32 0.0, %v701
    %v703 = vmul.f32 %v702, 1.442695
    %v704 = vpow.pop %v703
    %v705 = vadd.f32 %v704, 1.0
    %v706 = vrcp.pop %v705
    %v707 = vmul.f32 %v705, %v706
    %v708 = vsub.f32 1.0, %v707
    %v709 = vmul.f32 %v706, %v708
    %v710 = vadd.f32 %v706, %v709
    %vm711 = vweird.f32 %v705
    %vm712 = vweird.f32 %v706
    %vm713 = vmor %vm711, %vm712
    %v714 = vsel %vm713, %v706, %v710
    %v715 = vand.u32 2147483647, %v705
    %vm716 = vcmp.eq.f32.partialorder %v715, 8.507059e+37
    %v717 = vand.u32 %v705, 2147483648
    %v718 = vor.u32 1.1754944e-38, %v717
    %v719 = vsel %vm716, %v718, %v714
    %v720 = vmul.f32 1.0, %v719
    %721 = vst [vmem:[#allocation15 + $0xc] sm:$0xf] %v720
    %s722 = sld [smem:[#allocation10 + $0x4]]
    %s723 = sld [smem:[#allocation9 + $0x200]]
    %v724 = vstv %s723
    %v725 = vmul.f32 %v724, %v399
    %v726 = vstv %s722
    %v727 = vadd.f32 %v726, %v725
    %s728 = sld [smem:[#allocation9 + $0x201]]
    %v729 = vstv %s728
    %v730 = vmul.f32 %v729, %v466
    %v731 = vadd.f32 %v727, %v730
    %v732 = vsub.f32 0.0, %v731
    %v733 = vmul.f32 %v732, 1.442695
    %v734 = vpow.pop %v733
    %v735 = vadd.f32 %v734, 1.0
    %v736 = vrcp.pop %v735
    %v737 = vmul.f32 %v735, %v736
    %v738 = vsub.f32 1.0, %v737
    %v739 = vmul.f32 %v736, %v738
    %v740 = vadd.f32 %v736, %v739
    %vm741 = vweird.f32 %v735
    %vm742 = vweird.f32 %v736
    %vm743 = vmor %vm741, %vm742
    %v744 = vsel %vm743, %v736, %v740
    %v745 = vand.u32 2147483647, %v735
    %vm746 = vcmp.eq.f32.partialorder %v745, 8.507059e+37
    %v747 = vand.u32 %v735, 2147483648
    %v748 = vor.u32 1.1754944e-38, %v747
    %v749 = vsel %vm746, %v748, %v744
    %v750 = vmul.f32 1.0, %v749
    %v751 = vadd.f32 %v750, 1.0
    %s752 = sld [smem:[#allocation12 + $0x4]]
    %v753 = vstv %s752
    %v754 = vmul.f32 %v751, %v753
    %v755 = vld [vmem:[#allocation2 + $0x10] sm:$0xf]
    %v758 = vunpack.c.l.s4 269488144
    %v759 = vunpack.c.0.s8 %v758
    %v760 = vperm.slane %v754, %v759
    %v762 = vmul.f32 %v755, %v760
    %s763 = sld [smem:[#allocation13 + $0x4]]
    %v764 = vstv %s763
    %v765 = vadd.f32 %v762, %v764
    %v766 = vsub.f32 0.0, %v765
    %v767 = vmul.f32 %v766, 1.442695
    %v768 = vpow.pop %v767
    %v769 = vadd.f32 %v768, 1.0
    %v770 = vrcp.pop %v769
    %v771 = vmul.f32 %v769, %v770
    %v772 = vsub.f32 1.0, %v771
    %v773 = vmul.f32 %v770, %v772
    %v774 = vadd.f32 %v770, %v773
    %vm775 = vweird.f32 %v769
    %vm776 = vweird.f32 %v770
    %vm777 = vmor %vm775, %vm776
    %v778 = vsel %vm777, %v770, %v774
    %v779 = vand.u32 2147483647, %v769
    %vm780 = vcmp.eq.f32.partialorder %v779, 8.507059e+37
    %v781 = vand.u32 %v769, 2147483648
    %v782 = vor.u32 1.1754944e-38, %v781
    %v783 = vsel %vm780, %v782, %v778
    %v784 = vmul.f32 1.0, %v783
    %785 = vst [vmem:[#allocation15 + $0x10] sm:$0xf] %v784
    %s786 = sld [smem:[#allocation10 + $0x5]]
    %s787 = sld [smem:[#allocation9 + $0x280]]
    %v788 = vstv %s787
    %v789 = vmul.f32 %v788, %v399
    %v790 = vstv %s786
    %v791 = vadd.f32 %v790, %v789
    %s792 = sld [smem:[#allocation9 + $0x281]]
    %v793 = vstv %s792
    %v794 = vmul.f32 %v793, %v466
    %v795 = vadd.f32 %v791, %v794
    %v796 = vsub.f32 0.0, %v795
    %v797 = vmul.f32 %v796, 1.442695
    %v798 = vpow.pop %v797
    %v799 = vadd.f32 %v798, 1.0
    %v800 = vrcp.pop %v799
    %v801 = vmul.f32 %v799, %v800
    %v802 = vsub.f32 1.0, %v801
    %v803 = vmul.f32 %v800, %v802
    %v804 = vadd.f32 %v800, %v803
    %vm805 = vweird.f32 %v799
    %vm806 = vweird.f32 %v800
    %vm807 = vmor %vm805, %vm806
    %v808 = vsel %vm807, %v800, %v804
    %v809 = vand.u32 2147483647, %v799
    %vm810 = vcmp.eq.f32.partialorder %v809, 8.507059e+37
    %v811 = vand.u32 %v799, 2147483648
    %v812 = vor.u32 1.1754944e-38, %v811
    %v813 = vsel %vm810, %v812, %v808
    %v814 = vmul.f32 1.0, %v813
    %v815 = vadd.f32 %v814, 1.0
    %s816 = sld [smem:[#allocation12 + $0x5]]
    %v817 = vstv %s816
    %v818 = vmul.f32 %v815, %v817
    %v819 = vld [vmem:[#allocation2 + $0x14] sm:$0xf]
    %v822 = vunpack.c.l.s4 269488144
    %v823 = vunpack.c.0.s8 %v822
    %v824 = vperm.slane %v818, %v823
    %v826 = vmul.f32 %v819, %v824
    %s827 = sld [smem:[#allocation13 + $0x5]]
    %v828 = vstv %s827
    %v829 = vadd.f32 %v826, %v828
    %v830 = vsub.f32 0.0, %v829
    %v831 = vmul.f32 %v830, 1.442695
    %v832 = vpow.pop %v831
    %v833 = vadd.f32 %v832, 1.0
    %v834 = vrcp.pop %v833
    %v835 = vmul.f32 %v833, %v834
    %v836 = vsub.f32 1.0, %v835
    %v837 = vmul.f32 %v834, %v836
    %v838 = vadd.f32 %v834, %v837
    %vm839 = vweird.f32 %v833
    %vm840 = vweird.f32 %v834
    %vm841 = vmor %vm839, %vm840
    %v842 = vsel %vm841, %v834, %v838
    %v843 = vand.u32 2147483647, %v833
    %vm844 = vcmp.eq.f32.partialorder %v843, 8.507059e+37
    %v845 = vand.u32 %v833, 2147483648
    %v846 = vor.u32 1.1754944e-38, %v845
    %v847 = vsel %vm844, %v846, %v842
    %v848 = vmul.f32 1.0, %v847
    %849 = vst [vmem:[#allocation15 + $0x14] sm:$0xf] %v848
    %s850 = sld [smem:[#allocation10 + $0x6]]
    %s851 = sld [smem:[#allocation9 + $0x300]]
    %v852 = vstv %s851
    %v853 = vmul.f32 %v852, %v399
    %v854 = vstv %s850
    %v855 = vadd.f32 %v854, %v853
    %s856 = sld [smem:[#allocation9 + $0x301]]
    %v857 = vstv %s856
    %v858 = vmul.f32 %v857, %v466
    %v859 = vadd.f32 %v855, %v858
    %v860 = vsub.f32 0.0, %v859
    %v861 = vmul.f32 %v860, 1.442695
    %v862 = vpow.pop %v861
    %v863 = vadd.f32 %v862, 1.0
    %v864 = vrcp.pop %v863
    %v865 = vmul.f32 %v863, %v864
    %v866 = vsub.f32 1.0, %v865
    %v867 = vmul.f32 %v864, %v866
    %v868 = vadd.f32 %v864, %v867
    %vm869 = vweird.f32 %v863
    %vm870 = vweird.f32 %v864
    %vm871 = vmor %vm869, %vm870
    %v872 = vsel %vm871, %v864, %v868
    %v873 = vand.u32 2147483647, %v863
    %vm874 = vcmp.eq.f32.partialorder %v873, 8.507059e+37
    %v875 = vand.u32 %v863, 2147483648
    %v876 = vor.u32 1.1754944e-38, %v875
    %v877 = vsel %vm874, %v876, %v872
    %v878 = vmul.f32 1.0, %v877
    %v879 = vadd.f32 %v878, 1.0
    %s880 = sld [smem:[#allocation12 + $0x6]]
    %v881 = vstv %s880
    %v882 = vmul.f32 %v879, %v881
    %v883 = vld [vmem:[#allocation2 + $0x18] sm:$0xf]
    %v886 = vunpack.c.l.s4 269488144
    %v887 = vunpack.c.0.s8 %v886
    %v888 = vperm.slane %v882, %v887
    %v890 = vmul.f32 %v883, %v888
    %s891 = sld [smem:[#allocation13 + $0x6]]
    %v892 = vstv %s891
    %v893 = vadd.f32 %v890, %v892
    %v894 = vsub.f32 0.0, %v893
    %v895 = vmul.f32 %v894, 1.442695
    %v896 = vpow.pop %v895
    %v897 = vadd.f32 %v896, 1.0
    %v898 = vrcp.pop %v897
    %v899 = vmul.f32 %v897, %v898
    %v900 = vsub.f32 1.0, %v899
    %v901 = vmul.f32 %v898, %v900
    %v902 = vadd.f32 %v898, %v901
    %vm903 = vweird.f32 %v897
    %vm904 = vweird.f32 %v898
    %vm905 = vmor %vm903, %vm904
    %v906 = vsel %vm905, %v898, %v902
    %v907 = vand.u32 2147483647, %v897
    %vm908 = vcmp.eq.f32.partialorder %v907, 8.507059e+37
    %v909 = vand.u32 %v897, 2147483648
    %v910 = vor.u32 1.1754944e-38, %v909
    %v911 = vsel %vm908, %v910, %v906
    %v912 = vmul.f32 1.0, %v911
    %913 = vst [vmem:[#allocation15 + $0x18] sm:$0xf] %v912
    %s914 = sld [smem:[#allocation10 + $0x7]]
    %s915 = sld [smem:[#allocation9 + $0x380]]
    %v916 = vstv %s915
    %v917 = vmul.f32 %v916, %v399
    %v918 = vstv %s914
    %v919 = vadd.f32 %v918, %v917
    %s920 = sld [smem:[#allocation9 + $0x381]]
    %v921 = vstv %s920
    %v922 = vmul.f32 %v921, %v466
    %v923 = vadd.f32 %v919, %v922
    %v924 = vsub.f32 0.0, %v923
    %v925 = vmul.f32 %v924, 1.442695
    %v926 = vpow.pop %v925
    %v927 = vadd.f32 %v926, 1.0
    %v928 = vrcp.pop %v927
    %v929 = vmul.f32 %v927, %v928
    %v930 = vsub.f32 1.0, %v929
    %v931 = vmul.f32 %v928, %v930
    %v932 = vadd.f32 %v928, %v931
    %vm933 = vweird.f32 %v927
    %vm934 = vweird.f32 %v928
    %vm935 = vmor %vm933, %vm934
    %v936 = vsel %vm935, %v928, %v932
    %v937 = vand.u32 2147483647, %v927
    %vm938 = vcmp.eq.f32.partialorder %v937, 8.507059e+37
    %v939 = vand.u32 %v927, 2147483648
    %v940 = vor.u32 1.1754944e-38, %v939
    %v941 = vsel %vm938, %v940, %v936
    %v942 = vmul.f32 1.0, %v941
    %v943 = vadd.f32 %v942, 1.0
    %s944 = sld [smem:[#allocation12 + $0x7]]
    %v945 = vstv %s944
    %v946 = vmul.f32 %v943, %v945
    %v947 = vld [vmem:[#allocation2 + $0x1c] sm:$0xf]
    %v950 = vunpack.c.l.s4 269488144
    %v951 = vunpack.c.0.s8 %v950
    %v952 = vperm.slane %v946, %v951
    %v954 = vmul.f32 %v947, %v952
    %s955 = sld [smem:[#allocation13 + $0x7]]
    %v956 = vstv %s955
    %v957 = vadd.f32 %v954, %v956
    %v958 = vsub.f32 0.0, %v957
    %v959 = vmul.f32 %v958, 1.442695
    %v960 = vpow.pop %v959
    %v961 = vadd.f32 %v960, 1.0
    %v962 = vrcp.pop %v961
    %v963 = vmul.f32 %v961, %v962
    %v964 = vsub.f32 1.0, %v963
    %v965 = vmul.f32 %v962, %v964
    %v966 = vadd.f32 %v962, %v965
    %vm967 = vweird.f32 %v961
    %vm968 = vweird.f32 %v962
    %vm969 = vmor %vm967, %vm968
    %v970 = vsel %vm969, %v962, %v966
    %v971 = vand.u32 2147483647, %v961
    %vm972 = vcmp.eq.f32.partialorder %v971, 8.507059e+37
    %v973 = vand.u32 %v961, 2147483648
    %v974 = vor.u32 1.1754944e-38, %v973
    %v975 = vsel %vm972, %v974, %v970
    %v976 = vmul.f32 1.0, %v975
    %977 = vst [vmem:[#allocation15 + $0x1c] sm:$0xf] %v976
    %s978 = sld [smem:[#allocation10 + $0x8]]
    %s979 = sld [smem:[#allocation9 + $0x400]]
    %v980 = vstv %s979
    %v981 = vmul.f32 %v980, %v399
    %v982 = vstv %s978
    %v983 = vadd.f32 %v982, %v981
    %s984 = sld [smem:[#allocation9 + $0x401]]
    %v985 = vstv %s984
    %v986 = vmul.f32 %v985, %v466
    %v987 = vadd.f32 %v983, %v986
    %v988 = vsub.f32 0.0, %v987
    %v989 = vmul.f32 %v988, 1.442695
    %v990 = vpow.pop %v989
    %v991 = vadd.f32 %v990, 1.0
    %v992 = vrcp.pop %v991
    %v993 = vmul.f32 %v991, %v992
    %v994 = vsub.f32 1.0, %v993
    %v995 = vmul.f32 %v992, %v994
    %v996 = vadd.f32 %v992, %v995
    %vm997 = vweird.f32 %v991
    %vm998 = vweird.f32 %v992
    %vm999 = vmor %vm997, %vm998
    %v1000 = vsel %vm999, %v992, %v996
    %v1001 = vand.u32 2147483647, %v991
    %vm1002 = vcmp.eq.f32.partialorder %v1001, 8.507059e+37
    %v1003 = vand.u32 %v991, 2147483648
    %v1004 = vor.u32 1.1754944e-38, %v1003
    %v1005 = vsel %vm1002, %v1004, %v1000
    %v1006 = vmul.f32 1.0, %v1005
    %v1007 = vadd.f32 %v1006, 1.0
    %s1008 = sld [smem:[#allocation12 + $0x8]]
    %v1009 = vstv %s1008
    %v1010 = vmul.f32 %v1007, %v1009
    %v1011 = vld [vmem:[#allocation2 + $0x20] sm:$0xf]
    %v1014 = vunpack.c.l.s4 269488144
    %v1015 = vunpack.c.0.s8 %v1014
    %v1016 = vperm.slane %v1010, %v1015
    %v1018 = vmul.f32 %v1011, %v1016
    %s1019 = sld [smem:[#allocation13 + $0x8]]
    %v1020 = vstv %s1019
    %v1021 = vadd.f32 %v1018, %v1020
    %v1022 = vsub.f32 0.0, %v1021
    %v1023 = vmul.f32 %v1022, 1.442695
    %v1024 = vpow.pop %v1023
    %v1025 = vadd.f32 %v1024, 1.0
    %v1026 = vrcp.pop %v1025
    %v1027 = vmul.f32 %v1025, %v1026
    %v1028 = vsub.f32 1.0, %v1027
    %v1029 = vmul.f32 %v1026, %v1028
    %v1030 = vadd.f32 %v1026, %v1029
    %vm1031 = vweird.f32 %v1025
    %vm1032 = vweird.f32 %v1026
    %vm1033 = vmor %vm1031, %vm1032
    %v1034 = vsel %vm1033, %v1026, %v1030
    %v1035 = vand.u32 2147483647, %v1025
    %vm1036 = vcmp.eq.f32.partialorder %v1035, 8.507059e+37
    %v1037 = vand.u32 %v1025, 2147483648
    %v1038 = vor.u32 1.1754944e-38, %v1037
    %v1039 = vsel %vm1036, %v1038, %v1034
    %v1040 = vmul.f32 1.0, %v1039
    %1041 = vst [vmem:[#allocation15 + $0x20] sm:$0xf] %v1040
    %s1042 = sld [smem:[#allocation10 + $0x9]]
    %s1043 = sld [smem:[#allocation9 + $0x480]]
    %v1044 = vstv %s1043
    %v1045 = vmul.f32 %v1044, %v399
    %v1046 = vstv %s1042
    %v1047 = vadd.f32 %v1046, %v1045
    %s1048 = sld [smem:[#allocation9 + $0x481]]
    %v1049 = vstv %s1048
    %v1050 = vmul.f32 %v1049, %v466
    %v1051 = vadd.f32 %v1047, %v1050
    %v1052 = vsub.f32 0.0, %v1051
    %v1053 = vmul.f32 %v1052, 1.442695
    %v1054 = vpow.pop %v1053
    %v1055 = vadd.f32 %v1054, 1.0
    %v1056 = vrcp.pop %v1055
    %v1057 = vmul.f32 %v1055, %v1056
    %v1058 = vsub.f32 1.0, %v1057
    %v1059 = vmul.f32 %v1056, %v1058
    %v1060 = vadd.f32 %v1056, %v1059
    %vm1061 = vweird.f32 %v1055
    %vm1062 = vweird.f32 %v1056
    %vm1063 = vmor %vm1061, %vm1062
    %v1064 = vsel %vm1063, %v1056, %v1060
    %v1065 = vand.u32 2147483647, %v1055
    %vm1066 = vcmp.eq.f32.partialorder %v1065, 8.507059e+37
    %v1067 = vand.u32 %v1055, 2147483648
    %v1068 = vor.u32 1.1754944e-38, %v1067
    %v1069 = vsel %vm1066, %v1068, %v1064
    %v1070 = vmul.f32 1.0, %v1069
    %v1071 = vadd.f32 %v1070, 1.0
    %s1072 = sld [smem:[#allocation12 + $0x9]]
    %v1073 = vstv %s1072
    %v1074 = vmul.f32 %v1071, %v1073
    %v1075 = vld [vmem:[#allocation2 + $0x24] sm:$0xf]
    %v1078 = vunpack.c.l.s4 269488144
    %v1079 = vunpack.c.0.s8 %v1078
    %v1080 = vperm.slane %v1074, %v1079
    %v1082 = vmul.f32 %v1075, %v1080
    %s1083 = sld [smem:[#allocation13 + $0x9]]
    %v1084 = vstv %s1083
    %v1085 = vadd.f32 %v1082, %v1084
    %v1086 = vsub.f32 0.0, %v1085
    %v1087 = vmul.f32 %v1086, 1.442695
    %v1088 = vpow.pop %v1087
    %v1089 = vadd.f32 %v1088, 1.0
    %v1090 = vrcp.pop %v1089
    %v1091 = vmul.f32 %v1089, %v1090
    %v1092 = vsub.f32 1.0, %v1091
    %v1093 = vmul.f32 %v1090, %v1092
    %v1094 = vadd.f32 %v1090, %v1093
    %vm1095 = vweird.f32 %v1089
    %vm1096 = vweird.f32 %v1090
    %vm1097 = vmor %vm1095, %vm1096
    %v1098 = vsel %vm1097, %v1090, %v1094
    %v1099 = vand.u32 2147483647, %v1089
    %vm1100 = vcmp.eq.f32.partialorder %v1099, 8.507059e+37
    %v1101 = vand.u32 %v1089, 2147483648
    %v1102 = vor.u32 1.1754944e-38, %v1101
    %v1103 = vsel %vm1100, %v1102, %v1098
    %v1104 = vmul.f32 1.0, %v1103
    %1105 = vst [vmem:[#allocation15 + $0x24] sm:$0xf] %v1104
    %s1106 = sld [smem:[#allocation10 + $0xa]]
    %s1107 = sld [smem:[#allocation9 + $0x500]]
    %v1108 = vstv %s1107
    %v1109 = vmul.f32 %v1108, %v399
    %v1110 = vstv %s1106
    %v1111 = vadd.f32 %v1110, %v1109
    %s1112 = sld [smem:[#allocation9 + $0x501]]
    %v1113 = vstv %s1112
    %v1114 = vmul.f32 %v1113, %v466
    %v1115 = vadd.f32 %v1111, %v1114
    %v1116 = vsub.f32 0.0, %v1115
    %v1117 = vmul.f32 %v1116, 1.442695
    %v1118 = vpow.pop %v1117
    %v1119 = vadd.f32 %v1118, 1.0
    %v1120 = vrcp.pop %v1119
    %v1121 = vmul.f32 %v1119, %v1120
    %v1122 = vsub.f32 1.0, %v1121
    %v1123 = vmul.f32 %v1120, %v1122
    %v1124 = vadd.f32 %v1120, %v1123
    %vm1125 = vweird.f32 %v1119
    %vm1126 = vweird.f32 %v1120
    %vm1127 = vmor %vm1125, %vm1126
    %v1128 = vsel %vm1127, %v1120, %v1124
    %v1129 = vand.u32 2147483647, %v1119
    %vm1130 = vcmp.eq.f32.partialorder %v1129, 8.507059e+37
    %v1131 = vand.u32 %v1119, 2147483648
    %v1132 = vor.u32 1.1754944e-38, %v1131
    %v1133 = vsel %vm1130, %v1132, %v1128
    %v1134 = vmul.f32 1.0, %v1133
    %v1135 = vadd.f32 %v1134, 1.0
    %s1136 = sld [smem:[#allocation12 + $0xa]]
    %v1137 = vstv %s1136
    %v1138 = vmul.f32 %v1135, %v1137
    %v1139 = vld [vmem:[#allocation2 + $0x28] sm:$0xf]
    %v1142 = vunpack.c.l.s4 269488144
    %v1143 = vunpack.c.0.s8 %v1142
    %v1144 = vperm.slane %v1138, %v1143
    %v1146 = vmul.f32 %v1139, %v1144
    %s1147 = sld [smem:[#allocation13 + $0xa]]
    %v1148 = vstv %s1147
    %v1149 = vadd.f32 %v1146, %v1148
    %v1150 = vsub.f32 0.0, %v1149
    %v1151 = vmul.f32 %v1150, 1.442695
    %v1152 = vpow.pop %v1151
    %v1153 = vadd.f32 %v1152, 1.0
    %v1154 = vrcp.pop %v1153
    %v1155 = vmul.f32 %v1153, %v1154
    %v1156 = vsub.f32 1.0, %v1155
    %v1157 = vmul.f32 %v1154, %v1156
    %v1158 = vadd.f32 %v1154, %v1157
    %vm1159 = vweird.f32 %v1153
    %vm1160 = vweird.f32 %v1154
    %vm1161 = vmor %vm1159, %vm1160
    %v1162 = vsel %vm1161, %v1154, %v1158
    %v1163 = vand.u32 2147483647, %v1153
    %vm1164 = vcmp.eq.f32.partialorder %v1163, 8.507059e+37
    %v1165 = vand.u32 %v1153, 2147483648
    %v1166 = vor.u32 1.1754944e-38, %v1165
    %v1167 = vsel %vm1164, %v1166, %v1162
    %v1168 = vmul.f32 1.0, %v1167
    %1169 = vst [vmem:[#allocation15 + $0x28] sm:$0xf] %v1168
    %s1170 = sld [smem:[#allocation10 + $0xb]]
    %s1171 = sld [smem:[#allocation9 + $0x580]]
    %v1172 = vstv %s1171
    %v1173 = vmul.f32 %v1172, %v399
    %v1174 = vstv %s1170
    %v1175 = vadd.f32 %v1174, %v1173
    %s1176 = sld [smem:[#allocation9 + $0x581]]
    %v1177 = vstv %s1176
    %v1178 = vmul.f32 %v1177, %v466
    %v1179 = vadd.f32 %v1175, %v1178
    %v1180 = vsub.f32 0.0, %v1179
    %v1181 = vmul.f32 %v1180, 1.442695
    %v1182 = vpow.pop %v1181
    %v1183 = vadd.f32 %v1182, 1.0
    %v1184 = vrcp.pop %v1183
    %v1185 = vmul.f32 %v1183, %v1184
    %v1186 = vsub.f32 1.0, %v1185
    %v1187 = vmul.f32 %v1184, %v1186
    %v1188 = vadd.f32 %v1184, %v1187
    %vm1189 = vweird.f32 %v1183
    %vm1190 = vweird.f32 %v1184
    %vm1191 = vmor %vm1189, %vm1190
    %v1192 = vsel %vm1191, %v1184, %v1188
    %v1193 = vand.u32 2147483647, %v1183
    %vm1194 = vcmp.eq.f32.partialorder %v1193, 8.507059e+37
    %v1195 = vand.u32 %v1183, 2147483648
    %v1196 = vor.u32 1.1754944e-38, %v1195
    %v1197 = vsel %vm1194, %v1196, %v1192
    %v1198 = vmul.f32 1.0, %v1197
    %v1199 = vadd.f32 %v1198, 1.0
    %s1200 = sld [smem:[#allocation12 + $0xb]]
    %v1201 = vstv %s1200
    %v1202 = vmul.f32 %v1199, %v1201
    %v1203 = vld [vmem:[#allocation2 + $0x2c] sm:$0xf]
    %v1206 = vunpack.c.l.s4 269488144
    %v1207 = vunpack.c.0.s8 %v1206
    %v1208 = vperm.slane %v1202, %v1207
    %v1210 = vmul.f32 %v1203, %v1208
    %s1211 = sld [smem:[#allocation13 + $0xb]]
    %v1212 = vstv %s1211
    %v1213 = vadd.f32 %v1210, %v1212
    %v1214 = vsub.f32 0.0, %v1213
    %v1215 = vmul.f32 %v1214, 1.442695
    %v1216 = vpow.pop %v1215
    %v1217 = vadd.f32 %v1216, 1.0
    %v1218 = vrcp.pop %v1217
    %v1219 = vmul.f32 %v1217, %v1218
    %v1220 = vsub.f32 1.0, %v1219
    %v1221 = vmul.f32 %v1218, %v1220
    %v1222 = vadd.f32 %v1218, %v1221
    %vm1223 = vweird.f32 %v1217
    %vm1224 = vweird.f32 %v1218
    %vm1225 = vmor %vm1223, %vm1224
    %v1226 = vsel %vm1225, %v1218, %v1222
    %v1227 = vand.u32 2147483647, %v1217
    %vm1228 = vcmp.eq.f32.partialorder %v1227, 8.507059e+37
    %v1229 = vand.u32 %v1217, 2147483648
    %v1230 = vor.u32 1.1754944e-38, %v1229
    %v1231 = vsel %vm1228, %v1230, %v1226
    %v1232 = vmul.f32 1.0, %v1231
    %1233 = vst [vmem:[#allocation15 + $0x2c] sm:$0xf] %v1232
    %s1234 = sld [smem:[#allocation10 + $0xc]]
    %s1235 = sld [smem:[#allocation9 + $0x600]]
    %v1236 = vstv %s1235
    %v1237 = vmul.f32 %v1236, %v399
    %v1238 = vstv %s1234
    %v1239 = vadd.f32 %v1238, %v1237
    %s1240 = sld [smem:[#allocation9 + $0x601]]
    %v1241 = vstv %s1240
    %v1242 = vmul.f32 %v1241, %v466
    %v1243 = vadd.f32 %v1239, %v1242
    %v1244 = vsub.f32 0.0, %v1243
    %v1245 = vmul.f32 %v1244, 1.442695
    %v1246 = vpow.pop %v1245
    %v1247 = vadd.f32 %v1246, 1.0
    %v1248 = vrcp.pop %v1247
    %v1249 = vmul.f32 %v1247, %v1248
    %v1250 = vsub.f32 1.0, %v1249
    %v1251 = vmul.f32 %v1248, %v1250
    %v1252 = vadd.f32 %v1248, %v1251
    %vm1253 = vweird.f32 %v1247
    %vm1254 = vweird.f32 %v1248
    %vm1255 = vmor %vm1253, %vm1254
    %v1256 = vsel %vm1255, %v1248, %v1252
    %v1257 = vand.u32 2147483647, %v1247
    %vm1258 = vcmp.eq.f32.partialorder %v1257, 8.507059e+37
    %v1259 = vand.u32 %v1247, 2147483648
    %v1260 = vor.u32 1.1754944e-38, %v1259
    %v1261 = vsel %vm1258, %v1260, %v1256
    %v1262 = vmul.f32 1.0, %v1261
    %v1263 = vadd.f32 %v1262, 1.0
    %s1264 = sld [smem:[#allocation12 + $0xc]]
    %v1265 = vstv %s1264
    %v1266 = vmul.f32 %v1263, %v1265
    %v1267 = vld [vmem:[#allocation2 + $0x30] sm:$0xf]
    %v1270 = vunpack.c.l.s4 269488144
    %v1271 = vunpack.c.0.s8 %v1270
    %v1272 = vperm.slane %v1266, %v1271
    %v1274 = vmul.f32 %v1267, %v1272
    %s1275 = sld [smem:[#allocation13 + $0xc]]
    %v1276 = vstv %s1275
    %v1277 = vadd.f32 %v1274, %v1276
    %v1278 = vsub.f32 0.0, %v1277
    %v1279 = vmul.f32 %v1278, 1.442695
    %v1280 = vpow.pop %v1279
    %v1281 = vadd.f32 %v1280, 1.0
    %v1282 = vrcp.pop %v1281
    %v1283 = vmul.f32 %v1281, %v1282
    %v1284 = vsub.f32 1.0, %v1283
    %v1285 = vmul.f32 %v1282, %v1284
    %v1286 = vadd.f32 %v1282, %v1285
    %vm1287 = vweird.f32 %v1281
    %vm1288 = vweird.f32 %v1282
    %vm1289 = vmor %vm1287, %vm1288
    %v1290 = vsel %vm1289, %v1282, %v1286
    %v1291 = vand.u32 2147483647, %v1281
    %vm1292 = vcmp.eq.f32.partialorder %v1291, 8.507059e+37
    %v1293 = vand.u32 %v1281, 2147483648
    %v1294 = vor.u32 1.1754944e-38, %v1293
    %v1295 = vsel %vm1292, %v1294, %v1290
    %v1296 = vmul.f32 1.0, %v1295
    %1297 = vst [vmem:[#allocation15 + $0x30] sm:$0xf] %v1296
    %s1298 = sld [smem:[#allocation10 + $0xd]]
    %s1299 = sld [smem:[#allocation9 + $0x680]]
    %v1300 = vstv %s1299
    %v1301 = vmul.f32 %v1300, %v399
    %v1302 = vstv %s1298
    %v1303 = vadd.f32 %v1302, %v1301
    %s1304 = sld [smem:[#allocation9 + $0x681]]
    %v1305 = vstv %s1304
    %v1306 = vmul.f32 %v1305, %v466
    %v1307 = vadd.f32 %v1303, %v1306
    %v1308 = vsub.f32 0.0, %v1307
    %v1309 = vmul.f32 %v1308, 1.442695
    %v1310 = vpow.pop %v1309
    %v1311 = vadd.f32 %v1310, 1.0
    %v1312 = vrcp.pop %v1311
    %v1313 = vmul.f32 %v1311, %v1312
    %v1314 = vsub.f32 1.0, %v1313
    %v1315 = vmul.f32 %v1312, %v1314
    %v1316 = vadd.f32 %v1312, %v1315
    %vm1317 = vweird.f32 %v1311
    %vm1318 = vweird.f32 %v1312
    %vm1319 = vmor %vm1317, %vm1318
    %v1320 = vsel %vm1319, %v1312, %v1316
    %v1321 = vand.u32 2147483647, %v1311
    %vm1322 = vcmp.eq.f32.partialorder %v1321, 8.507059e+37
    %v1323 = vand.u32 %v1311, 2147483648
    %v1324 = vor.u32 1.1754944e-38, %v1323
    %v1325 = vsel %vm1322, %v1324, %v1320
    %v1326 = vmul.f32 1.0, %v1325
    %v1327 = vadd.f32 %v1326, 1.0
    %s1328 = sld [smem:[#allocation12 + $0xd]]
    %v1329 = vstv %s1328
    %v1330 = vmul.f32 %v1327, %v1329
    %v1331 = vld [vmem:[#allocation2 + $0x34] sm:$0xf]
    %v1334 = vunpack.c.l.s4 269488144
    %v1335 = vunpack.c.0.s8 %v1334
    %v1336 = vperm.slane %v1330, %v1335
    %v1338 = vmul.f32 %v1331, %v1336
    %s1339 = sld [smem:[#allocation13 + $0xd]]
    %v1340 = vstv %s1339
    %v1341 = vadd.f32 %v1338, %v1340
    %v1342 = vsub.f32 0.0, %v1341
    %v1343 = vmul.f32 %v1342, 1.442695
    %v1344 = vpow.pop %v1343
    %v1345 = vadd.f32 %v1344, 1.0
    %v1346 = vrcp.pop %v1345
    %v1347 = vmul.f32 %v1345, %v1346
    %v1348 = vsub.f32 1.0, %v1347
    %v1349 = vmul.f32 %v1346, %v1348
    %v1350 = vadd.f32 %v1346, %v1349
    %vm1351 = vweird.f32 %v1345
    %vm1352 = vweird.f32 %v1346
    %vm1353 = vmor %vm1351, %vm1352
    %v1354 = vsel %vm1353, %v1346, %v1350
    %v1355 = vand.u32 2147483647, %v1345
    %vm1356 = vcmp.eq.f32.partialorder %v1355, 8.507059e+37
    %v1357 = vand.u32 %v1345, 2147483648
    %v1358 = vor.u32 1.1754944e-38, %v1357
    %v1359 = vsel %vm1356, %v1358, %v1354
    %v1360 = vmul.f32 1.0, %v1359
    %1361 = vst [vmem:[#allocation15 + $0x34] sm:$0xf] %v1360
    %s1362 = sld [smem:[#allocation10 + $0xe]]
    %s1363 = sld [smem:[#allocation9 + $0x700]]
    %v1364 = vstv %s1363
    %v1365 = vmul.f32 %v1364, %v399
    %v1366 = vstv %s1362
    %v1367 = vadd.f32 %v1366, %v1365
    %s1368 = sld [smem:[#allocation9 + $0x701]]
    %v1369 = vstv %s1368
    %v1370 = vmul.f32 %v1369, %v466
    %v1371 = vadd.f32 %v1367, %v1370
    %v1372 = vsub.f32 0.0, %v1371
    %v1373 = vmul.f32 %v1372, 1.442695
    %v1374 = vpow.pop %v1373
    %v1375 = vadd.f32 %v1374, 1.0
    %v1376 = vrcp.pop %v1375
    %v1377 = vmul.f32 %v1375, %v1376
    %v1378 = vsub.f32 1.0, %v1377
    %v1379 = vmul.f32 %v1376, %v1378
    %v1380 = vadd.f32 %v1376, %v1379
    %vm1381 = vweird.f32 %v1375
    %vm1382 = vweird.f32 %v1376
    %vm1383 = vmor %vm1381, %vm1382
    %v1384 = vsel %vm1383, %v1376, %v1380
    %v1385 = vand.u32 2147483647, %v1375
    %vm1386 = vcmp.eq.f32.partialorder %v1385, 8.507059e+37
    %v1387 = vand.u32 %v1375, 2147483648
    %v1388 = vor.u32 1.1754944e-38, %v1387
    %v1389 = vsel %vm1386, %v1388, %v1384
    %v1390 = vmul.f32 1.0, %v1389
    %v1391 = vadd.f32 %v1390, 1.0
    %s1392 = sld [smem:[#allocation12 + $0xe]]
    %v1393 = vstv %s1392
    %v1394 = vmul.f32 %v1391, %v1393
    %v1395 = vld [vmem:[#allocation2 + $0x38] sm:$0xf]
    %v1398 = vunpack.c.l.s4 269488144
    %v1399 = vunpack.c.0.s8 %v1398
    %v1400 = vperm.slane %v1394, %v1399
    %v1402 = vmul.f32 %v1395, %v1400
    %s1403 = sld [smem:[#allocation13 + $0xe]]
    %v1404 = vstv %s1403
    %v1405 = vadd.f32 %v1402, %v1404
    %v1406 = vsub.f32 0.0, %v1405
    %v1407 = vmul.f32 %v1406, 1.442695
    %v1408 = vpow.pop %v1407
    %v1409 = vadd.f32 %v1408, 1.0
    %v1410 = vrcp.pop %v1409
    %v1411 = vmul.f32 %v1409, %v1410
    %v1412 = vsub.f32 1.0, %v1411
    %v1413 = vmul.f32 %v1410, %v1412
    %v1414 = vadd.f32 %v1410, %v1413
    %vm1415 = vweird.f32 %v1409
    %vm1416 = vweird.f32 %v1410
    %vm1417 = vmor %vm1415, %vm1416
    %v1418 = vsel %vm1417, %v1410, %v1414
    %v1419 = vand.u32 2147483647, %v1409
    %vm1420 = vcmp.eq.f32.partialorder %v1419, 8.507059e+37
    %v1421 = vand.u32 %v1409, 2147483648
    %v1422 = vor.u32 1.1754944e-38, %v1421
    %v1423 = vsel %vm1420, %v1422, %v1418
    %v1424 = vmul.f32 1.0, %v1423
    %1425 = vst [vmem:[#allocation15 + $0x38] sm:$0xf] %v1424
    %s1426 = sld [smem:[#allocation10 + $0xf]]
    %s1427 = sld [smem:[#allocation9 + $0x780]]
    %v1428 = vstv %s1427
    %v1429 = vmul.f32 %v1428, %v399
    %v1430 = vstv %s1426
    %v1431 = vadd.f32 %v1430, %v1429
    %s1432 = sld [smem:[#allocation9 + $0x781]]
    %v1433 = vstv %s1432
    %v1434 = vmul.f32 %v1433, %v466
    %v1435 = vadd.f32 %v1431, %v1434
    %v1436 = vsub.f32 0.0, %v1435
    %v1437 = vmul.f32 %v1436, 1.442695
    %v1438 = vpow.pop %v1437
    %v1439 = vadd.f32 %v1438, 1.0
    %v1440 = vrcp.pop %v1439
    %v1441 = vmul.f32 %v1439, %v1440
    %v1442 = vsub.f32 1.0, %v1441
    %v1443 = vmul.f32 %v1440, %v1442
    %v1444 = vadd.f32 %v1440, %v1443
    %vm1445 = vweird.f32 %v1439
    %vm1446 = vweird.f32 %v1440
    %vm1447 = vmor %vm1445, %vm1446
    %v1448 = vsel %vm1447, %v1440, %v1444
    %v1449 = vand.u32 2147483647, %v1439
    %vm1450 = vcmp.eq.f32.partialorder %v1449, 8.507059e+37
    %v1451 = vand.u32 %v1439, 2147483648
    %v1452 = vor.u32 1.1754944e-38, %v1451
    %v1453 = vsel %vm1450, %v1452, %v1448
    %v1454 = vmul.f32 1.0, %v1453
    %v1455 = vadd.f32 %v1454, 1.0
    %s1456 = sld [smem:[#allocation12 + $0xf]]
    %v1457 = vstv %s1456
    %v1458 = vmul.f32 %v1455, %v1457
    %v1459 = vld [vmem:[#allocation2 + $0x3c] sm:$0xf]
    %v1462 = vunpack.c.l.s4 269488144
    %v1463 = vunpack.c.0.s8 %v1462
    %v1464 = vperm.slane %v1458, %v1463
    %v1466 = vmul.f32 %v1459, %v1464
    %s1467 = sld [smem:[#allocation13 + $0xf]]
    %v1468 = vstv %s1467
    %v1469 = vadd.f32 %v1466, %v1468
    %v1470 = vsub.f32 0.0, %v1469
    %v1471 = vmul.f32 %v1470, 1.442695
    %v1472 = vpow.pop %v1471
    %v1473 = vadd.f32 %v1472, 1.0
    %v1474 = vrcp.pop %v1473
    %v1475 = vmul.f32 %v1473, %v1474
    %v1476 = vsub.f32 1.0, %v1475
    %v1477 = vmul.f32 %v1474, %v1476
    %v1478 = vadd.f32 %v1474, %v1477
    %vm1479 = vweird.f32 %v1473
    %vm1480 = vweird.f32 %v1474
    %vm1481 = vmor %vm1479, %vm1480
    %v1482 = vsel %vm1481, %v1474, %v1478
    %v1483 = vand.u32 2147483647, %v1473
    %vm1484 = vcmp.eq.f32.partialorder %v1483, 8.507059e+37
    %v1485 = vand.u32 %v1473, 2147483648
    %v1486 = vor.u32 1.1754944e-38, %v1485
    %v1487 = vsel %vm1484, %v1486, %v1482
    %v1488 = vmul.f32 1.0, %v1487
    %1489 = vst [vmem:[#allocation15 + $0x3c] sm:$0xf] %v1488
    // Predicated region
    $region62: #{tpu_custom_call.1} parent=1 // pred_check
      _
    $region63: #{tpu_custom_call.1} parent=1 // pred_check_branch
      %1491 = sbr.rel (0) target = $region65
    $region64: #{tpu_custom_call.1} parent=1 // pred_region
      %1493 = vsyncadd [#allocation4], 0
      %s1495 = sshll.u32 [#allocation15], 4
      %s1496 = int_to_ptr.vmem [resolvable:$true] %s1495
      %s1497 = sshll.u32 %s8, 4
      %s1498 = int_to_ptr.hbm [resolvable:$true] %s1497
      %1500 = dma.vmem_to_hbm [thread:$0]  %s1496, 1024, %s1498, [#allocation4]
    $region65: #{tpu_custom_call.1} parent=1 // pred_fallthru
      _
    // Predicated region
    $region66: #{tpu_custom_call.1} parent=1 // pred_check
      _
    $region67: #{tpu_custom_call.1} parent=1 // pred_check_branch
      %1502 = sbr.rel (0) target = $region69
    $region68: #{tpu_custom_call.1} parent=1 // pred_region
      %1504 = dma.done [#allocation4], 1024
    $region69: #{tpu_custom_call.1} parent=1 // pred_fallthru
      _
    %1505 = vsyncpa [#allocation3], 1
    %1506 = vsyncpa [#allocation4], 1
    %1507 = vsyncpa [#allocation5], 1
    %1508 = vsyncpa [#allocation8], 1
    %1509 = vsyncpa [#allocation11], 1
    %1510 = vsyncpa [#allocation14], 1

// kernel: tpu_custom_call.1
$region0: #{tpu_custom_call.1}
  #allocation0 [shape = 'u32[]', space=smem, size = 0x4, offset = 0x4, fixed_abs, tag = 'smem constant byte address 0x4 - core index']
  #allocation1 [shape = 'u32[72,128]{1,0:T(1,128)}', space=vmem, size = 0x9000, scoped, tag = 'internal scratch']
  %s0 = inlined_call_operand.hbm [shape: f32[2,4096], index: 0, kind: input, shape index: {}]
  %s1 = inlined_call_operand.vmem [shape: f32[1,256], index: 1, kind: input, shape index: {}]
  %s2 = inlined_call_operand.vmem [shape: f32[2,16], index: 2, kind: input, shape index: {}]
  %s3 = inlined_call_operand.vmem [shape: f32[2], index: 3, kind: input, shape index: {}]
  %s4 = inlined_call_operand.vmem [shape: f32[16,2], index: 4, kind: input, shape index: {}]
  %s5 = inlined_call_operand.vmem [shape: f32[16], index: 5, kind: input, shape index: {}]
  %s6 = inlined_call_operand.vmem [shape: f32[16], index: 6, kind: input, shape index: {}]
  %s7 = inlined_call_operand.vmem [shape: f32[16], index: 7, kind: input, shape index: {}]
  %s8 = inlined_call_operand.hbm [shape: f32[2,4096], index: 8, kind: output, shape index: {}]
  %s9 = sld [smem:[#allocation0]]
  $region70: #{tpu_custom_call.1} parent=0
    _
  %s11 = ssub.s32 1, %s9
  %s12 = scalar_select 0, %s11, %s9
  $region1: #{tpu_custom_call.1} parent=0
    #allocation2 [shape = 'u8[32768]{0}', space=vmem, size = 0x8000, scoped, tag = 'input window, operand 0, single buffered']
    #allocation3 [shape = 's32[1]{0}', space=sflag, size = 0x4, scoped, tag = 'scoped memory for tpu_custom_call.1']
    #allocation4 [shape = 's32[1]{0}', space=sflag, size = 0x4, scoped, tag = 'scoped memory for tpu_custom_call.1']
    #allocation5 [shape = 's32[1]{0}', space=sflag, size = 0x4, scoped, tag = 'scoped memory for tpu_custom_call.1']
    #allocation6 [shape = 'u8[1024]{0}', space=smem, size = 0x400, scoped, tag = 'input window, operand 2, single buffered']
    #allocation7 [shape = 'u8[512]{0}', space=smem, size = 0x200, scoped, tag = 'input window, operand 3, single buffered']
    #allocation8 [shape = 's32[1]{0}', space=sflag, size = 0x4, scoped, tag = 'scoped memory for tpu_custom_call.1']
    #allocation9 [shape = 'u8[8192]{0}', space=smem, size = 0x2000, scoped, tag = 'input window, operand 4, single buffered']
    #allocation10 [shape = 'u8[512]{0}', space=smem, size = 0x200, scoped, tag = 'input window, operand 5, single buffered']
    #allocation11 [shape = 's32[1]{0}', space=sflag, size = 0x4, scoped, tag = 'scoped memory for tpu_custom_call.1']
    #allocation12 [shape = 'u8[512]{0}', space=smem, size = 0x200, scoped, tag = 'input window, operand 6, single buffered']
    #allocation13 [shape = 'u8[512]{0}', space=smem, size = 0x200, scoped, tag = 'input window, operand 7, single buffered']
    #allocation14 [shape = 's32[1]{0}', space=sflag, size = 0x4, scoped, tag = 'scoped memory for tpu_custom_call.1']
    #allocation15 [shape = 'u8[32768]{0}', space=vmem, size = 0x8000, scoped, tag = 'output window, operand 0, single buffered']
    %13 = vsyncpa [#allocation3], 0
    %14 = vsyncpa [#allocation5], 0
    %15 = vsyncpa [#allocation8], 0
    %16 = vsyncpa [#allocation11], 0
    %17 = vsyncpa [#allocation14], 0
    %18 = vsyncpa [#allocation4], 0
    // Predicated region
    $region2: #{tpu_custom_call.1} parent=1 // pred_check
      _
    $region3: #{tpu_custom_call.1} parent=1 // pred_check_branch
      %20 = sbr.rel (0) target = $region5
    $region4: #{tpu_custom_call.1} parent=1 // pred_region
      %22 = vsyncadd [#allocation3], 0
      %s24 = sshll.u32 %s0, 4
      %s25 = int_to_ptr.hbm [resolvable:$true] %s24
      %s26 = sshll.u32 [#allocation2], 4
      %s27 = int_to_ptr.vmem [resolvable:$true] %s26
      %29 = dma.hbm_to_vmem [thread:$0]  %s25, 1024, %s27, [#allocation3]
    $region5: #{tpu_custom_call.1} parent=1 // pred_fallthru
      _
    // Predicated region
    $region6: #{tpu_custom_call.1} parent=1 // pred_check
      _
    $region7: #{tpu_custom_call.1} parent=1 // pred_check_branch
      %31 = sbr.rel (0) target = $region9
    $region8: #{tpu_custom_call.1} parent=1 // pred_region
      _
    $region9: #{tpu_custom_call.1} parent=1 // pred_fallthru
      _
    // Predicated region
    $region10: #{tpu_custom_call.1} parent=1 // pred_check
      _
    $region11: #{tpu_custom_call.1} parent=1 // pred_check_branch
      %33 = sbr.rel (0) target = $region13
    $region12: #{tpu_custom_call.1} parent=1 // pred_region
      %35 = vsyncadd [#allocation5], 0
      %s37 = sshll.u32 %s2, 4
      %s38 = int_to_ptr.vmem [resolvable:$true] %s37
      %40 = dma.vmem_to_smem %s38, 32, [#allocation6], [#allocation5]
    $region13: #{tpu_custom_call.1} parent=1 // pred_fallthru
      _
    // Predicated region
    $region14: #{tpu_custom_call.1} parent=1 // pred_check
      _
    $region15: #{tpu_custom_call.1} parent=1 // pred_check_branch
      %42 = sbr.rel (0) target = $region17
    $region16: #{tpu_custom_call.1} parent=1 // pred_region
      %44 = vsyncadd [#allocation8], 0
      %s46 = sshll.u32 %s3, 4
      %s47 = int_to_ptr.vmem [resolvable:$true] %s46
      %49 = dma.vmem_to_smem %s47, 16, [#allocation7], [#allocation8]
    $region17: #{tpu_custom_call.1} parent=1 // pred_fallthru
      _
    // Predicated region
    $region18: #{tpu_custom_call.1} parent=1 // pred_check
      _
    $region19: #{tpu_custom_call.1} parent=1 // pred_check_branch
      %51 = sbr.rel (0) target = $region21
    $region20: #{tpu_custom_call.1} parent=1 // pred_region
      %53 = vsyncadd [#allocation8], 0
      %s54 = sshll.u32 %s4, 4
      %s55 = int_to_ptr.vmem [resolvable:$true] %s54
      %60 = dma.vmem_to_smem %s55, 256, [#allocation9], [#allocation8], 128, 128, 8
    $region21: #{tpu_custom_call.1} parent=1 // pred_fallthru
      _
    // Predicated region
    $region22: #{tpu_custom_call.1} parent=1 // pred_check
      _
    $region23: #{tpu_custom_call.1} parent=1 // pred_check_branch
      %62 = sbr.rel (0) target = $region25
    $region24: #{tpu_custom_call.1} parent=1 // pred_region
      %64 = vsyncadd [#allocation11], 0
      %s66 = sshll.u32 %s5, 4
      %s67 = int_to_ptr.vmem [resolvable:$true] %s66
      %69 = dma.vmem_to_smem %s67, 16, [#allocation10], [#allocation11]
    $region25: #{tpu_custom_call.1} parent=1 // pred_fallthru
      _
    // Predicated region
    $region26: #{tpu_custom_call.1} parent=1 // pred_check
      _
    $region27: #{tpu_custom_call.1} parent=1 // pred_check_branch
      %71 = sbr.rel (0) target = $region29
    $region28: #{tpu_custom_call.1} parent=1 // pred_region
      %73 = vsyncadd [#allocation11], 0
      %s75 = sshll.u32 %s6, 4
      %s76 = int_to_ptr.vmem [resolvable:$true] %s75
      %78 = dma.vmem_to_smem %s76, 16, [#allocation12], [#allocation11]
    $region29: #{tpu_custom_call.1} parent=1 // pred_fallthru
      _
    // Predicated region
    $region30: #{tpu_custom_call.1} parent=1 // pred_check
      _
    $region31: #{tpu_custom_call.1} parent=1 // pred_check_branch
      %80 = sbr.rel (0) target = $region33
    $region32: #{tpu_custom_call.1} parent=1 // pred_region
      %82 = vsyncadd [#allocation14], 0
      %s84 = sshll.u32 %s7, 4
      %s85 = int_to_ptr.vmem [resolvable:$true] %s84
      %87 = dma.vmem_to_smem %s85, 16, [#allocation13], [#allocation14]
    $region33: #{tpu_custom_call.1} parent=1 // pred_fallthru
      _
    // Predicated region
    $region34: #{tpu_custom_call.1} parent=1 // pred_check
      _
    $region35: #{tpu_custom_call.1} parent=1 // pred_check_branch
      %89 = sbr.rel (0) target = $region37
    $region36: #{tpu_custom_call.1} parent=1 // pred_region
      %91 = dma.done [#allocation3], 1024
    $region37: #{tpu_custom_call.1} parent=1 // pred_fallthru
      _
    // Predicated region
    $region38: #{tpu_custom_call.1} parent=1 // pred_check
      _
    $region39: #{tpu_custom_call.1} parent=1 // pred_check_branch
      %93 = sbr.rel (0) target = $region41
    $region40: #{tpu_custom_call.1} parent=1 // pred_region
      %95 = dma.done [#allocation5], 32
    $region41: #{tpu_custom_call.1} parent=1 // pred_fallthru
      _
    // Predicated region
    $region42: #{tpu_custom_call.1} parent=1 // pred_check
      _
    $region43: #{tpu_custom_call.1} parent=1 // pred_check_branch
      %97 = sbr.rel (0) target = $region45
    $region44: #{tpu_custom_call.1} parent=1 // pred_region
      %99 = dma.done [#allocation8], 16
    $region45: #{tpu_custom_call.1} parent=1 // pred_fallthru
      _
    // Predicated region
    $region46: #{tpu_custom_call.1} parent=1 // pred_check
      _
    $region47: #{tpu_custom_call.1} parent=1 // pred_check_branch
      %101 = sbr.rel (0) target = $region49
    $region48: #{tpu_custom_call.1} parent=1 // pred_region
      %103 = dma.done [#allocation8], 256
    $region49: #{tpu_custom_call.1} parent=1 // pred_fallthru
      _
    // Predicated region
    $region50: #{tpu_custom_call.1} parent=1 // pred_check
      _
    $region51: #{tpu_custom_call.1} parent=1 // pred_check_branch
      %105 = sbr.rel (0) target = $region53
    $region52: #{tpu_custom_call.1} parent=1 // pred_region
      %107 = dma.done [#allocation11], 16
    $region53: #{tpu_custom_call.1} parent=1 // pred_fallthru
      _
    // Predicated region
    $region54: #{tpu_custom_call.1} parent=1 // pred_check
      _
    $region55: #{tpu_custom_call.1} parent=1 // pred_check_branch
      %109 = sbr.rel (0) target = $region57
    $region56: #{tpu_custom_call.1} parent=1 // pred_region
      %111 = dma.done [#allocation11], 16
    $region57: #{tpu_custom_call.1} parent=1 // pred_fallthru
      _
    // Predicated region
    $region58: #{tpu_custom_call.1} parent=1 // pred_check
      _
    $region59: #{tpu_custom_call.1} parent=1 // pred_check_branch
      %113 = sbr.rel (0) target = $region61
    $region60: #{tpu_custom_call.1} parent=1 // pred_region
      %115 = dma.done [#allocation14], 16
    $region61: #{tpu_custom_call.1} parent=1 // pred_fallthru
      _
    %116 = sfence
    %v117 = vld [vmem:[%s1] sm:$0x3]
    %v118 = vld [vmem:[#allocation2] sm:$0xf]
    %v120 = vperm.slane %v117, 0
    %v121 = vperm.slane %v117, 1
    %v122 = vrot.slane %v121, 6
    %vm123 = vcmask 1041408
    %v124 = vsel %vm123, %v120, %v122
    %v126 = vmul.f32 %v118, %v124
    %128 = vst [vmem:[#allocation1] ss:$4 sm:$0xff] %v126
    %v129 = vld.sshfl [vmem:[#allocation1] sm:$0xff pattern:$0x73625140]
    %v130 = vld.sshfl [vmem:[#allocation1 + $0x8] sm:$0xff pattern:$0x73625140]
    %v133 = vsel %vm123, %v129, 0.0
    %v134 = vsel %vm123, %v130, 0.0
    %v135 = vadd.f32 %v133, %v134
    %136 = vadd.xlane.f32.xlu0 %v135
    %v137 = vpop.xlane.xlu0 %136
    %v138 = vld [vmem:[#allocation2 + $0x4] sm:$0xf]
    %v139 = vmul.f32 %v138, %v124
    %141 = vst [vmem:[#allocation1] ss:$4 sm:$0xff] %v139
    %v142 = vld.sshfl [vmem:[#allocation1] sm:$0xff pattern:$0x73625140]
    %v143 = vld.sshfl [vmem:[#allocation1 + $0x8] sm:$0xff pattern:$0x73625140]
    %v146 = vsel %vm123, %v142, 0.0
    %v147 = vsel %vm123, %v143, 0.0
    %v148 = vadd.f32 %v146, %v147
    %149 = vadd.xlane.f32.xlu0 %v148
    %v150 = vpop.xlane.xlu0 %149
    %v151 = vld [vmem:[#allocation2 + $0x8] sm:$0xf]
    %v152 = vmul.f32 %v151, %v124
    %154 = vst [vmem:[#allocation1] ss:$4 sm:$0xff] %v152
    %v155 = vld.sshfl [vmem:[#allocation1] sm:$0xff pattern:$0x73625140]
    %v156 = vld.sshfl [vmem:[#allocation1 + $0x8] sm:$0xff pattern:$0x73625140]
    %v159 = vsel %vm123, %v155, 0.0
    %v160 = vsel %vm123, %v156, 0.0
    %v161 = vadd.f32 %v159, %v160
    %162 = vadd.xlane.f32.xlu0 %v161
    %v163 = vpop.xlane.xlu0 %162
    %v164 = vld [vmem:[#allocation2 + $0xc] sm:$0xf]
    %v165 = vmul.f32 %v164, %v124
    %167 = vst [vmem:[#allocation1] ss:$4 sm:$0xff] %v165
    %v168 = vld.sshfl [vmem:[#allocation1] sm:$0xff pattern:$0x73625140]
    %v169 = vld.sshfl [vmem:[#allocation1 + $0x8] sm:$0xff pattern:$0x73625140]
    %v172 = vsel %vm123, %v168, 0.0
    %v173 = vsel %vm123, %v169, 0.0
    %v174 = vadd.f32 %v172, %v173
    %175 = vadd.xlane.f32.xlu0 %v174
    %v176 = vpop.xlane.xlu0 %175
    %v177 = vld [vmem:[#allocation2 + $0x10] sm:$0xf]
    %v178 = vmul.f32 %v177, %v124
    %180 = vst [vmem:[#allocation1] ss:$4 sm:$0xff] %v178
    %v181 = vld.sshfl [vmem:[#allocation1] sm:$0xff pattern:$0x73625140]
    %v182 = vld.sshfl [vmem:[#allocation1 + $0x8] sm:$0xff pattern:$0x73625140]
    %v185 = vsel %vm123, %v181, 0.0
    %v186 = vsel %vm123, %v182, 0.0
    %v187 = vadd.f32 %v185, %v186
    %188 = vadd.xlane.f32.xlu0 %v187
    %v189 = vpop.xlane.xlu0 %188
    %v190 = vld [vmem:[#allocation2 + $0x14] sm:$0xf]
    %v191 = vmul.f32 %v190, %v124
    %193 = vst [vmem:[#allocation1] ss:$4 sm:$0xff] %v191
    %v194 = vld.sshfl [vmem:[#allocation1] sm:$0xff pattern:$0x73625140]
    %v195 = vld.sshfl [vmem:[#allocation1 + $0x8] sm:$0xff pattern:$0x73625140]
    %v198 = vsel %vm123, %v194, 0.0
    %v199 = vsel %vm123, %v195, 0.0
    %v200 = vadd.f32 %v198, %v199
    %201 = vadd.xlane.f32.xlu0 %v200
    %v202 = vpop.xlane.xlu0 %201
    %v203 = vld [vmem:[#allocation2 + $0x18] sm:$0xf]
    %v204 = vmul.f32 %v203, %v124
    %206 = vst [vmem:[#allocation1] ss:$4 sm:$0xff] %v204
    %v207 = vld.sshfl [vmem:[#allocation1] sm:$0xff pattern:$0x73625140]
    %v208 = vld.sshfl [vmem:[#allocation1 + $0x8] sm:$0xff pattern:$0x73625140]
    %v211 = vsel %vm123, %v207, 0.0
    %v212 = vsel %vm123, %v208, 0.0
    %v213 = vadd.f32 %v211, %v212
    %214 = vadd.xlane.f32.xlu0 %v213
    %v215 = vpop.xlane.xlu0 %214
    %v216 = vld [vmem:[#allocation2 + $0x1c] sm:$0xf]
    %v217 = vmul.f32 %v216, %v124
    %219 = vst [vmem:[#allocation1] ss:$4 sm:$0xff] %v217
    %v220 = vld.sshfl [vmem:[#allocation1] sm:$0xff pattern:$0x73625140]
    %v221 = vld.sshfl [vmem:[#allocation1 + $0x8] sm:$0xff pattern:$0x73625140]
    %v224 = vsel %vm123, %v220, 0.0
    %v225 = vsel %vm123, %v221, 0.0
    %v226 = vadd.f32 %v224, %v225
    %227 = vadd.xlane.f32.xlu0 %v226
    %v228 = vpop.xlane.xlu0 %227
    %v229 = vld [vmem:[#allocation2 + $0x20] sm:$0xf]
    %v230 = vmul.f32 %v229, %v124
    %232 = vst [vmem:[#allocation1] ss:$4 sm:$0xff] %v230
    %v233 = vld.sshfl [vmem:[#allocation1] sm:$0xff pattern:$0x73625140]
    %v234 = vld.sshfl [vmem:[#allocation1 + $0x8] sm:$0xff pattern:$0x73625140]
    %v237 = vsel %vm123, %v233, 0.0
    %v238 = vsel %vm123, %v234, 0.0
    %v239 = vadd.f32 %v237, %v238
    %240 = vadd.xlane.f32.xlu0 %v239
    %v241 = vpop.xlane.xlu0 %240
    %v242 = vld [vmem:[#allocation2 + $0x24] sm:$0xf]
    %v243 = vmul.f32 %v242, %v124
    %245 = vst [vmem:[#allocation1] ss:$4 sm:$0xff] %v243
    %v246 = vld.sshfl [vmem:[#allocation1] sm:$0xff pattern:$0x73625140]
    %v247 = vld.sshfl [vmem:[#allocation1 + $0x8] sm:$0xff pattern:$0x73625140]
    %v250 = vsel %vm123, %v246, 0.0
    %v251 = vsel %vm123, %v247, 0.0
    %v252 = vadd.f32 %v250, %v251
    %253 = vadd.xlane.f32.xlu0 %v252
    %v254 = vpop.xlane.xlu0 %253
    %v255 = vld [vmem:[#allocation2 + $0x28] sm:$0xf]
    %v256 = vmul.f32 %v255, %v124
    %258 = vst [vmem:[#allocation1] ss:$4 sm:$0xff] %v256
    %v259 = vld.sshfl [vmem:[#allocation1] sm:$0xff pattern:$0x73625140]
    %v260 = vld.sshfl [vmem:[#allocation1 + $0x8] sm:$0xff pattern:$0x73625140]
    %v263 = vsel %vm123, %v259, 0.0
    %v264 = vsel %vm123, %v260, 0.0
    %v265 = vadd.f32 %v263, %v264
    %266 = vadd.xlane.f32.xlu0 %v265
    %v267 = vpop.xlane.xlu0 %266
    %v268 = vld [vmem:[#allocation2 + $0x2c] sm:$0xf]
    %v269 = vmul.f32 %v268, %v124
    %271 = vst [vmem:[#allocation1] ss:$4 sm:$0xff] %v269
    %v272 = vld.sshfl [vmem:[#allocation1] sm:$0xff pattern:$0x73625140]
    %v273 = vld.sshfl [vmem:[#allocation1 + $0x8] sm:$0xff pattern:$0x73625140]
    %v276 = vsel %vm123, %v272, 0.0
    %v277 = vsel %vm123, %v273, 0.0
    %v278 = vadd.f32 %v276, %v277
    %279 = vadd.xlane.f32.xlu0 %v278
    %v280 = vpop.xlane.xlu0 %279
    %v281 = vld [vmem:[#allocation2 + $0x30] sm:$0xf]
    %v282 = vmul.f32 %v281, %v124
    %284 = vst [vmem:[#allocation1] ss:$4 sm:$0xff] %v282
    %v285 = vld.sshfl [vmem:[#allocation1] sm:$0xff pattern:$0x73625140]
    %v286 = vld.sshfl [vmem:[#allocation1 + $0x8] sm:$0xff pattern:$0x73625140]
    %v289 = vsel %vm123, %v285, 0.0
    %v290 = vsel %vm123, %v286, 0.0
    %v291 = vadd.f32 %v289, %v290
    %292 = vadd.xlane.f32.xlu0 %v291
    %v293 = vpop.xlane.xlu0 %292
    %v294 = vld [vmem:[#allocation2 + $0x34] sm:$0xf]
    %v295 = vmul.f32 %v294, %v124
    %297 = vst [vmem:[#allocation1] ss:$4 sm:$0xff] %v295
    %v298 = vld.sshfl [vmem:[#allocation1] sm:$0xff pattern:$0x73625140]
    %v299 = vld.sshfl [vmem:[#allocation1 + $0x8] sm:$0xff pattern:$0x73625140]
    %v302 = vsel %vm123, %v298, 0.0
    %v303 = vsel %vm123, %v299, 0.0
    %v304 = vadd.f32 %v302, %v303
    %305 = vadd.xlane.f32.xlu0 %v304
    %v306 = vpop.xlane.xlu0 %305
    %v307 = vld [vmem:[#allocation2 + $0x38] sm:$0xf]
    %v308 = vmul.f32 %v307, %v124
    %310 = vst [vmem:[#allocation1] ss:$4 sm:$0xff] %v308
    %v311 = vld.sshfl [vmem:[#allocation1] sm:$0xff pattern:$0x73625140]
    %v312 = vld.sshfl [vmem:[#allocation1 + $0x8] sm:$0xff pattern:$0x73625140]
    %v315 = vsel %vm123, %v311, 0.0
    %v316 = vsel %vm123, %v312, 0.0
    %v317 = vadd.f32 %v315, %v316
    %318 = vadd.xlane.f32.xlu0 %v317
    %v319 = vpop.xlane.xlu0 %318
    %v320 = vld [vmem:[#allocation2 + $0x3c] sm:$0xf]
    %v321 = vmul.f32 %v320, %v124
    %323 = vst [vmem:[#allocation1] ss:$4 sm:$0xff] %v321
    %v324 = vld.sshfl [vmem:[#allocation1] sm:$0xff pattern:$0x73625140]
    %v325 = vld.sshfl [vmem:[#allocation1 + $0x8] sm:$0xff pattern:$0x73625140]
    %v328 = vsel %vm123, %v324, 0.0
    %v329 = vsel %vm123, %v325, 0.0
    %v330 = vadd.f32 %v328, %v329
    %331 = vadd.xlane.f32.xlu0 %v330
    %v332 = vpop.xlane.xlu0 %331
    %s333 = sld [smem:[#allocation7]]
    %s334 = sld [smem:[#allocation6]]
    %v335 = vstv %s334
    %v336 = vmul.f32 %v335, %v137
    %v337 = vstv %s333
    %v338 = vadd.f32 %v337, %v336
    %s339 = sld [smem:[#allocation6 + $0x1]]
    %v340 = vstv %s339
    %v341 = vmul.f32 %v340, %v150
    %v342 = vadd.f32 %v338, %v341
    %s343 = sld [smem:[#allocation6 + $0x2]]
    %v344 = vstv %s343
    %v345 = vmul.f32 %v344, %v163
    %v346 = vadd.f32 %v342, %v345
    %s347 = sld [smem:[#allocation6 + $0x3]]
    %v348 = vstv %s347
    %v349 = vmul.f32 %v348, %v176
    %v350 = vadd.f32 %v346, %v349
    %s351 = sld [smem:[#allocation6 + $0x4]]
    %v352 = vstv %s351
    %v353 = vmul.f32 %v352, %v189
    %v354 = vadd.f32 %v350, %v353
    %s355 = sld [smem:[#allocation6 + $0x5]]
    %v356 = vstv %s355
    %v357 = vmul.f32 %v356, %v202
    %v358 = vadd.f32 %v354, %v357
    %s359 = sld [smem:[#allocation6 + $0x6]]
    %v360 = vstv %s359
    %v361 = vmul.f32 %v360, %v215
    %v362 = vadd.f32 %v358, %v361
    %s363 = sld [smem:[#allocation6 + $0x7]]
    %v364 = vstv %s363
    %v365 = vmul.f32 %v364, %v228
    %v366 = vadd.f32 %v362, %v365
    %s367 = sld [smem:[#allocation6 + $0x8]]
    %v368 = vstv %s367
    %v369 = vmul.f32 %v368, %v241
    %v370 = vadd.f32 %v366, %v369
    %s371 = sld [smem:[#allocation6 + $0x9]]
    %v372 = vstv %s371
    %v373 = vmul.f32 %v372, %v254
    %v374 = vadd.f32 %v370, %v373
    %s375 = sld [smem:[#allocation6 + $0xa]]
    %v376 = vstv %s375
    %v377 = vmul.f32 %v376, %v267
    %v378 = vadd.f32 %v374, %v377
    %s379 = sld [smem:[#allocation6 + $0xb]]
    %v380 = vstv %s379
    %v381 = vmul.f32 %v380, %v280
    %v382 = vadd.f32 %v378, %v381
    %s383 = sld [smem:[#allocation6 + $0xc]]
    %v384 = vstv %s383
    %v385 = vmul.f32 %v384, %v293
    %v386 = vadd.f32 %v382, %v385
    %s387 = sld [smem:[#allocation6 + $0xd]]
    %v388 = vstv %s387
    %v389 = vmul.f32 %v388, %v306
    %v390 = vadd.f32 %v386, %v389
    %s391 = sld [smem:[#allocation6 + $0xe]]
    %v392 = vstv %s391
    %v393 = vmul.f32 %v392, %v319
    %v394 = vadd.f32 %v390, %v393
    %s395 = sld [smem:[#allocation6 + $0xf]]
    %v396 = vstv %s395
    %v397 = vmul.f32 %v396, %v332
    %v398 = vadd.f32 %v394, %v397
    %v399 = vmax.f32 %v398, 0.0
    %s400 = sld [smem:[#allocation7 + $0x1]]
    %s401 = sld [smem:[#allocation6 + $0x80]]
    %v402 = vstv %s401
    %v403 = vmul.f32 %v402, %v137
    %v404 = vstv %s400
    %v405 = vadd.f32 %v404, %v403
    %s406 = sld [smem:[#allocation6 + $0x81]]
    %v407 = vstv %s406
    %v408 = vmul.f32 %v407, %v150
    %v409 = vadd.f32 %v405, %v408
    %s410 = sld [smem:[#allocation6 + $0x82]]
    %v411 = vstv %s410
    %v412 = vmul.f32 %v411, %v163
    %v413 = vadd.f32 %v409, %v412
    %s414 = sld [smem:[#allocation6 + $0x83]]
    %v415 = vstv %s414
    %v416 = vmul.f32 %v415, %v176
    %v417 = vadd.f32 %v413, %v416
    %s418 = sld [smem:[#allocation6 + $0x84]]
    %v419 = vstv %s418
    %v420 = vmul.f32 %v419, %v189
    %v421 = vadd.f32 %v417, %v420
    %s422 = sld [smem:[#allocation6 + $0x85]]
    %v423 = vstv %s422
    %v424 = vmul.f32 %v423, %v202
    %v425 = vadd.f32 %v421, %v424
    %s426 = sld [smem:[#allocation6 + $0x86]]
    %v427 = vstv %s426
    %v428 = vmul.f32 %v427, %v215
    %v429 = vadd.f32 %v425, %v428
    %s430 = sld [smem:[#allocation6 + $0x87]]
    %v431 = vstv %s430
    %v432 = vmul.f32 %v431, %v228
    %v433 = vadd.f32 %v429, %v432
    %s434 = sld [smem:[#allocation6 + $0x88]]
    %v435 = vstv %s434
    %v436 = vmul.f32 %v435, %v241
    %v437 = vadd.f32 %v433, %v436
    %s438 = sld [smem:[#allocation6 + $0x89]]
    %v439 = vstv %s438
    %v440 = vmul.f32 %v439, %v254
    %v441 = vadd.f32 %v437, %v440
    %s442 = sld [smem:[#allocation6 + $0x8a]]
    %v443 = vstv %s442
    %v444 = vmul.f32 %v443, %v267
    %v445 = vadd.f32 %v441, %v444
    %s446 = sld [smem:[#allocation6 + $0x8b]]
    %v447 = vstv %s446
    %v448 = vmul.f32 %v447, %v280
    %v449 = vadd.f32 %v445, %v448
    %s450 = sld [smem:[#allocation6 + $0x8c]]
    %v451 = vstv %s450
    %v452 = vmul.f32 %v451, %v293
    %v453 = vadd.f32 %v449, %v452
    %s454 = sld [smem:[#allocation6 + $0x8d]]
    %v455 = vstv %s454
    %v456 = vmul.f32 %v455, %v306
    %v457 = vadd.f32 %v453, %v456
    %s458 = sld [smem:[#allocation6 + $0x8e]]
    %v459 = vstv %s458
    %v460 = vmul.f32 %v459, %v319
    %v461 = vadd.f32 %v457, %v460
    %s462 = sld [smem:[#allocation6 + $0x8f]]
    %v463 = vstv %s462
    %v464 = vmul.f32 %v463, %v332
    %v465 = vadd.f32 %v461, %v464
    %v466 = vmax.f32 %v465, 0.0
    %s467 = sld [smem:[#allocation10]]
    %s468 = sld [smem:[#allocation9]]
    %v469 = vstv %s468
    %v470 = vmul.f32 %v469, %v399
    %v471 = vstv %s467
    %v472 = vadd.f32 %v471, %v470
    %s473 = sld [smem:[#allocation9 + $0x1]]
    %v474 = vstv %s473
    %v475 = vmul.f32 %v474, %v466
    %v476 = vadd.f32 %v472, %v475
    %v477 = vsub.f32 0.0, %v476
    %v478 = vmul.f32 %v477, 1.442695
    %v479 = vpow.pop %v478
    %v480 = vadd.f32 %v479, 1.0
    %v481 = vrcp.pop %v480
    %v482 = vmul.f32 %v480, %v481
    %v483 = vsub.f32 1.0, %v482
    %v484 = vmul.f32 %v481, %v483
    %v485 = vadd.f32 %v481, %v484
    %vm486 = vweird.f32 %v480
    %vm487 = vweird.f32 %v481
    %vm488 = vmor %vm486, %vm487
    %v489 = vsel %vm488, %v481, %v485
    %v490 = vand.u32 2147483647, %v480
    %vm491 = vcmp.eq.f32.partialorder %v490, 8.507059e+37
    %v492 = vand.u32 %v480, 2147483648
    %v493 = vor.u32 1.1754944e-38, %v492
    %v494 = vsel %vm491, %v493, %v489
    %v495 = vmul.f32 1.0, %v494
    %v496 = vadd.f32 %v495, 1.0
    %s497 = sld [smem:[#allocation12]]
    %v498 = vstv %s497
    %v499 = vmul.f32 %v496, %v498
    %v502 = vunpack.c.l.s4 269488144
    %v503 = vunpack.c.0.s8 %v502
    %v504 = vperm.slane %v499, %v503
    %v506 = vmul.f32 %v118, %v504
    %s507 = sld [smem:[#allocation13]]
    %v508 = vstv %s507
    %v509 = vadd.f32 %v506, %v508
    %v510 = vsub.f32 0.0, %v509
    %v511 = vmul.f32 %v510, 1.442695
    %v512 = vpow.pop %v511
    %v513 = vadd.f32 %v512, 1.0
    %v514 = vrcp.pop %v513
    %v515 = vmul.f32 %v513, %v514
    %v516 = vsub.f32 1.0, %v515
    %v517 = vmul.f32 %v514, %v516
    %v518 = vadd.f32 %v514, %v517
    %vm519 = vweird.f32 %v513
    %vm520 = vweird.f32 %v514
    %vm521 = vmor %vm519, %vm520
    %v522 = vsel %vm521, %v514, %v518
    %v523 = vand.u32 2147483647, %v513
    %vm524 = vcmp.eq.f32.partialorder %v523, 8.507059e+37
    %v525 = vand.u32 %v513, 2147483648
    %v526 = vor.u32 1.1754944e-38, %v525
    %v527 = vsel %vm524, %v526, %v522
    %v528 = vmul.f32 1.0, %v527
    %529 = vst [vmem:[#allocation15] sm:$0xf] %v528
    %s530 = sld [smem:[#allocation10 + $0x1]]
    %s531 = sld [smem:[#allocation9 + $0x80]]
    %v532 = vstv %s531
    %v533 = vmul.f32 %v532, %v399
    %v534 = vstv %s530
    %v535 = vadd.f32 %v534, %v533
    %s536 = sld [smem:[#allocation9 + $0x81]]
    %v537 = vstv %s536
    %v538 = vmul.f32 %v537, %v466
    %v539 = vadd.f32 %v535, %v538
    %v540 = vsub.f32 0.0, %v539
    %v541 = vmul.f32 %v540, 1.442695
    %v542 = vpow.pop %v541
    %v543 = vadd.f32 %v542, 1.0
    %v544 = vrcp.pop %v543
    %v545 = vmul.f32 %v543, %v544
    %v546 = vsub.f32 1.0, %v545
    %v547 = vmul.f32 %v544, %v546
    %v548 = vadd.f32 %v544, %v547
    %vm549 = vweird.f32 %v543
    %vm550 = vweird.f32 %v544
    %vm551 = vmor %vm549, %vm550
    %v552 = vsel %vm551, %v544, %v548
    %v553 = vand.u32 2147483647, %v543
    %vm554 = vcmp.eq.f32.partialorder %v553, 8.507059e+37
    %v555 = vand.u32 %v543, 2147483648
    %v556 = vor.u32 1.1754944e-38, %v555
    %v557 = vsel %vm554, %v556, %v552
    %v558 = vmul.f32 1.0, %v557
    %v559 = vadd.f32 %v558, 1.0
    %s560 = sld [smem:[#allocation12 + $0x1]]
    %v561 = vstv %s560
    %v562 = vmul.f32 %v559, %v561
    %v563 = vld [vmem:[#allocation2 + $0x4] sm:$0xf]
    %v566 = vunpack.c.l.s4 269488144
    %v567 = vunpack.c.0.s8 %v566
    %v568 = vperm.slane %v562, %v567
    %v570 = vmul.f32 %v563, %v568
    %s571 = sld [smem:[#allocation13 + $0x1]]
    %v572 = vstv %s571
    %v573 = vadd.f32 %v570, %v572
    %v574 = vsub.f32 0.0, %v573
    %v575 = vmul.f32 %v574, 1.442695
    %v576 = vpow.pop %v575
    %v577 = vadd.f32 %v576, 1.0
    %v578 = vrcp.pop %v577
    %v579 = vmul.f32 %v577, %v578
    %v580 = vsub.f32 1.0, %v579
    %v581 = vmul.f32 %v578, %v580
    %v582 = vadd.f32 %v578, %v581
    %vm583 = vweird.f32 %v577
    %vm584 = vweird.f32 %v578
    %vm585 = vmor %vm583, %vm584
    %v586 = vsel %vm585, %v578, %v582
    %v587 = vand.u32 2147483647, %v577
    %vm588 = vcmp.eq.f32.partialorder %v587, 8.507059e+37
    %v589 = vand.u32 %v577, 2147483648
    %v590 = vor.u32 1.1754944e-38, %v589
    %v591 = vsel %vm588, %v590, %v586
    %v592 = vmul.f32 1.0, %v591
    %593 = vst [vmem:[#allocation15 + $0x4] sm:$0xf] %v592
    %s594 = sld [smem:[#allocation10 + $0x2]]
    %s595 = sld [smem:[#allocation9 + $0x100]]
    %v596 = vstv %s595
    %v597 = vmul.f32 %v596, %v399
    %v598 = vstv %s594
    %v599 = vadd.f32 %v598, %v597
    %s600 = sld [smem:[#allocation9 + $0x101]]
    %v601 = vstv %s600
    %v602 = vmul.f32 %v601, %v466
    %v603 = vadd.f32 %v599, %v602
    %v604 = vsub.f32 0.0, %v603
    %v605 = vmul.f32 %v604, 1.442695
    %v606 = vpow.pop %v605
    %v607 = vadd.f32 %v606, 1.0
    %v608 = vrcp.pop %v607
    %v609 = vmul.f32 %v607, %v608
    %v610 = vsub.f32 1.0, %v609
    %v611 = vmul.f32 %v608, %v610
    %v612 = vadd.f32 %v608, %v611
    %vm613 = vweird.f32 %v607
    %vm614 = vweird.f32 %v608
    %vm615 = vmor %vm613, %vm614
    %v616 = vsel %vm615, %v608, %v612
    %v617 = vand.u32 2147483647, %v607
    %vm618 = vcmp.eq.f32.partialorder %v617, 8.507059e+37
    %v619 = vand.u32 %v607, 2147483648
    %v620 = vor.u32 1.1754944e-38, %v619
    %v621 = vsel %vm618, %v620, %v616
    %v622 = vmul.f32 1.0, %v621
    %v623 = vadd.f32 %v622, 1.0
    %s624 = sld [smem:[#allocation12 + $0x2]]
    %v625 = vstv %s624
    %v626 = vmul.f32 %v623, %v625
    %v627 = vld [vmem:[#allocation2 + $0x8] sm:$0xf]
    %v630 = vunpack.c.l.s4 269488144
    %v631 = vunpack.c.0.s8 %v630
    %v632 = vperm.slane %v626, %v631
    %v634 = vmul.f32 %v627, %v632
    %s635 = sld [smem:[#allocation13 + $0x2]]
    %v636 = vstv %s635
    %v637 = vadd.f32 %v634, %v636
    %v638 = vsub.f32 0.0, %v637
    %v639 = vmul.f32 %v638, 1.442695
    %v640 = vpow.pop %v639
    %v641 = vadd.f32 %v640, 1.0
    %v642 = vrcp.pop %v641
    %v643 = vmul.f32 %v641, %v642
    %v644 = vsub.f32 1.0, %v643
    %v645 = vmul.f32 %v642, %v644
    %v646 = vadd.f32 %v642, %v645
    %vm647 = vweird.f32 %v641
    %vm648 = vweird.f32 %v642
    %vm649 = vmor %vm647, %vm648
    %v650 = vsel %vm649, %v642, %v646
    %v651 = vand.u32 2147483647, %v641
    %vm652 = vcmp.eq.f32.partialorder %v651, 8.507059e+37
    %v653 = vand.u32 %v641, 2147483648
    %v654 = vor.u32 1.1754944e-38, %v653
    %v655 = vsel %vm652, %v654, %v650
    %v656 = vmul.f32 1.0, %v655
    %657 = vst [vmem:[#allocation15 + $0x8] sm:$0xf] %v656
    %s658 = sld [smem:[#allocation10 + $0x3]]
    %s659 = sld [smem:[#allocation9 + $0x180]]
    %v660 = vstv %s659
    %v661 = vmul.f32 %v660, %v399
    %v662 = vstv %s658
    %v663 = vadd.f32 %v662, %v661
    %s664 = sld [smem:[#allocation9 + $0x181]]
    %v665 = vstv %s664
    %v666 = vmul.f32 %v665, %v466
    %v667 = vadd.f32 %v663, %v666
    %v668 = vsub.f32 0.0, %v667
    %v669 = vmul.f32 %v668, 1.442695
    %v670 = vpow.pop %v669
    %v671 = vadd.f32 %v670, 1.0
    %v672 = vrcp.pop %v671
    %v673 = vmul.f32 %v671, %v672
    %v674 = vsub.f32 1.0, %v673
    %v675 = vmul.f32 %v672, %v674
    %v676 = vadd.f32 %v672, %v675
    %vm677 = vweird.f32 %v671
    %vm678 = vweird.f32 %v672
    %vm679 = vmor %vm677, %vm678
    %v680 = vsel %vm679, %v672, %v676
    %v681 = vand.u32 2147483647, %v671
    %vm682 = vcmp.eq.f32.partialorder %v681, 8.507059e+37
    %v683 = vand.u32 %v671, 2147483648
    %v684 = vor.u32 1.1754944e-38, %v683
    %v685 = vsel %vm682, %v684, %v680
    %v686 = vmul.f32 1.0, %v685
    %v687 = vadd.f32 %v686, 1.0
    %s688 = sld [smem:[#allocation12 + $0x3]]
    %v689 = vstv %s688
    %v690 = vmul.f32 %v687, %v689
    %v691 = vld [vmem:[#allocation2 + $0xc] sm:$0xf]
    %v694 = vunpack.c.l.s4 269488144
    %v695 = vunpack.c.0.s8 %v694
    %v696 = vperm.slane %v690, %v695
    %v698 = vmul.f32 %v691, %v696
    %s699 = sld [smem:[#allocation13 + $0x3]]
    %v700 = vstv %s699
    %v701 = vadd.f32 %v698, %v700
    %v702 = vsub.f32 0.0, %v701
    %v703 = vmul.f32 %v702, 1.442695
    %v704 = vpow.pop %v703
    %v705 = vadd.f32 %v704, 1.0
    %v706 = vrcp.pop %v705
    %v707 = vmul.f32 %v705, %v706
    %v708 = vsub.f32 1.0, %v707
    %v709 = vmul.f32 %v706, %v708
    %v710 = vadd.f32 %v706, %v709
    %vm711 = vweird.f32 %v705
    %vm712 = vweird.f32 %v706
    %vm713 = vmor %vm711, %vm712
    %v714 = vsel %vm713, %v706, %v710
    %v715 = vand.u32 2147483647, %v705
    %vm716 = vcmp.eq.f32.partialorder %v715, 8.507059e+37
    %v717 = vand.u32 %v705, 2147483648
    %v718 = vor.u32 1.1754944e-38, %v717
    %v719 = vsel %vm716, %v718, %v714
    %v720 = vmul.f32 1.0, %v719
    %721 = vst [vmem:[#allocation15 + $0xc] sm:$0xf] %v720
    %s722 = sld [smem:[#allocation10 + $0x4]]
    %s723 = sld [smem:[#allocation9 + $0x200]]
    %v724 = vstv %s723
    %v725 = vmul.f32 %v724, %v399
    %v726 = vstv %s722
    %v727 = vadd.f32 %v726, %v725
    %s728 = sld [smem:[#allocation9 + $0x201]]
    %v729 = vstv %s728
    %v730 = vmul.f32 %v729, %v466
    %v731 = vadd.f32 %v727, %v730
    %v732 = vsub.f32 0.0, %v731
    %v733 = vmul.f32 %v732, 1.442695
    %v734 = vpow.pop %v733
    %v735 = vadd.f32 %v734, 1.0
    %v736 = vrcp.pop %v735
    %v737 = vmul.f32 %v735, %v736
    %v738 = vsub.f32 1.0, %v737
    %v739 = vmul.f32 %v736, %v738
    %v740 = vadd.f32 %v736, %v739
    %vm741 = vweird.f32 %v735
    %vm742 = vweird.f32 %v736
    %vm743 = vmor %vm741, %vm742
    %v744 = vsel %vm743, %v736, %v740
    %v745 = vand.u32 2147483647, %v735
    %vm746 = vcmp.eq.f32.partialorder %v745, 8.507059e+37
    %v747 = vand.u32 %v735, 2147483648
    %v748 = vor.u32 1.1754944e-38, %v747
    %v749 = vsel %vm746, %v748, %v744
    %v750 = vmul.f32 1.0, %v749
    %v751 = vadd.f32 %v750, 1.0
    %s752 = sld [smem:[#allocation12 + $0x4]]
    %v753 = vstv %s752
    %v754 = vmul.f32 %v751, %v753
    %v755 = vld [vmem:[#allocation2 + $0x10] sm:$0xf]
    %v758 = vunpack.c.l.s4 269488144
    %v759 = vunpack.c.0.s8 %v758
    %v760 = vperm.slane %v754, %v759
    %v762 = vmul.f32 %v755, %v760
    %s763 = sld [smem:[#allocation13 + $0x4]]
    %v764 = vstv %s763
    %v765 = vadd.f32 %v762, %v764
    %v766 = vsub.f32 0.0, %v765
    %v767 = vmul.f32 %v766, 1.442695
    %v768 = vpow.pop %v767
    %v769 = vadd.f32 %v768, 1.0
    %v770 = vrcp.pop %v769
    %v771 = vmul.f32 %v769, %v770
    %v772 = vsub.f32 1.0, %v771
    %v773 = vmul.f32 %v770, %v772
    %v774 = vadd.f32 %v770, %v773
    %vm775 = vweird.f32 %v769
    %vm776 = vweird.f32 %v770
    %vm777 = vmor %vm775, %vm776
    %v778 = vsel %vm777, %v770, %v774
    %v779 = vand.u32 2147483647, %v769
    %vm780 = vcmp.eq.f32.partialorder %v779, 8.507059e+37
    %v781 = vand.u32 %v769, 2147483648
    %v782 = vor.u32 1.1754944e-38, %v781
    %v783 = vsel %vm780, %v782, %v778
    %v784 = vmul.f32 1.0, %v783
    %785 = vst [vmem:[#allocation15 + $0x10] sm:$0xf] %v784
    %s786 = sld [smem:[#allocation10 + $0x5]]
    %s787 = sld [smem:[#allocation9 + $0x280]]
    %v788 = vstv %s787
    %v789 = vmul.f32 %v788, %v399
    %v790 = vstv %s786
    %v791 = vadd.f32 %v790, %v789
    %s792 = sld [smem:[#allocation9 + $0x281]]
    %v793 = vstv %s792
    %v794 = vmul.f32 %v793, %v466
    %v795 = vadd.f32 %v791, %v794
    %v796 = vsub.f32 0.0, %v795
    %v797 = vmul.f32 %v796, 1.442695
    %v798 = vpow.pop %v797
    %v799 = vadd.f32 %v798, 1.0
    %v800 = vrcp.pop %v799
    %v801 = vmul.f32 %v799, %v800
    %v802 = vsub.f32 1.0, %v801
    %v803 = vmul.f32 %v800, %v802
    %v804 = vadd.f32 %v800, %v803
    %vm805 = vweird.f32 %v799
    %vm806 = vweird.f32 %v800
    %vm807 = vmor %vm805, %vm806
    %v808 = vsel %vm807, %v800, %v804
    %v809 = vand.u32 2147483647, %v799
    %vm810 = vcmp.eq.f32.partialorder %v809, 8.507059e+37
    %v811 = vand.u32 %v799, 2147483648
    %v812 = vor.u32 1.1754944e-38, %v811
    %v813 = vsel %vm810, %v812, %v808
    %v814 = vmul.f32 1.0, %v813
    %v815 = vadd.f32 %v814, 1.0
    %s816 = sld [smem:[#allocation12 + $0x5]]
    %v817 = vstv %s816
    %v818 = vmul.f32 %v815, %v817
    %v819 = vld [vmem:[#allocation2 + $0x14] sm:$0xf]
    %v822 = vunpack.c.l.s4 269488144
    %v823 = vunpack.c.0.s8 %v822
    %v824 = vperm.slane %v818, %v823
    %v826 = vmul.f32 %v819, %v824
    %s827 = sld [smem:[#allocation13 + $0x5]]
    %v828 = vstv %s827
    %v829 = vadd.f32 %v826, %v828
    %v830 = vsub.f32 0.0, %v829
    %v831 = vmul.f32 %v830, 1.442695
    %v832 = vpow.pop %v831
    %v833 = vadd.f32 %v832, 1.0
    %v834 = vrcp.pop %v833
    %v835 = vmul.f32 %v833, %v834
    %v836 = vsub.f32 1.0, %v835
    %v837 = vmul.f32 %v834, %v836
    %v838 = vadd.f32 %v834, %v837
    %vm839 = vweird.f32 %v833
    %vm840 = vweird.f32 %v834
    %vm841 = vmor %vm839, %vm840
    %v842 = vsel %vm841, %v834, %v838
    %v843 = vand.u32 2147483647, %v833
    %vm844 = vcmp.eq.f32.partialorder %v843, 8.507059e+37
    %v845 = vand.u32 %v833, 2147483648
    %v846 = vor.u32 1.1754944e-38, %v845
    %v847 = vsel %vm844, %v846, %v842
    %v848 = vmul.f32 1.0, %v847
    %849 = vst [vmem:[#allocation15 + $0x14] sm:$0xf] %v848
    %s850 = sld [smem:[#allocation10 + $0x6]]
    %s851 = sld [smem:[#allocation9 + $0x300]]
    %v852 = vstv %s851
    %v853 = vmul.f32 %v852, %v399
    %v854 = vstv %s850
    %v855 = vadd.f32 %v854, %v853
    %s856 = sld [smem:[#allocation9 + $0x301]]
    %v857 = vstv %s856
    %v858 = vmul.f32 %v857, %v466
    %v859 = vadd.f32 %v855, %v858
    %v860 = vsub.f32 0.0, %v859
    %v861 = vmul.f32 %v860, 1.442695
    %v862 = vpow.pop %v861
    %v863 = vadd.f32 %v862, 1.0
    %v864 = vrcp.pop %v863
    %v865 = vmul.f32 %v863, %v864
    %v866 = vsub.f32 1.0, %v865
    %v867 = vmul.f32 %v864, %v866
    %v868 = vadd.f32 %v864, %v867
    %vm869 = vweird.f32 %v863
    %vm870 = vweird.f32 %v864
    %vm871 = vmor %vm869, %vm870
    %v872 = vsel %vm871, %v864, %v868
    %v873 = vand.u32 2147483647, %v863
    %vm874 = vcmp.eq.f32.partialorder %v873, 8.507059e+37
    %v875 = vand.u32 %v863, 2147483648
    %v876 = vor.u32 1.1754944e-38, %v875
    %v877 = vsel %vm874, %v876, %v872
    %v878 = vmul.f32 1.0, %v877
    %v879 = vadd.f32 %v878, 1.0
    %s880 = sld [smem:[#allocation12 + $0x6]]
    %v881 = vstv %s880
    %v882 = vmul.f32 %v879, %v881
    %v883 = vld [vmem:[#allocation2 + $0x18] sm:$0xf]
    %v886 = vunpack.c.l.s4 269488144
    %v887 = vunpack.c.0.s8 %v886
    %v888 = vperm.slane %v882, %v887
    %v890 = vmul.f32 %v883, %v888
    %s891 = sld [smem:[#allocation13 + $0x6]]
    %v892 = vstv %s891
    %v893 = vadd.f32 %v890, %v892
    %v894 = vsub.f32 0.0, %v893
    %v895 = vmul.f32 %v894, 1.442695
    %v896 = vpow.pop %v895
    %v897 = vadd.f32 %v896, 1.0
    %v898 = vrcp.pop %v897
    %v899 = vmul.f32 %v897, %v898
    %v900 = vsub.f32 1.0, %v899
    %v901 = vmul.f32 %v898, %v900
    %v902 = vadd.f32 %v898, %v901
    %vm903 = vweird.f32 %v897
    %vm904 = vweird.f32 %v898
    %vm905 = vmor %vm903, %vm904
    %v906 = vsel %vm905, %v898, %v902
    %v907 = vand.u32 2147483647, %v897
    %vm908 = vcmp.eq.f32.partialorder %v907, 8.507059e+37
    %v909 = vand.u32 %v897, 2147483648
    %v910 = vor.u32 1.1754944e-38, %v909
    %v911 = vsel %vm908, %v910, %v906
    %v912 = vmul.f32 1.0, %v911
    %913 = vst [vmem:[#allocation15 + $0x18] sm:$0xf] %v912
    %s914 = sld [smem:[#allocation10 + $0x7]]
    %s915 = sld [smem:[#allocation9 + $0x380]]
    %v916 = vstv %s915
    %v917 = vmul.f32 %v916, %v399
    %v918 = vstv %s914
    %v919 = vadd.f32 %v918, %v917
    %s920 = sld [smem:[#allocation9 + $0x381]]
    %v921 = vstv %s920
    %v922 = vmul.f32 %v921, %v466
    %v923 = vadd.f32 %v919, %v922
    %v924 = vsub.f32 0.0, %v923
    %v925 = vmul.f32 %v924, 1.442695
    %v926 = vpow.pop %v925
    %v927 = vadd.f32 %v926, 1.0
    %v928 = vrcp.pop %v927
    %v929 = vmul.f32 %v927, %v928
    %v930 = vsub.f32 1.0, %v929
    %v931 = vmul.f32 %v928, %v930
    %v932 = vadd.f32 %v928, %v931
    %vm933 = vweird.f32 %v927
    %vm934 = vweird.f32 %v928
    %vm935 = vmor %vm933, %vm934
    %v936 = vsel %vm935, %v928, %v932
    %v937 = vand.u32 2147483647, %v927
    %vm938 = vcmp.eq.f32.partialorder %v937, 8.507059e+37
    %v939 = vand.u32 %v927, 2147483648
    %v940 = vor.u32 1.1754944e-38, %v939
    %v941 = vsel %vm938, %v940, %v936
    %v942 = vmul.f32 1.0, %v941
    %v943 = vadd.f32 %v942, 1.0
    %s944 = sld [smem:[#allocation12 + $0x7]]
    %v945 = vstv %s944
    %v946 = vmul.f32 %v943, %v945
    %v947 = vld [vmem:[#allocation2 + $0x1c] sm:$0xf]
    %v950 = vunpack.c.l.s4 269488144
    %v951 = vunpack.c.0.s8 %v950
    %v952 = vperm.slane %v946, %v951
    %v954 = vmul.f32 %v947, %v952
    %s955 = sld [smem:[#allocation13 + $0x7]]
    %v956 = vstv %s955
    %v957 = vadd.f32 %v954, %v956
    %v958 = vsub.f32 0.0, %v957
    %v959 = vmul.f32 %v958, 1.442695
    %v960 = vpow.pop %v959
    %v961 = vadd.f32 %v960, 1.0
    %v962 = vrcp.pop %v961
    %v963 = vmul.f32 %v961, %v962
    %v964 = vsub.f32 1.0, %v963
    %v965 = vmul.f32 %v962, %v964
    %v966 = vadd.f32 %v962, %v965
    %vm967 = vweird.f32 %v961
    %vm968 = vweird.f32 %v962
    %vm969 = vmor %vm967, %vm968
    %v970 = vsel %vm969, %v962, %v966
    %v971 = vand.u32 2147483647, %v961
    %vm972 = vcmp.eq.f32.partialorder %v971, 8.507059e+37
    %v973 = vand.u32 %v961, 2147483648
    %v974 = vor.u32 1.1754944e-38, %v973
    %v975 = vsel %vm972, %v974, %v970
    %v976 = vmul.f32 1.0, %v975
    %977 = vst [vmem:[#allocation15 + $0x1c] sm:$0xf] %v976
    %s978 = sld [smem:[#allocation10 + $0x8]]
    %s979 = sld [smem:[#allocation9 + $0x400]]
    %v980 = vstv %s979
    %v981 = vmul.f32 %v980, %v399
    %v982 = vstv %s978
    %v983 = vadd.f32 %v982, %v981
    %s984 = sld [smem:[#allocation9 + $0x401]]
    %v985 = vstv %s984
    %v986 = vmul.f32 %v985, %v466
    %v987 = vadd.f32 %v983, %v986
    %v988 = vsub.f32 0.0, %v987
    %v989 = vmul.f32 %v988, 1.442695
    %v990 = vpow.pop %v989
    %v991 = vadd.f32 %v990, 1.0
    %v992 = vrcp.pop %v991
    %v993 = vmul.f32 %v991, %v992
    %v994 = vsub.f32 1.0, %v993
    %v995 = vmul.f32 %v992, %v994
    %v996 = vadd.f32 %v992, %v995
    %vm997 = vweird.f32 %v991
    %vm998 = vweird.f32 %v992
    %vm999 = vmor %vm997, %vm998
    %v1000 = vsel %vm999, %v992, %v996
    %v1001 = vand.u32 2147483647, %v991
    %vm1002 = vcmp.eq.f32.partialorder %v1001, 8.507059e+37
    %v1003 = vand.u32 %v991, 2147483648
    %v1004 = vor.u32 1.1754944e-38, %v1003
    %v1005 = vsel %vm1002, %v1004, %v1000
    %v1006 = vmul.f32 1.0, %v1005
    %v1007 = vadd.f32 %v1006, 1.0
    %s1008 = sld [smem:[#allocation12 + $0x8]]
    %v1009 = vstv %s1008
    %v1010 = vmul.f32 %v1007, %v1009
    %v1011 = vld [vmem:[#allocation2 + $0x20] sm:$0xf]
    %v1014 = vunpack.c.l.s4 269488144
    %v1015 = vunpack.c.0.s8 %v1014
    %v1016 = vperm.slane %v1010, %v1015
    %v1018 = vmul.f32 %v1011, %v1016
    %s1019 = sld [smem:[#allocation13 + $0x8]]
    %v1020 = vstv %s1019
    %v1021 = vadd.f32 %v1018, %v1020
    %v1022 = vsub.f32 0.0, %v1021
    %v1023 = vmul.f32 %v1022, 1.442695
    %v1024 = vpow.pop %v1023
    %v1025 = vadd.f32 %v1024, 1.0
    %v1026 = vrcp.pop %v1025
    %v1027 = vmul.f32 %v1025, %v1026
    %v1028 = vsub.f32 1.0, %v1027
    %v1029 = vmul.f32 %v1026, %v1028
    %v1030 = vadd.f32 %v1026, %v1029
    %vm1031 = vweird.f32 %v1025
    %vm1032 = vweird.f32 %v1026
    %vm1033 = vmor %vm1031, %vm1032
    %v1034 = vsel %vm1033, %v1026, %v1030
    %v1035 = vand.u32 2147483647, %v1025
    %vm1036 = vcmp.eq.f32.partialorder %v1035, 8.507059e+37
    %v1037 = vand.u32 %v1025, 2147483648
    %v1038 = vor.u32 1.1754944e-38, %v1037
    %v1039 = vsel %vm1036, %v1038, %v1034
    %v1040 = vmul.f32 1.0, %v1039
    %1041 = vst [vmem:[#allocation15 + $0x20] sm:$0xf] %v1040
    %s1042 = sld [smem:[#allocation10 + $0x9]]
    %s1043 = sld [smem:[#allocation9 + $0x480]]
    %v1044 = vstv %s1043
    %v1045 = vmul.f32 %v1044, %v399
    %v1046 = vstv %s1042
    %v1047 = vadd.f32 %v1046, %v1045
    %s1048 = sld [smem:[#allocation9 + $0x481]]
    %v1049 = vstv %s1048
    %v1050 = vmul.f32 %v1049, %v466
    %v1051 = vadd.f32 %v1047, %v1050
    %v1052 = vsub.f32 0.0, %v1051
    %v1053 = vmul.f32 %v1052, 1.442695
    %v1054 = vpow.pop %v1053
    %v1055 = vadd.f32 %v1054, 1.0
    %v1056 = vrcp.pop %v1055
    %v1057 = vmul.f32 %v1055, %v1056
    %v1058 = vsub.f32 1.0, %v1057
    %v1059 = vmul.f32 %v1056, %v1058
    %v1060 = vadd.f32 %v1056, %v1059
    %vm1061 = vweird.f32 %v1055
    %vm1062 = vweird.f32 %v1056
    %vm1063 = vmor %vm1061, %vm1062
    %v1064 = vsel %vm1063, %v1056, %v1060
    %v1065 = vand.u32 2147483647, %v1055
    %vm1066 = vcmp.eq.f32.partialorder %v1065, 8.507059e+37
    %v1067 = vand.u32 %v1055, 2147483648
    %v1068 = vor.u32 1.1754944e-38, %v1067
    %v1069 = vsel %vm1066, %v1068, %v1064
    %v1070 = vmul.f32 1.0, %v1069
    %v1071 = vadd.f32 %v1070, 1.0
    %s1072 = sld [smem:[#allocation12 + $0x9]]
    %v1073 = vstv %s1072
    %v1074 = vmul.f32 %v1071, %v1073
    %v1075 = vld [vmem:[#allocation2 + $0x24] sm:$0xf]
    %v1078 = vunpack.c.l.s4 269488144
    %v1079 = vunpack.c.0.s8 %v1078
    %v1080 = vperm.slane %v1074, %v1079
    %v1082 = vmul.f32 %v1075, %v1080
    %s1083 = sld [smem:[#allocation13 + $0x9]]
    %v1084 = vstv %s1083
    %v1085 = vadd.f32 %v1082, %v1084
    %v1086 = vsub.f32 0.0, %v1085
    %v1087 = vmul.f32 %v1086, 1.442695
    %v1088 = vpow.pop %v1087
    %v1089 = vadd.f32 %v1088, 1.0
    %v1090 = vrcp.pop %v1089
    %v1091 = vmul.f32 %v1089, %v1090
    %v1092 = vsub.f32 1.0, %v1091
    %v1093 = vmul.f32 %v1090, %v1092
    %v1094 = vadd.f32 %v1090, %v1093
    %vm1095 = vweird.f32 %v1089
    %vm1096 = vweird.f32 %v1090
    %vm1097 = vmor %vm1095, %vm1096
    %v1098 = vsel %vm1097, %v1090, %v1094
    %v1099 = vand.u32 2147483647, %v1089
    %vm1100 = vcmp.eq.f32.partialorder %v1099, 8.507059e+37
    %v1101 = vand.u32 %v1089, 2147483648
    %v1102 = vor.u32 1.1754944e-38, %v1101
    %v1103 = vsel %vm1100, %v1102, %v1098
    %v1104 = vmul.f32 1.0, %v1103
    %1105 = vst [vmem:[#allocation15 + $0x24] sm:$0xf] %v1104
    %s1106 = sld [smem:[#allocation10 + $0xa]]
    %s1107 = sld [smem:[#allocation9 + $0x500]]
    %v1108 = vstv %s1107
    %v1109 = vmul.f32 %v1108, %v399
    %v1110 = vstv %s1106
    %v1111 = vadd.f32 %v1110, %v1109
    %s1112 = sld [smem:[#allocation9 + $0x501]]
    %v1113 = vstv %s1112
    %v1114 = vmul.f32 %v1113, %v466
    %v1115 = vadd.f32 %v1111, %v1114
    %v1116 = vsub.f32 0.0, %v1115
    %v1117 = vmul.f32 %v1116, 1.442695
    %v1118 = vpow.pop %v1117
    %v1119 = vadd.f32 %v1118, 1.0
    %v1120 = vrcp.pop %v1119
    %v1121 = vmul.f32 %v1119, %v1120
    %v1122 = vsub.f32 1.0, %v1121
    %v1123 = vmul.f32 %v1120, %v1122
    %v1124 = vadd.f32 %v1120, %v1123
    %vm1125 = vweird.f32 %v1119
    %vm1126 = vweird.f32 %v1120
    %vm1127 = vmor %vm1125, %vm1126
    %v1128 = vsel %vm1127, %v1120, %v1124
    %v1129 = vand.u32 2147483647, %v1119
    %vm1130 = vcmp.eq.f32.partialorder %v1129, 8.507059e+37
    %v1131 = vand.u32 %v1119, 2147483648
    %v1132 = vor.u32 1.1754944e-38, %v1131
    %v1133 = vsel %vm1130, %v1132, %v1128
    %v1134 = vmul.f32 1.0, %v1133
    %v1135 = vadd.f32 %v1134, 1.0
    %s1136 = sld [smem:[#allocation12 + $0xa]]
    %v1137 = vstv %s1136
    %v1138 = vmul.f32 %v1135, %v1137
    %v1139 = vld [vmem:[#allocation2 + $0x28] sm:$0xf]
    %v1142 = vunpack.c.l.s4 269488144
    %v1143 = vunpack.c.0.s8 %v1142
    %v1144 = vperm.slane %v1138, %v1143
    %v1146 = vmul.f32 %v1139, %v1144
    %s1147 = sld [smem:[#allocation13 + $0xa]]
    %v1148 = vstv %s1147
    %v1149 = vadd.f32 %v1146, %v1148
    %v1150 = vsub.f32 0.0, %v1149
    %v1151 = vmul.f32 %v1150, 1.442695
    %v1152 = vpow.pop %v1151
    %v1153 = vadd.f32 %v1152, 1.0
    %v1154 = vrcp.pop %v1153
    %v1155 = vmul.f32 %v1153, %v1154
    %v1156 = vsub.f32 1.0, %v1155
    %v1157 = vmul.f32 %v1154, %v1156
    %v1158 = vadd.f32 %v1154, %v1157
    %vm1159 = vweird.f32 %v1153
    %vm1160 = vweird.f32 %v1154
    %vm1161 = vmor %vm1159, %vm1160
    %v1162 = vsel %vm1161, %v1154, %v1158
    %v1163 = vand.u32 2147483647, %v1153
    %vm1164 = vcmp.eq.f32.partialorder %v1163, 8.507059e+37
    %v1165 = vand.u32 %v1153, 2147483648
    %v1166 = vor.u32 1.1754944e-38, %v1165
    %v1167 = vsel %vm1164, %v1166, %v1162
    %v1168 = vmul.f32 1.0, %v1167
    %1169 = vst [vmem:[#allocation15 + $0x28] sm:$0xf] %v1168
    %s1170 = sld [smem:[#allocation10 + $0xb]]
    %s1171 = sld [smem:[#allocation9 + $0x580]]
    %v1172 = vstv %s1171
    %v1173 = vmul.f32 %v1172, %v399
    %v1174 = vstv %s1170
    %v1175 = vadd.f32 %v1174, %v1173
    %s1176 = sld [smem:[#allocation9 + $0x581]]
    %v1177 = vstv %s1176
    %v1178 = vmul.f32 %v1177, %v466
    %v1179 = vadd.f32 %v1175, %v1178
    %v1180 = vsub.f32 0.0, %v1179
    %v1181 = vmul.f32 %v1180, 1.442695
    %v1182 = vpow.pop %v1181
    %v1183 = vadd.f32 %v1182, 1.0
    %v1184 = vrcp.pop %v1183
    %v1185 = vmul.f32 %v1183, %v1184
    %v1186 = vsub.f32 1.0, %v1185
    %v1187 = vmul.f32 %v1184, %v1186
    %v1188 = vadd.f32 %v1184, %v1187
    %vm1189 = vweird.f32 %v1183
    %vm1190 = vweird.f32 %v1184
    %vm1191 = vmor %vm1189, %vm1190
    %v1192 = vsel %vm1191, %v1184, %v1188
    %v1193 = vand.u32 2147483647, %v1183
    %vm1194 = vcmp.eq.f32.partialorder %v1193, 8.507059e+37
    %v1195 = vand.u32 %v1183, 2147483648
    %v1196 = vor.u32 1.1754944e-38, %v1195
    %v1197 = vsel %vm1194, %v1196, %v1192
    %v1198 = vmul.f32 1.0, %v1197
    %v1199 = vadd.f32 %v1198, 1.0
    %s1200 = sld [smem:[#allocation12 + $0xb]]
    %v1201 = vstv %s1200
    %v1202 = vmul.f32 %v1199, %v1201
    %v1203 = vld [vmem:[#allocation2 + $0x2c] sm:$0xf]
    %v1206 = vunpack.c.l.s4 269488144
    %v1207 = vunpack.c.0.s8 %v1206
    %v1208 = vperm.slane %v1202, %v1207
    %v1210 = vmul.f32 %v1203, %v1208
    %s1211 = sld [smem:[#allocation13 + $0xb]]
    %v1212 = vstv %s1211
    %v1213 = vadd.f32 %v1210, %v1212
    %v1214 = vsub.f32 0.0, %v1213
    %v1215 = vmul.f32 %v1214, 1.442695
    %v1216 = vpow.pop %v1215
    %v1217 = vadd.f32 %v1216, 1.0
    %v1218 = vrcp.pop %v1217
    %v1219 = vmul.f32 %v1217, %v1218
    %v1220 = vsub.f32 1.0, %v1219
    %v1221 = vmul.f32 %v1218, %v1220
    %v1222 = vadd.f32 %v1218, %v1221
    %vm1223 = vweird.f32 %v1217
    %vm1224 = vweird.f32 %v1218
    %vm1225 = vmor %vm1223, %vm1224
    %v1226 = vsel %vm1225, %v1218, %v1222
    %v1227 = vand.u32 2147483647, %v1217
    %vm1228 = vcmp.eq.f32.partialorder %v1227, 8.507059e+37
    %v1229 = vand.u32 %v1217, 2147483648
    %v1230 = vor.u32 1.1754944e-38, %v1229
    %v1231 = vsel %vm1228, %v1230, %v1226
    %v1232 = vmul.f32 1.0, %v1231
    %1233 = vst [vmem:[#allocation15 + $0x2c] sm:$0xf] %v1232
    %s1234 = sld [smem:[#allocation10 + $0xc]]
    %s1235 = sld [smem:[#allocation9 + $0x600]]
    %v1236 = vstv %s1235
    %v1237 = vmul.f32 %v1236, %v399
    %v1238 = vstv %s1234
    %v1239 = vadd.f32 %v1238, %v1237
    %s1240 = sld [smem:[#allocation9 + $0x601]]
    %v1241 = vstv %s1240
    %v1242 = vmul.f32 %v1241, %v466
    %v1243 = vadd.f32 %v1239, %v1242
    %v1244 = vsub.f32 0.0, %v1243
    %v1245 = vmul.f32 %v1244, 1.442695
    %v1246 = vpow.pop %v1245
    %v1247 = vadd.f32 %v1246, 1.0
    %v1248 = vrcp.pop %v1247
    %v1249 = vmul.f32 %v1247, %v1248
    %v1250 = vsub.f32 1.0, %v1249
    %v1251 = vmul.f32 %v1248, %v1250
    %v1252 = vadd.f32 %v1248, %v1251
    %vm1253 = vweird.f32 %v1247
    %vm1254 = vweird.f32 %v1248
    %vm1255 = vmor %vm1253, %vm1254
    %v1256 = vsel %vm1255, %v1248, %v1252
    %v1257 = vand.u32 2147483647, %v1247
    %vm1258 = vcmp.eq.f32.partialorder %v1257, 8.507059e+37
    %v1259 = vand.u32 %v1247, 2147483648
    %v1260 = vor.u32 1.1754944e-38, %v1259
    %v1261 = vsel %vm1258, %v1260, %v1256
    %v1262 = vmul.f32 1.0, %v1261
    %v1263 = vadd.f32 %v1262, 1.0
    %s1264 = sld [smem:[#allocation12 + $0xc]]
    %v1265 = vstv %s1264
    %v1266 = vmul.f32 %v1263, %v1265
    %v1267 = vld [vmem:[#allocation2 + $0x30] sm:$0xf]
    %v1270 = vunpack.c.l.s4 269488144
    %v1271 = vunpack.c.0.s8 %v1270
    %v1272 = vperm.slane %v1266, %v1271
    %v1274 = vmul.f32 %v1267, %v1272
    %s1275 = sld [smem:[#allocation13 + $0xc]]
    %v1276 = vstv %s1275
    %v1277 = vadd.f32 %v1274, %v1276
    %v1278 = vsub.f32 0.0, %v1277
    %v1279 = vmul.f32 %v1278, 1.442695
    %v1280 = vpow.pop %v1279
    %v1281 = vadd.f32 %v1280, 1.0
    %v1282 = vrcp.pop %v1281
    %v1283 = vmul.f32 %v1281, %v1282
    %v1284 = vsub.f32 1.0, %v1283
    %v1285 = vmul.f32 %v1282, %v1284
    %v1286 = vadd.f32 %v1282, %v1285
    %vm1287 = vweird.f32 %v1281
    %vm1288 = vweird.f32 %v1282
    %vm1289 = vmor %vm1287, %vm1288
    %v1290 = vsel %vm1289, %v1282, %v1286
    %v1291 = vand.u32 2147483647, %v1281
    %vm1292 = vcmp.eq.f32.partialorder %v1291, 8.507059e+37
    %v1293 = vand.u32 %v1281, 2147483648
    %v1294 = vor.u32 1.1754944e-38, %v1293
    %v1295 = vsel %vm1292, %v1294, %v1290
    %v1296 = vmul.f32 1.0, %v1295
    %1297 = vst [vmem:[#allocation15 + $0x30] sm:$0xf] %v1296
    %s1298 = sld [smem:[#allocation10 + $0xd]]
    %s1299 = sld [smem:[#allocation9 + $0x680]]
    %v1300 = vstv %s1299
    %v1301 = vmul.f32 %v1300, %v399
    %v1302 = vstv %s1298
    %v1303 = vadd.f32 %v1302, %v1301
    %s1304 = sld [smem:[#allocation9 + $0x681]]
    %v1305 = vstv %s1304
    %v1306 = vmul.f32 %v1305, %v466
    %v1307 = vadd.f32 %v1303, %v1306
    %v1308 = vsub.f32 0.0, %v1307
    %v1309 = vmul.f32 %v1308, 1.442695
    %v1310 = vpow.pop %v1309
    %v1311 = vadd.f32 %v1310, 1.0
    %v1312 = vrcp.pop %v1311
    %v1313 = vmul.f32 %v1311, %v1312
    %v1314 = vsub.f32 1.0, %v1313
    %v1315 = vmul.f32 %v1312, %v1314
    %v1316 = vadd.f32 %v1312, %v1315
    %vm1317 = vweird.f32 %v1311
    %vm1318 = vweird.f32 %v1312
    %vm1319 = vmor %vm1317, %vm1318
    %v1320 = vsel %vm1319, %v1312, %v1316
    %v1321 = vand.u32 2147483647, %v1311
    %vm1322 = vcmp.eq.f32.partialorder %v1321, 8.507059e+37
    %v1323 = vand.u32 %v1311, 2147483648
    %v1324 = vor.u32 1.1754944e-38, %v1323
    %v1325 = vsel %vm1322, %v1324, %v1320
    %v1326 = vmul.f32 1.0, %v1325
    %v1327 = vadd.f32 %v1326, 1.0
    %s1328 = sld [smem:[#allocation12 + $0xd]]
    %v1329 = vstv %s1328
    %v1330 = vmul.f32 %v1327, %v1329
    %v1331 = vld [vmem:[#allocation2 + $0x34] sm:$0xf]
    %v1334 = vunpack.c.l.s4 269488144
    %v1335 = vunpack.c.0.s8 %v1334
    %v1336 = vperm.slane %v1330, %v1335
    %v1338 = vmul.f32 %v1331, %v1336
    %s1339 = sld [smem:[#allocation13 + $0xd]]
    %v1340 = vstv %s1339
    %v1341 = vadd.f32 %v1338, %v1340
    %v1342 = vsub.f32 0.0, %v1341
    %v1343 = vmul.f32 %v1342, 1.442695
    %v1344 = vpow.pop %v1343
    %v1345 = vadd.f32 %v1344, 1.0
    %v1346 = vrcp.pop %v1345
    %v1347 = vmul.f32 %v1345, %v1346
    %v1348 = vsub.f32 1.0, %v1347
    %v1349 = vmul.f32 %v1346, %v1348
    %v1350 = vadd.f32 %v1346, %v1349
    %vm1351 = vweird.f32 %v1345
    %vm1352 = vweird.f32 %v1346
    %vm1353 = vmor %vm1351, %vm1352
    %v1354 = vsel %vm1353, %v1346, %v1350
    %v1355 = vand.u32 2147483647, %v1345
    %vm1356 = vcmp.eq.f32.partialorder %v1355, 8.507059e+37
    %v1357 = vand.u32 %v1345, 2147483648
    %v1358 = vor.u32 1.1754944e-38, %v1357
    %v1359 = vsel %vm1356, %v1358, %v1354
    %v1360 = vmul.f32 1.0, %v1359
    %1361 = vst [vmem:[#allocation15 + $0x34] sm:$0xf] %v1360
    %s1362 = sld [smem:[#allocation10 + $0xe]]
    %s1363 = sld [smem:[#allocation9 + $0x700]]
    %v1364 = vstv %s1363
    %v1365 = vmul.f32 %v1364, %v399
    %v1366 = vstv %s1362
    %v1367 = vadd.f32 %v1366, %v1365
    %s1368 = sld [smem:[#allocation9 + $0x701]]
    %v1369 = vstv %s1368
    %v1370 = vmul.f32 %v1369, %v466
    %v1371 = vadd.f32 %v1367, %v1370
    %v1372 = vsub.f32 0.0, %v1371
    %v1373 = vmul.f32 %v1372, 1.442695
    %v1374 = vpow.pop %v1373
    %v1375 = vadd.f32 %v1374, 1.0
    %v1376 = vrcp.pop %v1375
    %v1377 = vmul.f32 %v1375, %v1376
    %v1378 = vsub.f32 1.0, %v1377
    %v1379 = vmul.f32 %v1376, %v1378
    %v1380 = vadd.f32 %v1376, %v1379
    %vm1381 = vweird.f32 %v1375
    %vm1382 = vweird.f32 %v1376
    %vm1383 = vmor %vm1381, %vm1382
    %v1384 = vsel %vm1383, %v1376, %v1380
    %v1385 = vand.u32 2147483647, %v1375
    %vm1386 = vcmp.eq.f32.partialorder %v1385, 8.507059e+37
    %v1387 = vand.u32 %v1375, 2147483648
    %v1388 = vor.u32 1.1754944e-38, %v1387
    %v1389 = vsel %vm1386, %v1388, %v1384
    %v1390 = vmul.f32 1.0, %v1389
    %v1391 = vadd.f32 %v1390, 1.0
    %s1392 = sld [smem:[#allocation12 + $0xe]]
    %v1393 = vstv %s1392
    %v1394 = vmul.f32 %v1391, %v1393
    %v1395 = vld [vmem:[#allocation2 + $0x38] sm:$0xf]
    %v1398 = vunpack.c.l.s4 269488144
    %v1399 = vunpack.c.0.s8 %v1398
    %v1400 = vperm.slane %v1394, %v1399
    %v1402 = vmul.f32 %v1395, %v1400
    %s1403 = sld [smem:[#allocation13 + $0xe]]
    %v1404 = vstv %s1403
    %v1405 = vadd.f32 %v1402, %v1404
    %v1406 = vsub.f32 0.0, %v1405
    %v1407 = vmul.f32 %v1406, 1.442695
    %v1408 = vpow.pop %v1407
    %v1409 = vadd.f32 %v1408, 1.0
    %v1410 = vrcp.pop %v1409
    %v1411 = vmul.f32 %v1409, %v1410
    %v1412 = vsub.f32 1.0, %v1411
    %v1413 = vmul.f32 %v1410, %v1412
    %v1414 = vadd.f32 %v1410, %v1413
    %vm1415 = vweird.f32 %v1409
    %vm1416 = vweird.f32 %v1410
    %vm1417 = vmor %vm1415, %vm1416
    %v1418 = vsel %vm1417, %v1410, %v1414
    %v1419 = vand.u32 2147483647, %v1409
    %vm1420 = vcmp.eq.f32.partialorder %v1419, 8.507059e+37
    %v1421 = vand.u32 %v1409, 2147483648
    %v1422 = vor.u32 1.1754944e-38, %v1421
    %v1423 = vsel %vm1420, %v1422, %v1418
    %v1424 = vmul.f32 1.0, %v1423
    %1425 = vst [vmem:[#allocation15 + $0x38] sm:$0xf] %v1424
    %s1426 = sld [smem:[#allocation10 + $0xf]]
    %s1427 = sld [smem:[#allocation9 + $0x780]]
    %v1428 = vstv %s1427
    %v1429 = vmul.f32 %v1428, %v399
    %v1430 = vstv %s1426
    %v1431 = vadd.f32 %v1430, %v1429
    %s1432 = sld [smem:[#allocation9 + $0x781]]
    %v1433 = vstv %s1432
    %v1434 = vmul.f32 %v1433, %v466
    %v1435 = vadd.f32 %v1431, %v1434
    %v1436 = vsub.f32 0.0, %v1435
    %v1437 = vmul.f32 %v1436, 1.442695
    %v1438 = vpow.pop %v1437
    %v1439 = vadd.f32 %v1438, 1.0
    %v1440 = vrcp.pop %v1439
    %v1441 = vmul.f32 %v1439, %v1440
    %v1442 = vsub.f32 1.0, %v1441
    %v1443 = vmul.f32 %v1440, %v1442
    %v1444 = vadd.f32 %v1440, %v1443
    %vm1445 = vweird.f32 %v1439
    %vm1446 = vweird.f32 %v1440
    %vm1447 = vmor %vm1445, %vm1446
    %v1448 = vsel %vm1447, %v1440, %v1444
    %v1449 = vand.u32 2147483647, %v1439
    %vm1450 = vcmp.eq.f32.partialorder %v1449, 8.507059e+37
    %v1451 = vand.u32 %v1439, 2147483648
    %v1452 = vor.u32 1.1754944e-38, %v1451
    %v1453 = vsel %vm1450, %v1452, %v1448
    %v1454 = vmul.f32 1.0, %v1453
    %v1455 = vadd.f32 %v1454, 1.0
    %s1456 = sld [smem:[#allocation12 + $0xf]]
    %v1457 = vstv %s1456
    %v1458 = vmul.f32 %v1455, %v1457
    %v1459 = vld [vmem:[#allocation2 + $0x3c] sm:$0xf]
    %v1462 = vunpack.c.l.s4 269488144
    %v1463 = vunpack.c.0.s8 %v1462
    %v1464 = vperm.slane %v1458, %v1463
    %v1466 = vmul.f32 %v1459, %v1464
    %s1467 = sld [smem:[#allocation13 + $0xf]]
    %v1468 = vstv %s1467
    %v1469 = vadd.f32 %v1466, %v1468
    %v1470 = vsub.f32 0.0, %v1469
    %v1471 = vmul.f32 %v1470, 1.442695
    %v1472 = vpow.pop %v1471
    %v1473 = vadd.f32 %v1472, 1.0
    %v1474 = vrcp.pop %v1473
    %v1475 = vmul.f32 %v1473, %v1474
    %v1476 = vsub.f32 1.0, %v1475
    %v1477 = vmul.f32 %v1474, %v1476
    %v1478 = vadd.f32 %v1474, %v1477
    %vm1479 = vweird.f32 %v1473
    %vm1480 = vweird.f32 %v1474
    %vm1481 = vmor %vm1479, %vm1480
    %v1482 = vsel %vm1481, %v1474, %v1478
    %v1483 = vand.u32 2147483647, %v1473
    %vm1484 = vcmp.eq.f32.partialorder %v1483, 8.507059e+37
    %v1485 = vand.u32 %v1473, 2147483648
    %v1486 = vor.u32 1.1754944e-38, %v1485
    %v1487 = vsel %vm1484, %v1486, %v1482
    %v1488 = vmul.f32 1.0, %v1487
    %1489 = vst [vmem:[#allocation15 + $0x3c] sm:$0xf] %v1488
    // Predicated region
    $region62: #{tpu_custom_call.1} parent=1 // pred_check
      _
    $region63: #{tpu_custom_call.1} parent=1 // pred_check_branch
      %1491 = sbr.rel (0) target = $region65
    $region64: #{tpu_custom_call.1} parent=1 // pred_region
      %1493 = vsyncadd [#allocation4], 0
      %s1495 = sshll.u32 [#allocation15], 4
      %s1496 = int_to_ptr.vmem [resolvable:$true] %s1495
      %s1497 = sshll.u32 %s8, 4
      %s1498 = int_to_ptr.hbm [resolvable:$true] %s1497
      %1500 = dma.vmem_to_hbm [thread:$0]  %s1496, 1024, %s1498, [#allocation4]
    $region65: #{tpu_custom_call.1} parent=1 // pred_fallthru
      _
    // Predicated region
    $region66: #{tpu_custom_call.1} parent=1 // pred_check
      _
    $region67: #{tpu_custom_call.1} parent=1 // pred_check_branch
      %1502 = sbr.rel (0) target = $region69
    $region68: #{tpu_custom_call.1} parent=1 // pred_region
      %1504 = dma.done [#allocation4], 1024
    $region69: #{tpu_custom_call.1} parent=1 // pred_fallthru
      _
    %1505 = vsyncpa [#allocation3], 1
    %1506 = vsyncpa [#allocation4], 1
    %1507 = vsyncpa [#allocation5], 1
    %1508 = vsyncpa [#allocation8], 1
    %1509 = vsyncpa [#allocation11], 1
    %1510 = vsyncpa [#allocation14], 1

</llo_original>
